<compile_context>
chip_gen: v5e
topology: v5e:2x2
jax: 0.10.0
libtpu: 0.0.40
codegen_flags: <defaults>
</compile_context>

<pallas_src>
import jax
import jax.numpy as jnp
from jax.experimental import pallas as pl
from jax.experimental.pallas import tpu as pltpu

IMG_SHAPE = (3, 64, 64)
LATENT_DIM = 100
NUM_CLASSES = 4
IMG_FLAT = IMG_SHAPE[0] * IMG_SHAPE[1] * IMG_SHAPE[2]   # 12288
BN_EPS = 1e-5
LRELU_SLOPE = 0.2


def _leaky_relu(x):
    return jnp.where(x > 0, x, LRELU_SLOPE * x)


def _batchnorm_train(x, gamma, beta):
    # Training-mode BatchNorm1d: batch mean, biased batch variance, f32 stats.
    mu = jnp.mean(x, axis=0, keepdims=True)
    diff = x - mu
    var = jnp.mean(diff * diff, axis=0, keepdims=True)
    inv = jax.lax.rsqrt(var + BN_EPS)
    return diff * inv * gamma + beta


# ---------------------------------------------------------------------------
# Kernel 1: hidden MLP (runs once, untiled, everything resident in VMEM).
# Emits h in bf16 so the projection kernel's dot is bf16 x bf16, f32 acc.
# ---------------------------------------------------------------------------
def hidden_mlp_kernel(x_ref,
                      w1_ref, b1_ref,
                      w2_ref, b2_ref, g2_ref, be2_ref,
                      w3_ref, b3_ref, g3_ref, be3_ref,
                      h_ref):
    x = x_ref[...]                                                     # [B, 104]

    h = jnp.dot(x, w1_ref[...], preferred_element_type=jnp.float32) + b1_ref[...]
    h = _leaky_relu(h)                                                 # [B, 128]

    h = jnp.dot(h, w2_ref[...], preferred_element_type=jnp.float32) + b2_ref[...]
    h = _leaky_relu(_batchnorm_train(h, g2_ref[...], be2_ref[...]))    # [B, 256]

    h = jnp.dot(h, w3_ref[...], preferred_element_type=jnp.float32) + b3_ref[...]
    h = _leaky_relu(_batchnorm_train(h, g3_ref[...], be3_ref[...]))    # [B, 512]

    h_ref[...] = h.astype(jnp.bfloat16)


# ---------------------------------------------------------------------------
# Kernel 2: output projection 512 -> 12288, tanh fused.
# 1-D grid over contiguous pre-tiled w4 blocks; h/b4 tiles stream in,
# h stays resident (constant index_map).
# ---------------------------------------------------------------------------
def projection_kernel(h_ref, w4_ref, b4_ref, o_ref):
    # h_ref: [B, 512] bf16 (resident), w4_ref: [1, 512, tn] bf16, b4_ref: [1, tn] f32
    acc = jnp.dot(h_ref[...], w4_ref[0],
                  preferred_element_type=jnp.float32)                  # [B, tn] f32
    o_ref[...] = jnp.tanh(acc + b4_ref[...])


def generator_forward(params, noise, labels):
    B = noise.shape[0]

    # Glue: embedding lookup + concat (cheap gather, stays in plain JAX).
    emb = jnp.take(params["emb"], labels, axis=0)          # [B, num_classes]
    x = jnp.concatenate([noise, emb], axis=-1)             # [B, 104]

    # ---- hidden MLP: one tiny untiled kernel ----
    h = pl.pallas_call(
        hidden_mlp_kernel,
        out_shape=jax.ShapeDtypeStruct((B, 512), jnp.bfloat16),
    )(x,
      params["w1"], params["b1"],
      params["w2"], params["b2"], params["g2"], params["be2"],
      params["w3"], params["b3"], params["g3"], params["be3"])

    # ---- output projection: stream pre-tiled bf16 w4 ----
    w4t = params["w4t"]                                    # [NT, 512, tn] bf16
    NT, _, tn = w4t.shape
    N = NT * tn
    assert N == IMG_FLAT

    img_flat = pl.pallas_call(
        projection_kernel,
        out_shape=jax.ShapeDtypeStruct((B, N), jnp.float32),
        grid_spec=pltpu.PrefetchScalarGridSpec(
            num_scalar_prefetch=0,
            grid=(NT,),
            in_specs=[
                pl.BlockSpec((B, 512), lambda j: (0, 0)),        # h (resident)
                pl.BlockSpec((1, 512, tn), lambda j: (j, 0, 0)),  # w4 tile (contiguous)
                pl.BlockSpec((1, tn), lambda j: (0, j)),          # b4 tile
            ],
            out_specs=pl.BlockSpec((B, tn), lambda j: (0, j)),
        ),
        compiler_params=pltpu.CompilerParams(
            dimension_semantics=("parallel",),
            vmem_limit_bytes=32 << 20,
        ),
    )(h, w4t, params["b4"])

    # Matches PyTorch `img.view(B, 3, 64, 64)` (NCHW).
    return img_flat.reshape(B, *IMG_SHAPE)


def init_params(key, *, tn=2048):
    """Deterministic synthetic parameters (shapes match the PyTorch module).

    tn: output-feature tile width for the big projection.  2048 -> 6 grid
    steps (even 3/3 split on v7x's two cores); on single-TC v5e/v6e, 4096
    (3 steps) is also a good choice.  Must divide 12288.
    """
    assert IMG_FLAT % tn == 0
    ks = jax.random.split(key, 5)

    def lin(kw, fan_in, fan_out):
        # Weights stored as [in, out] for x @ W.
        bound = 1.0 / jnp.sqrt(fan_in)
        w = jax.random.uniform(kw, (fan_in, fan_out), jnp.float32, -bound, bound)
        b = jnp.zeros((1, fan_out), jnp.float32)
        return w, b

    emb = jax.random.normal(ks[0], (NUM_CLASSES, NUM_CLASSES), jnp.float32)
    w1, b1 = lin(ks[1], LATENT_DIM + NUM_CLASSES, 128)
    w2, b2 = lin(ks[2], 128, 256)
    w3, b3 = lin(ks[3], 256, 512)
    w4, b4 = lin(ks[4], 512, IMG_FLAT)

    # w4 dominates HBM traffic: bf16 + pre-tiled contiguous layout
    # (NT, 512, tn) so each grid step is one long contiguous DMA burst.
    NT = IMG_FLAT // tn
    w4t = (w4.astype(jnp.bfloat16)
              .reshape(512, NT, tn)
              .transpose(1, 0, 2))                        # [NT, 512, tn]

    return {
        "emb": emb,
        "w1": w1, "b1": b1,
        "w2": w2, "b2": b2,
        "g2": jnp.ones((1, 256), jnp.float32), "be2": jnp.zeros((1, 256), jnp.float32),
        "w3": w3, "b3": b3,
        "g3": jnp.ones((1, 512), jnp.float32), "be3": jnp.zeros((1, 512), jnp.float32),
        "w4t": w4t, "b4": b4,
    }


if __name__ == "__main__":
    key = jax.random.PRNGKey(0)
    k_params, k_noise, k_labels = jax.random.split(key, 3)

    B = 8
    params = init_params(k_params, tn=2048)
    noise = jax.random.normal(k_noise, (B, LATENT_DIM), jnp.float32)
    labels = jax.random.randint(k_labels, (B,), 0, NUM_CLASSES)

    img = jax.jit(generator_forward)(params, noise, labels)
    img = jax.block_until_ready(img)

    assert img.shape == (B, 3, 64, 64), img.shape
    assert img.dtype == jnp.float32
    assert bool(jnp.all(jnp.isfinite(img)))
    assert bool(jnp.all(jnp.abs(img) <= 1.0 + 1e-6))   # tanh range
    print("KERNEL_OK")
</pallas_src>

<mosaic_0001>
module attributes {stable_mosaic.version = 11 : i64} {
  func.func @hidden_mlp_kernel(%arg0: memref<8x104xf32, #tpu.memory_space<vmem>>, %arg1: memref<104x128xf32, #tpu.memory_space<vmem>>, %arg2: memref<1x128xf32, #tpu.memory_space<vmem>>, %arg3: memref<128x256xf32, #tpu.memory_space<vmem>>, %arg4: memref<1x256xf32, #tpu.memory_space<vmem>>, %arg5: memref<1x256xf32, #tpu.memory_space<vmem>>, %arg6: memref<1x256xf32, #tpu.memory_space<vmem>>, %arg7: memref<256x512xf32, #tpu.memory_space<vmem>>, %arg8: memref<1x512xf32, #tpu.memory_space<vmem>>, %arg9: memref<1x512xf32, #tpu.memory_space<vmem>>, %arg10: memref<1x512xf32, #tpu.memory_space<vmem>>, %arg11: memref<8x512xbf16, #tpu.memory_space<vmem>>) attributes {dimension_semantics = [], scalar_prefetch = 0 : i64, scratch_operands = 0 : i64, tpu.core_type = #tpu.core_type<tc>} {
    %c0 = arith.constant 0 : index
    %c0_0 = arith.constant 0 : index
    %0 = vector.load %arg0[%c0, %c0_0] : memref<8x104xf32, #tpu.memory_space<vmem>>, vector<8x104xf32>
    %c0_1 = arith.constant 0 : index
    %c0_2 = arith.constant 0 : index
    %1 = vector.load %arg1[%c0_1, %c0_2] : memref<104x128xf32, #tpu.memory_space<vmem>>, vector<104x128xf32>
    %cst = arith.constant dense<0.000000e+00> : vector<8x128xf32>
    %2 = tpu.matmul %0, %1, %cst {dimension_numbers = #tpu.dot_dimension_numbers<[1], [0], [0], [1], [0, 0, 1, 1], [], []>} : vector<8x104xf32>, vector<104x128xf32>, vector<8x128xf32> -> vector<8x128xf32>
    %c0_3 = arith.constant 0 : index
    %c0_4 = arith.constant 0 : index
    %3 = vector.load %arg2[%c0_3, %c0_4] : memref<1x128xf32, #tpu.memory_space<vmem>>, vector<1x128xf32>
    %4 = vector.broadcast %3 : vector<1x128xf32> to vector<8x128xf32>
    %5 = arith.addf %2, %4 : vector<8x128xf32>
    %cst_5 = arith.constant 0.000000e+00 : f32
    %6 = vector.broadcast %cst_5 : f32 to vector<8x128xf32>
    %7 = arith.cmpf ogt, %5, %6 : vector<8x128xf32>
    %cst_6 = arith.constant 2.000000e-01 : f32
    %8 = vector.broadcast %cst_6 : f32 to vector<8x128xf32>
    %9 = arith.mulf %8, %5 : vector<8x128xf32>
    %10 = arith.select %7, %5, %9 : vector<8x128xi1>, vector<8x128xf32>
    %c0_7 = arith.constant 0 : index
    %c0_8 = arith.constant 0 : index
    %11 = vector.load %arg3[%c0_7, %c0_8] : memref<128x256xf32, #tpu.memory_space<vmem>>, vector<128x256xf32>
    %cst_9 = arith.constant dense<0.000000e+00> : vector<8x256xf32>
    %12 = tpu.matmul %10, %11, %cst_9 {dimension_numbers = #tpu.dot_dimension_numbers<[1], [0], [0], [1], [0, 0, 1, 1], [], []>} : vector<8x128xf32>, vector<128x256xf32>, vector<8x256xf32> -> vector<8x256xf32>
    %c0_10 = arith.constant 0 : index
    %c0_11 = arith.constant 0 : index
    %13 = vector.load %arg4[%c0_10, %c0_11] : memref<1x256xf32, #tpu.memory_space<vmem>>, vector<1x256xf32>
    %14 = vector.broadcast %13 : vector<1x256xf32> to vector<8x256xf32>
    %15 = arith.addf %12, %14 : vector<8x256xf32>
    %c0_12 = arith.constant 0 : index
    %c0_13 = arith.constant 0 : index
    %16 = vector.load %arg5[%c0_12, %c0_13] : memref<1x256xf32, #tpu.memory_space<vmem>>, vector<1x256xf32>
    %c0_14 = arith.constant 0 : index
    %c0_15 = arith.constant 0 : index
    %17 = vector.load %arg6[%c0_14, %c0_15] : memref<1x256xf32, #tpu.memory_space<vmem>>, vector<1x256xf32>
    %cst_16 = arith.constant dense<0.000000e+00> : vector<256xf32>
    %18 = vector.multi_reduction <add>, %15, %cst_16 [0] : vector<8x256xf32> to vector<256xf32>
    %19 = vector.shape_cast %18 : vector<256xf32> to vector<1x256xf32>
    %cst_17 = arith.constant 8.000000e+00 : f32
    %20 = vector.broadcast %cst_17 : f32 to vector<1x256xf32>
    %21 = arith.divf %19, %20 : vector<1x256xf32>
    %22 = vector.broadcast %21 : vector<1x256xf32> to vector<8x256xf32>
    %23 = arith.subf %15, %22 : vector<8x256xf32>
    %24 = arith.mulf %23, %23 : vector<8x256xf32>
    %cst_18 = arith.constant dense<0.000000e+00> : vector<256xf32>
    %25 = vector.multi_reduction <add>, %24, %cst_18 [0] : vector<8x256xf32> to vector<256xf32>
    %26 = vector.shape_cast %25 : vector<256xf32> to vector<1x256xf32>
    %cst_19 = arith.constant 8.000000e+00 : f32
    %27 = vector.broadcast %cst_19 : f32 to vector<1x256xf32>
    %28 = arith.divf %26, %27 : vector<1x256xf32>
    %cst_20 = arith.constant 9.99999974E-6 : f32
    %29 = vector.broadcast %cst_20 : f32 to vector<1x256xf32>
    %30 = arith.addf %28, %29 : vector<1x256xf32>
    %31 = math.rsqrt %30 : vector<1x256xf32>
    %32 = vector.broadcast %31 : vector<1x256xf32> to vector<8x256xf32>
    %33 = arith.mulf %23, %32 : vector<8x256xf32>
    %34 = vector.broadcast %16 : vector<1x256xf32> to vector<8x256xf32>
    %35 = arith.mulf %33, %34 : vector<8x256xf32>
    %36 = vector.broadcast %17 : vector<1x256xf32> to vector<8x256xf32>
    %37 = arith.addf %35, %36 : vector<8x256xf32>
    %cst_21 = arith.constant 0.000000e+00 : f32
    %38 = vector.broadcast %cst_21 : f32 to vector<8x256xf32>
    %39 = arith.cmpf ogt, %37, %38 : vector<8x256xf32>
    %cst_22 = arith.constant 2.000000e-01 : f32
    %40 = vector.broadcast %cst_22 : f32 to vector<8x256xf32>
    %41 = arith.mulf %40, %37 : vector<8x256xf32>
    %42 = arith.select %39, %37, %41 : vector<8x256xi1>, vector<8x256xf32>
    %c0_23 = arith.constant 0 : index
    %c0_24 = arith.constant 0 : index
    %43 = vector.load %arg7[%c0_23, %c0_24] : memref<256x512xf32, #tpu.memory_space<vmem>>, vector<256x512xf32>
    %cst_25 = arith.constant dense<0.000000e+00> : vector<8x512xf32>
    %44 = tpu.matmul %42, %43, %cst_25 {dimension_numbers = #tpu.dot_dimension_numbers<[1], [0], [0], [1], [0, 0, 1, 1], [], []>} : vector<8x256xf32>, vector<256x512xf32>, vector<8x512xf32> -> vector<8x512xf32>
    %c0_26 = arith.constant 0 : index
    %c0_27 = arith.constant 0 : index
    %45 = vector.load %arg8[%c0_26, %c0_27] : memref<1x512xf32, #tpu.memory_space<vmem>>, vector<1x512xf32>
    %46 = vector.broadcast %45 : vector<1x512xf32> to vector<8x512xf32>
    %47 = arith.addf %44, %46 : vector<8x512xf32>
    %c0_28 = arith.constant 0 : index
    %c0_29 = arith.constant 0 : index
    %48 = vector.load %arg9[%c0_28, %c0_29] : memref<1x512xf32, #tpu.memory_space<vmem>>, vector<1x512xf32>
    %c0_30 = arith.constant 0 : index
    %c0_31 = arith.constant 0 : index
    %49 = vector.load %arg10[%c0_30, %c0_31] : memref<1x512xf32, #tpu.memory_space<vmem>>, vector<1x512xf32>
    %cst_32 = arith.constant dense<0.000000e+00> : vector<512xf32>
    %50 = vector.multi_reduction <add>, %47, %cst_32 [0] : vector<8x512xf32> to vector<512xf32>
    %51 = vector.shape_cast %50 : vector<512xf32> to vector<1x512xf32>
    %cst_33 = arith.constant 8.000000e+00 : f32
    %52 = vector.broadcast %cst_33 : f32 to vector<1x512xf32>
    %53 = arith.divf %51, %52 : vector<1x512xf32>
    %54 = vector.broadcast %53 : vector<1x512xf32> to vector<8x512xf32>
    %55 = arith.subf %47, %54 : vector<8x512xf32>
    %56 = arith.mulf %55, %55 : vector<8x512xf32>
    %cst_34 = arith.constant dense<0.000000e+00> : vector<512xf32>
    %57 = vector.multi_reduction <add>, %56, %cst_34 [0] : vector<8x512xf32> to vector<512xf32>
    %58 = vector.shape_cast %57 : vector<512xf32> to vector<1x512xf32>
    %cst_35 = arith.constant 8.000000e+00 : f32
    %59 = vector.broadcast %cst_35 : f32 to vector<1x512xf32>
    %60 = arith.divf %58, %59 : vector<1x512xf32>
    %cst_36 = arith.constant 9.99999974E-6 : f32
    %61 = vector.broadcast %cst_36 : f32 to vector<1x512xf32>
    %62 = arith.addf %60, %61 : vector<1x512xf32>
    %63 = math.rsqrt %62 : vector<1x512xf32>
    %64 = vector.broadcast %63 : vector<1x512xf32> to vector<8x512xf32>
    %65 = arith.mulf %55, %64 : vector<8x512xf32>
    %66 = vector.broadcast %48 : vector<1x512xf32> to vector<8x512xf32>
    %67 = arith.mulf %65, %66 : vector<8x512xf32>
    %68 = vector.broadcast %49 : vector<1x512xf32> to vector<8x512xf32>
    %69 = arith.addf %67, %68 : vector<8x512xf32>
    %cst_37 = arith.constant 0.000000e+00 : f32
    %70 = vector.broadcast %cst_37 : f32 to vector<8x512xf32>
    %71 = arith.cmpf ogt, %69, %70 : vector<8x512xf32>
    %cst_38 = arith.constant 2.000000e-01 : f32
    %72 = vector.broadcast %cst_38 : f32 to vector<8x512xf32>
    %73 = arith.mulf %72, %69 : vector<8x512xf32>
    %74 = arith.select %71, %69, %73 : vector<8x512xi1>, vector<8x512xf32>
    %75 = arith.truncf %74 : vector<8x512xf32> to vector<8x512xbf16>
    %c0_39 = arith.constant 0 : index
    %c0_40 = arith.constant 0 : index
    %76 = vector.load %arg11[%c0_39, %c0_40] : memref<8x512xbf16, #tpu.memory_space<vmem>>, vector<8x512xbf16>
    tpu.vector_store %arg11[%c0_39, %c0_40], %75 {strides = array<i32>} : memref<8x512xbf16, #tpu.memory_space<vmem>>, vector<8x512xbf16>,
    return
  }
}

module attributes {stable_mosaic.version = 11 : i64} {
  func.func @projection_kernel(%arg0: i32, %arg1: memref<8x512xbf16, #tpu.memory_space<vmem>>, %arg2: memref<1x512x2048xbf16, #tpu.memory_space<vmem>>, %arg3: memref<1x2048xf32, #tpu.memory_space<vmem>>, %arg4: memref<8x2048xf32, #tpu.memory_space<vmem>>) attributes {dimension_semantics = [#tpu.dimension_semantics<parallel>], iteration_bounds = array<i64: 6>, scalar_prefetch = 0 : i64, scratch_operands = 0 : i64, tpu.core_type = #tpu.core_type<tc>, window_params = [{pipeline_mode = #tpu.pipeline_mode<synchronous>, transform_indices = @transform_0, window_bounds = array<i64: 8, 512>}, {transform_indices = @transform_1, window_bounds = array<i64: 1, 512, 2048>}, {transform_indices = @transform_2, window_bounds = array<i64: 1, 2048>}, {transform_indices = @transform_3, window_bounds = array<i64: 8, 2048>}]} {
    %c0 = arith.constant 0 : index
    %c0_0 = arith.constant 0 : index
    %0 = vector.load %arg1[%c0, %c0_0] : memref<8x512xbf16, #tpu.memory_space<vmem>>, vector<8x512xbf16>
    %c0_1 = arith.constant 0 : index
    %c0_2 = arith.constant 0 : index
    %c0_3 = arith.constant 0 : index
    %1 = vector.load %arg2[%c0_1, %c0_2, %c0_3] : memref<1x512x2048xbf16, #tpu.memory_space<vmem>>, vector<1x512x2048xbf16>
    %2 = vector.shape_cast %1 : vector<1x512x2048xbf16> to vector<512x2048xbf16>
    %cst = arith.constant dense<0.000000e+00> : vector<8x2048xf32>
    %3 = tpu.matmul %0, %2, %cst {dimension_numbers = #tpu.dot_dimension_numbers<[1], [0], [0], [1], [0, 0, 1, 1], [], []>} : vector<8x512xbf16>, vector<512x2048xbf16>, vector<8x2048xf32> -> vector<8x2048xf32>
    %c0_4 = arith.constant 0 : index
    %c0_5 = arith.constant 0 : index
    %4 = vector.load %arg3[%c0_4, %c0_5] : memref<1x2048xf32, #tpu.memory_space<vmem>>, vector<1x2048xf32>
    %5 = vector.broadcast %4 : vector<1x2048xf32> to vector<8x2048xf32>
    %6 = arith.addf %3, %5 : vector<8x2048xf32>
    %7 = math.tanh %6 : vector<8x2048xf32>
    %c0_6 = arith.constant 0 : index
    %c0_7 = arith.constant 0 : index
    %8 = vector.load %arg4[%c0_6, %c0_7] : memref<8x2048xf32, #tpu.memory_space<vmem>>, vector<8x2048xf32>
    tpu.vector_store %arg4[%c0_6, %c0_7], %7 {strides = array<i32>} : memref<8x2048xf32, #tpu.memory_space<vmem>>, vector<8x2048xf32>,
    return
  }
  func.func @transform_0(%arg0: i32) -> (i32, i32) {
    %c0_i32 = arith.constant 0 : i32
    %c0_i32_0 = arith.constant 0 : i32
    %c0_i32_1 = arith.constant 0 : i32
    return %c0_i32, %c0_i32_0 : i32, i32
  }
  func.func @transform_1(%arg0: i32) -> (i32, i32, i32) {
    %c0_i32 = arith.constant 0 : i32
    %c0_i32_0 = arith.constant 0 : i32
    %c0_i32_1 = arith.constant 0 : i32
    return %arg0, %c0_i32, %c0_i32_0 : i32, i32, i32
  }
  func.func @transform_2(%arg0: i32) -> (i32, i32) {
    %c0_i32 = arith.constant 0 : i32
    %c0_i32_0 = arith.constant 0 : i32
    return %c0_i32, %arg0 : i32, i32
  }
  func.func @transform_3(%arg0: i32) -> (i32, i32) {
    %c0_i32 = arith.constant 0 : i32
    %c0_i32_0 = arith.constant 0 : i32
    return %c0_i32, %arg0 : i32, i32
  }
}

</mosaic_0001>

<llo_original>
// kernel: generator_forward.2
$region0: #{generator_forward.2}
  #allocation0 [shape = 'u32[]', space=smem, size = 0x4, offset = 0x4, fixed_abs, tag = 'smem constant byte address 0x4 - core index']
  #allocation1 [shape = 'u32[72,128]{1,0:T(1,128)}', space=vmem, size = 0x9000, scoped, tag = 'internal scratch']
  %s0 = inlined_call_operand.vmem [shape: f32[8,104], index: 0, kind: input, shape index: {}]
  %s1 = inlined_call_operand.hbm [shape: f32[104,128], index: 1, kind: input, shape index: {}]
  %s2 = inlined_call_operand.hbm [shape: f32[1,128], index: 2, kind: input, shape index: {}]
  %s3 = inlined_call_operand.hbm [shape: f32[128,256], index: 3, kind: input, shape index: {}]
  %s4 = inlined_call_operand.hbm [shape: f32[1,256], index: 4, kind: input, shape index: {}]
  %s5 = inlined_call_operand.hbm [shape: f32[1,256], index: 5, kind: input, shape index: {}]
  %s6 = inlined_call_operand.hbm [shape: f32[1,256], index: 6, kind: input, shape index: {}]
  %s7 = inlined_call_operand.hbm [shape: f32[256,512], index: 7, kind: input, shape index: {}]
  %s8 = inlined_call_operand.hbm [shape: f32[1,512], index: 8, kind: input, shape index: {}]
  %s9 = inlined_call_operand.hbm [shape: f32[1,512], index: 9, kind: input, shape index: {}]
  %s10 = inlined_call_operand.hbm [shape: f32[1,512], index: 10, kind: input, shape index: {}]
  %s11 = inlined_call_operand.vmem [shape: bf16[8,512], index: 11, kind: output, shape index: {}]
  %s12 = sld [smem:[#allocation0]]
  $region94: #{generator_forward.2} parent=0
    _
  %s14 = ssub.s32 1, %s12
  %s15 = scalar_select 0, %s14, %s12
  $region1: #{generator_forward.2} parent=0
    #allocation2 [shape = 'u8[53248]{0}', space=vmem, size = 0xd000, scoped, tag = 'input window, operand 1, single buffered']
    #allocation3 [shape = 's32[1]{0}', space=sflag, size = 0x4, scoped, tag = 'scoped memory for generator_forward.2']
    #allocation4 [shape = 'u8[512]{0}', space=vmem, size = 0x400, scoped, tag = 'input window, operand 2, single buffered']
    #allocation5 [shape = 's32[1]{0}', space=sflag, size = 0x4, scoped, tag = 'scoped memory for generator_forward.2']
    #allocation6 [shape = 'u8[131072]{0}', space=vmem, size = 0x20000, scoped, tag = 'input window, operand 3, single buffered']
    #allocation7 [shape = 'u8[1024]{0}', space=vmem, size = 0x400, scoped, tag = 'input window, operand 4, single buffered']
    #allocation8 [shape = 's32[1]{0}', space=sflag, size = 0x4, scoped, tag = 'scoped memory for generator_forward.2']
    #allocation9 [shape = 'u8[1024]{0}', space=vmem, size = 0x400, scoped, tag = 'input window, operand 5, single buffered']
    #allocation10 [shape = 'u8[1024]{0}', space=vmem, size = 0x400, scoped, tag = 'input window, operand 6, single buffered']
    #allocation11 [shape = 's32[1]{0}', space=sflag, size = 0x4, scoped, tag = 'scoped memory for generator_forward.2']
    #allocation12 [shape = 'u8[524288]{0}', space=vmem, size = 0x80000, scoped, tag = 'input window, operand 7, single buffered']
    #allocation13 [shape = 'u8[2048]{0}', space=vmem, size = 0x800, scoped, tag = 'input window, operand 8, single buffered']
    #allocation14 [shape = 's32[1]{0}', space=sflag, size = 0x4, scoped, tag = 'scoped memory for generator_forward.2']
    #allocation15 [shape = 'u8[2048]{0}', space=vmem, size = 0x800, scoped, tag = 'input window, operand 9, single buffered']
    #allocation16 [shape = 'u8[2048]{0}', space=vmem, size = 0x800, scoped, tag = 'input window, operand 10, single buffered']
    #allocation17 [shape = 's32[1]{0}', space=sflag, size = 0x4, scoped, tag = 'scoped memory for generator_forward.2']
    %16 = vsyncpa [#allocation3], 0
    %17 = vsyncpa [#allocation5], 0
    %18 = vsyncpa [#allocation8], 0
    %19 = vsyncpa [#allocation11], 0
    %20 = vsyncpa [#allocation14], 0
    %21 = vsyncpa [#allocation17], 0
    // Predicated region
    $region2: #{generator_forward.2} parent=1 // pred_check
      _
    $region3: #{generator_forward.2} parent=1 // pred_check_branch
      %23 = sbr.rel (0) target = $region5
    $region4: #{generator_forward.2} parent=1 // pred_region
      _
    $region5: #{generator_forward.2} parent=1 // pred_fallthru
      _
    // Predicated region
    $region6: #{generator_forward.2} parent=1 // pred_check
      _
    $region7: #{generator_forward.2} parent=1 // pred_check_branch
      %25 = sbr.rel (0) target = $region9
    $region8: #{generator_forward.2} parent=1 // pred_region
      %27 = vsyncadd [#allocation3], 0
      %s28 = sshll.u32 %s1, 4
      %s29 = int_to_ptr.hbm [resolvable:$true] %s28
      %s30 = sshll.u32 [#allocation2], 4
      %s31 = int_to_ptr.vmem [resolvable:$true] %s30
      %36 = dma.hbm_to_vmem [thread:$0]  %s29, 1664, %s31, [#allocation3], 128, 128, 8
    $region9: #{generator_forward.2} parent=1 // pred_fallthru
      _
    // Predicated region
    $region10: #{generator_forward.2} parent=1 // pred_check
      _
    $region11: #{generator_forward.2} parent=1 // pred_check_branch
      %38 = sbr.rel (0) target = $region13
    $region12: #{generator_forward.2} parent=1 // pred_region
      %40 = vsyncadd [#allocation5], 0
      %s42 = sshll.u32 %s2, 4
      %s43 = int_to_ptr.hbm [resolvable:$true] %s42
      %s44 = sshll.u32 [#allocation4], 4
      %s45 = int_to_ptr.vmem [resolvable:$true] %s44
      %47 = dma.hbm_to_vmem [thread:$0]  %s43, 16, %s45, [#allocation5]
    $region13: #{generator_forward.2} parent=1 // pred_fallthru
      _
    // Predicated region
    $region14: #{generator_forward.2} parent=1 // pred_check
      _
    $region15: #{generator_forward.2} parent=1 // pred_check_branch
      %49 = sbr.rel (0) target = $region17
    $region16: #{generator_forward.2} parent=1 // pred_region
      %51 = vsyncadd [#allocation5], 0
      %s52 = sshll.u32 %s3, 4
      %s53 = int_to_ptr.hbm [resolvable:$true] %s52
      %s54 = sshll.u32 [#allocation6], 4
      %s55 = int_to_ptr.vmem [resolvable:$true] %s54
      %60 = dma.hbm_to_vmem [thread:$0]  %s53, 4096, %s55, [#allocation5], 256, 256, 16
    $region17: #{generator_forward.2} parent=1 // pred_fallthru
      _
    // Predicated region
    $region18: #{generator_forward.2} parent=1 // pred_check
      _
    $region19: #{generator_forward.2} parent=1 // pred_check_branch
      %62 = sbr.rel (0) target = $region21
    $region20: #{generator_forward.2} parent=1 // pred_region
      %64 = vsyncadd [#allocation8], 0
      %s66 = sshll.u32 %s4, 4
      %s67 = int_to_ptr.hbm [resolvable:$true] %s66
      %s68 = sshll.u32 [#allocation7], 4
      %s69 = int_to_ptr.vmem [resolvable:$true] %s68
      %71 = dma.hbm_to_vmem [thread:$0]  %s67, 32, %s69, [#allocation8]
    $region21: #{generator_forward.2} parent=1 // pred_fallthru
      _
    // Predicated region
    $region22: #{generator_forward.2} parent=1 // pred_check
      _
    $region23: #{generator_forward.2} parent=1 // pred_check_branch
      %73 = sbr.rel (0) target = $region25
    $region24: #{generator_forward.2} parent=1 // pred_region
      %75 = vsyncadd [#allocation8], 0
      %s77 = sshll.u32 %s5, 4
      %s78 = int_to_ptr.hbm [resolvable:$true] %s77
      %s79 = sshll.u32 [#allocation9], 4
      %s80 = int_to_ptr.vmem [resolvable:$true] %s79
      %82 = dma.hbm_to_vmem [thread:$0]  %s78, 32, %s80, [#allocation8]
    $region25: #{generator_forward.2} parent=1 // pred_fallthru
      _
    // Predicated region
    $region26: #{generator_forward.2} parent=1 // pred_check
      _
    $region27: #{generator_forward.2} parent=1 // pred_check_branch
      %84 = sbr.rel (0) target = $region29
    $region28: #{generator_forward.2} parent=1 // pred_region
      %86 = vsyncadd [#allocation11], 0
      %s88 = sshll.u32 %s6, 4
      %s89 = int_to_ptr.hbm [resolvable:$true] %s88
      %s90 = sshll.u32 [#allocation10], 4
      %s91 = int_to_ptr.vmem [resolvable:$true] %s90
      %93 = dma.hbm_to_vmem [thread:$0]  %s89, 32, %s91, [#allocation11]
    $region29: #{generator_forward.2} parent=1 // pred_fallthru
      _
    // Predicated region
    $region30: #{generator_forward.2} parent=1 // pred_check
      _
    $region31: #{generator_forward.2} parent=1 // pred_check_branch
      %95 = sbr.rel (0) target = $region33
    $region32: #{generator_forward.2} parent=1 // pred_region
      %97 = vsyncadd [#allocation11], 0
      %s98 = sshll.u32 %s7, 4
      %s99 = int_to_ptr.hbm [resolvable:$true] %s98
      %s100 = sshll.u32 [#allocation12], 4
      %s101 = int_to_ptr.vmem [resolvable:$true] %s100
      %106 = dma.hbm_to_vmem [thread:$0]  %s99, 16384, %s101, [#allocation11], 512, 512, 32
    $region33: #{generator_forward.2} parent=1 // pred_fallthru
      _
    // Predicated region
    $region34: #{generator_forward.2} parent=1 // pred_check
      _
    $region35: #{generator_forward.2} parent=1 // pred_check_branch
      %108 = sbr.rel (0) target = $region37
    $region36: #{generator_forward.2} parent=1 // pred_region
      %110 = vsyncadd [#allocation14], 0
      %s112 = sshll.u32 %s8, 4
      %s113 = int_to_ptr.hbm [resolvable:$true] %s112
      %s114 = sshll.u32 [#allocation13], 4
      %s115 = int_to_ptr.vmem [resolvable:$true] %s114
      %117 = dma.hbm_to_vmem [thread:$0]  %s113, 64, %s115, [#allocation14]
    $region37: #{generator_forward.2} parent=1 // pred_fallthru
      _
    // Predicated region
    $region38: #{generator_forward.2} parent=1 // pred_check
      _
    $region39: #{generator_forward.2} parent=1 // pred_check_branch
      %119 = sbr.rel (0) target = $region41
    $region40: #{generator_forward.2} parent=1 // pred_region
      %121 = vsyncadd [#allocation14], 0
      %s123 = sshll.u32 %s9, 4
      %s124 = int_to_ptr.hbm [resolvable:$true] %s123
      %s125 = sshll.u32 [#allocation15], 4
      %s126 = int_to_ptr.vmem [resolvable:$true] %s125
      %128 = dma.hbm_to_vmem [thread:$0]  %s124, 64, %s126, [#allocation14]
    $region41: #{generator_forward.2} parent=1 // pred_fallthru
      _
    // Predicated region
    $region42: #{generator_forward.2} parent=1 // pred_check
      _
    $region43: #{generator_forward.2} parent=1 // pred_check_branch
      %130 = sbr.rel (0) target = $region45
    $region44: #{generator_forward.2} parent=1 // pred_region
      %132 = vsyncadd [#allocation17], 0
      %s134 = sshll.u32 %s10, 4
      %s135 = int_to_ptr.hbm [resolvable:$true] %s134
      %s136 = sshll.u32 [#allocation16], 4
      %s137 = int_to_ptr.vmem [resolvable:$true] %s136
      %139 = dma.hbm_to_vmem [thread:$0]  %s135, 64, %s137, [#allocation17]
    $region45: #{generator_forward.2} parent=1 // pred_fallthru
      _
    // Predicated region
    $region46: #{generator_forward.2} parent=1 // pred_check
      _
    $region47: #{generator_forward.2} parent=1 // pred_check_branch
      %141 = sbr.rel (0) target = $region49
    $region48: #{generator_forward.2} parent=1 // pred_region
      %143 = dma.done [#allocation3], 1664
    $region49: #{generator_forward.2} parent=1 // pred_fallthru
      _
    // Predicated region
    $region50: #{generator_forward.2} parent=1 // pred_check
      _
    $region51: #{generator_forward.2} parent=1 // pred_check_branch
      %145 = sbr.rel (0) target = $region53
    $region52: #{generator_forward.2} parent=1 // pred_region
      %147 = dma.done [#allocation5], 16
    $region53: #{generator_forward.2} parent=1 // pred_fallthru
      _
    // Predicated region
    $region54: #{generator_forward.2} parent=1 // pred_check
      _
    $region55: #{generator_forward.2} parent=1 // pred_check_branch
      %149 = sbr.rel (0) target = $region57
    $region56: #{generator_forward.2} parent=1 // pred_region
      %151 = dma.done [#allocation5], 4096
    $region57: #{generator_forward.2} parent=1 // pred_fallthru
      _
    // Predicated region
    $region58: #{generator_forward.2} parent=1 // pred_check
      _
    $region59: #{generator_forward.2} parent=1 // pred_check_branch
      %153 = sbr.rel (0) target = $region61
    $region60: #{generator_forward.2} parent=1 // pred_region
      %155 = dma.done [#allocation8], 32
    $region61: #{generator_forward.2} parent=1 // pred_fallthru
      _
    // Predicated region
    $region62: #{generator_forward.2} parent=1 // pred_check
      _
    $region63: #{generator_forward.2} parent=1 // pred_check_branch
      %157 = sbr.rel (0) target = $region65
    $region64: #{generator_forward.2} parent=1 // pred_region
      %159 = dma.done [#allocation8], 32
    $region65: #{generator_forward.2} parent=1 // pred_fallthru
      _
    // Predicated region
    $region66: #{generator_forward.2} parent=1 // pred_check
      _
    $region67: #{generator_forward.2} parent=1 // pred_check_branch
      %161 = sbr.rel (0) target = $region69
    $region68: #{generator_forward.2} parent=1 // pred_region
      %163 = dma.done [#allocation11], 32
    $region69: #{generator_forward.2} parent=1 // pred_fallthru
      _
    // Predicated region
    $region70: #{generator_forward.2} parent=1 // pred_check
      _
    $region71: #{generator_forward.2} parent=1 // pred_check_branch
      %165 = sbr.rel (0) target = $region73
    $region72: #{generator_forward.2} parent=1 // pred_region
      %167 = dma.done [#allocation11], 16384
    $region73: #{generator_forward.2} parent=1 // pred_fallthru
      _
    // Predicated region
    $region74: #{generator_forward.2} parent=1 // pred_check
      _
    $region75: #{generator_forward.2} parent=1 // pred_check_branch
      %169 = sbr.rel (0) target = $region77
    $region76: #{generator_forward.2} parent=1 // pred_region
      %171 = dma.done [#allocation14], 64
    $region77: #{generator_forward.2} parent=1 // pred_fallthru
      _
    // Predicated region
    $region78: #{generator_forward.2} parent=1 // pred_check
      _
    $region79: #{generator_forward.2} parent=1 // pred_check_branch
      %173 = sbr.rel (0) target = $region81
    $region80: #{generator_forward.2} parent=1 // pred_region
      %175 = dma.done [#allocation14], 64
    $region81: #{generator_forward.2} parent=1 // pred_fallthru
      _
    // Predicated region
    $region82: #{generator_forward.2} parent=1 // pred_check
      _
    $region83: #{generator_forward.2} parent=1 // pred_check_branch
      %177 = sbr.rel (0) target = $region85
    $region84: #{generator_forward.2} parent=1 // pred_region
      %179 = dma.done [#allocation17], 64
    $region85: #{generator_forward.2} parent=1 // pred_fallthru
      _
    %v180 = vld [vmem:[%s0] sm:$0xff]
    %v181 = vld [vmem:[#allocation2] sm:$0xff]
    %v182 = vld [vmem:[#allocation2 + $0x8] sm:$0xff]
    %v183 = vld [vmem:[#allocation2 + $0x10] sm:$0xff]
    %v184 = vld [vmem:[#allocation2 + $0x18] sm:$0xff]
    %v185 = vld [vmem:[#allocation2 + $0x20] sm:$0xff]
    %v186 = vld [vmem:[#allocation2 + $0x28] sm:$0xff]
    %v187 = vld [vmem:[#allocation2 + $0x30] sm:$0xff]
    %v188 = vld [vmem:[#allocation2 + $0x38] sm:$0xff]
    %v189 = vld [vmem:[#allocation2 + $0x40] sm:$0xff]
    %v190 = vld [vmem:[#allocation2 + $0x48] sm:$0xff]
    %v191 = vld [vmem:[#allocation2 + $0x50] sm:$0xff]
    %v192 = vld [vmem:[#allocation2 + $0x58] sm:$0xff]
    %v193 = vld [vmem:[#allocation2 + $0x60] sm:$0xff]
    %v194 = vld [vmem:[#allocation4] sm:$0x1]
    %v196 = vperm.slane %v194, 0
    %vm198 = vcmask 850944
    %v200 = vsel %vm198, %v180, 0
    %202 = vmatpush.msra.mxu0 0.0
    %203 = vmatpush.msra.mxu0 0.0
    %204 = vmatpush.msra.mxu0 0.0
    %205 = vmatpush.msra.mxu0 %v193
    %206 = vmatpush.msra.mxu0 %v192
    %207 = vmatpush.msra.mxu0 %v191
    %208 = vmatpush.msra.mxu0 %v190
    %209 = vmatpush.msra.mxu0 %v189
    %210 = vmatpush.msra.mxu0 %v188
    %211 = vmatpush.msra.mxu0 %v187
    %212 = vmatpush.msra.mxu0 %v186
    %213 = vmatpush.msra.mxu0 %v185
    %214 = vmatpush.msra.mxu0 %v184
    %215 = vmatpush.msra.mxu0 %v183
    %216 = vmatpush.msra.mxu0 %v182
    %217 = vmatpush.msra.mxu0 %v181
    %218 = vmatmul.f32.gmra.mxu0 %v200
    %v219 = vpop.f32.mrf.mxu0
    %v220 = vadd.f32 %v196, %v219
    %221 = vdwg.mxu0
    %vm222 = vcmp.gt.f32.partialorder %v220, 0.0
    %v223 = vmul.f32 %v220, 0.2
    %v224 = vsel %vm222, %v220, %v223
    %v225 = vld [vmem:[#allocation6] sm:$0xff]
    %v226 = vld [vmem:[#allocation6 + $0x8] sm:$0xff]
    %v227 = vld [vmem:[#allocation6 + $0x10] sm:$0xff]
    %v228 = vld [vmem:[#allocation6 + $0x18] sm:$0xff]
    %v229 = vld [vmem:[#allocation6 + $0x20] sm:$0xff]
    %v230 = vld [vmem:[#allocation6 + $0x28] sm:$0xff]
    %v231 = vld [vmem:[#allocation6 + $0x30] sm:$0xff]
    %v232 = vld [vmem:[#allocation6 + $0x38] sm:$0xff]
    %v233 = vld [vmem:[#allocation6 + $0x40] sm:$0xff]
    %v234 = vld [vmem:[#allocation6 + $0x48] sm:$0xff]
    %v235 = vld [vmem:[#allocation6 + $0x50] sm:$0xff]
    %v236 = vld [vmem:[#allocation6 + $0x58] sm:$0xff]
    %v237 = vld [vmem:[#allocation6 + $0x60] sm:$0xff]
    %v238 = vld [vmem:[#allocation6 + $0x68] sm:$0xff]
    %v239 = vld [vmem:[#allocation6 + $0x70] sm:$0xff]
    %v240 = vld [vmem:[#allocation6 + $0x78] sm:$0xff]
    %v241 = vld [vmem:[#allocation6 + $0x80] sm:$0xff]
    %v242 = vld [vmem:[#allocation6 + $0x88] sm:$0xff]
    %v243 = vld [vmem:[#allocation6 + $0x90] sm:$0xff]
    %v244 = vld [vmem:[#allocation6 + $0x98] sm:$0xff]
    %v245 = vld [vmem:[#allocation6 + $0xa0] sm:$0xff]
    %v246 = vld [vmem:[#allocation6 + $0xa8] sm:$0xff]
    %v247 = vld [vmem:[#allocation6 + $0xb0] sm:$0xff]
    %v248 = vld [vmem:[#allocation6 + $0xb8] sm:$0xff]
    %v249 = vld [vmem:[#allocation6 + $0xc0] sm:$0xff]
    %v250 = vld [vmem:[#allocation6 + $0xc8] sm:$0xff]
    %v251 = vld [vmem:[#allocation6 + $0xd0] sm:$0xff]
    %v252 = vld [vmem:[#allocation6 + $0xd8] sm:$0xff]
    %v253 = vld [vmem:[#allocation6 + $0xe0] sm:$0xff]
    %v254 = vld [vmem:[#allocation6 + $0xe8] sm:$0xff]
    %v255 = vld [vmem:[#allocation6 + $0xf0] sm:$0xff]
    %v256 = vld [vmem:[#allocation6 + $0xf8] sm:$0xff]
    %v257 = vld [vmem:[#allocation7] sm:$0x3]
    %v259 = vperm.slane %v257, 0
    %v260 = vperm.slane %v257, 1
    %263 = vmatpush.msra.mxu0 %v255
    %264 = vmatpush.msra.mxu0 %v253
    %265 = vmatpush.msra.mxu0 %v251
    %266 = vmatpush.msra.mxu0 %v249
    %267 = vmatpush.msra.mxu0 %v247
    %268 = vmatpush.msra.mxu0 %v245
    %269 = vmatpush.msra.mxu0 %v243
    %270 = vmatpush.msra.mxu0 %v241
    %271 = vmatpush.msra.mxu0 %v239
    %272 = vmatpush.msra.mxu0 %v237
    %273 = vmatpush.msra.mxu0 %v235
    %274 = vmatpush.msra.mxu0 %v233
    %275 = vmatpush.msra.mxu0 %v231
    %276 = vmatpush.msra.mxu0 %v229
    %277 = vmatpush.msra.mxu0 %v227
    %278 = vmatpush.msra.mxu0 %v225
    %279 = vmatmul.f32.gmra.mxu0 %v224
    %v280 = vpop.f32.mrf.mxu0
    %v281 = vadd.f32 %v259, %v280
    %282 = vdwg.mxu0
    %283 = vmatpush.msra.mxu0 %v256
    %284 = vmatpush.msra.mxu0 %v254
    %285 = vmatpush.msra.mxu0 %v252
    %286 = vmatpush.msra.mxu0 %v250
    %287 = vmatpush.msra.mxu0 %v248
    %288 = vmatpush.msra.mxu0 %v246
    %289 = vmatpush.msra.mxu0 %v244
    %290 = vmatpush.msra.mxu0 %v242
    %291 = vmatpush.msra.mxu0 %v240
    %292 = vmatpush.msra.mxu0 %v238
    %293 = vmatpush.msra.mxu0 %v236
    %294 = vmatpush.msra.mxu0 %v234
    %295 = vmatpush.msra.mxu0 %v232
    %296 = vmatpush.msra.mxu0 %v230
    %297 = vmatpush.msra.mxu0 %v228
    %298 = vmatpush.msra.mxu0 %v226
    %299 = vmatmul.f32.gmra.mxu0 %v224
    %v300 = vpop.f32.mrf.mxu0
    %v301 = vadd.f32 %v260, %v300
    %302 = vdwg.mxu0
    %v303 = vld [vmem:[#allocation9] sm:$0x3]
    %v304 = vld [vmem:[#allocation10] sm:$0x3]
    %v305 = vrot.slane %v281, 4
    %v306 = vadd.f32 %v281, %v305
    %v307 = vrot.slane %v306, 2
    %v308 = vadd.f32 %v306, %v307
    %v309 = vrot.slane %v308, 1
    %v310 = vadd.f32 %v308, %v309
    %v311 = vrot.slane %v301, 4
    %v312 = vadd.f32 %v301, %v311
    %v313 = vrot.slane %v312, 2
    %v314 = vadd.f32 %v312, %v313
    %v315 = vrot.slane %v314, 1
    %v316 = vadd.f32 %v314, %v315
    %v317 = vrcp.pop 8.0
    %v318 = vmul.f32 8.0, %v317
    %v319 = vsub.f32 1.0, %v318
    %v320 = vmul.f32 %v317, %v319
    %v321 = vadd.f32 %v317, %v320
    %vm322 = vweird.f32 %v317
    %v323 = vsel %vm322, %v317, %v321
    %v324 = vmul.f32 %v310, %v323
    %v325 = vmul.f32 %v316, %v323
    %v326 = vsub.f32 %v281, %v324
    %v327 = vsub.f32 %v301, %v325
    %v328 = vmul.f32 %v326, %v326
    %v329 = vmul.f32 %v327, %v327
    %v330 = vrot.slane %v328, 4
    %v331 = vadd.f32 %v328, %v330
    %v332 = vrot.slane %v331, 2
    %v333 = vadd.f32 %v331, %v332
    %v334 = vrot.slane %v333, 1
    %v335 = vadd.f32 %v333, %v334
    %v336 = vrot.slane %v329, 4
    %v337 = vadd.f32 %v329, %v336
    %v338 = vrot.slane %v337, 2
    %v339 = vadd.f32 %v337, %v338
    %v340 = vrot.slane %v339, 1
    %v341 = vadd.f32 %v339, %v340
    %v342 = vmul.f32 %v335, %v323
    %v343 = vmul.f32 %v341, %v323
    %v344 = vadd.f32 %v342, 1e-05
    %v345 = vadd.f32 %v343, 1e-05
    %v346 = vrsqrt.pop %v344
    %v347 = vmul.f32 %v346, %v344
    %v348 = vmul.f32 %v347, %v346
    %v349 = vmul.f32 0.5, %v348
    %v350 = vsub.f32 1.5, %v349
    %v351 = vmul.f32 %v346, %v350
    %vm352 = vweird.f32 %v344
    %vm353 = vweird.f32 %v346
    %vm354 = vmor %vm352, %vm353
    %v355 = vsel %vm354, %v346, %v351
    %v356 = vrsqrt.pop %v345
    %v357 = vmul.f32 %v356, %v345
    %v358 = vmul.f32 %v357, %v356
    %v359 = vmul.f32 0.5, %v358
    %v360 = vsub.f32 1.5, %v359
    %v361 = vmul.f32 %v356, %v360
    %vm362 = vweird.f32 %v345
    %vm363 = vweird.f32 %v356
    %vm364 = vmor %vm362, %vm363
    %v365 = vsel %vm364, %v356, %v361
    %v366 = vmul.f32 %v326, %v355
    %v367 = vmul.f32 %v327, %v365
    %v369 = vperm.slane %v303, 0
    %v370 = vperm.slane %v303, 1
    %v373 = vmul.f32 %v366, %v369
    %v374 = vmul.f32 %v367, %v370
    %v376 = vperm.slane %v304, 0
    %v377 = vperm.slane %v304, 1
    %v380 = vadd.f32 %v373, %v376
    %v381 = vadd.f32 %v374, %v377
    %vm382 = vcmp.gt.f32.partialorder %v380, 0.0
    %vm383 = vcmp.gt.f32.partialorder %v381, 0.0
    %v384 = vmul.f32 %v380, 0.2
    %v385 = vmul.f32 %v381, 0.2
    %v386 = vsel %vm382, %v380, %v384
    %v387 = vsel %vm383, %v381, %v385
    %v388 = vld [vmem:[#allocation12] sm:$0xff]
    %v389 = vld [vmem:[#allocation12 + $0x8] sm:$0xff]
    %v390 = vld [vmem:[#allocation12 + $0x10] sm:$0xff]
    %v391 = vld [vmem:[#allocation12 + $0x18] sm:$0xff]
    %v392 = vld [vmem:[#allocation12 + $0x20] sm:$0xff]
    %v393 = vld [vmem:[#allocation12 + $0x28] sm:$0xff]
    %v394 = vld [vmem:[#allocation12 + $0x30] sm:$0xff]
    %v395 = vld [vmem:[#allocation12 + $0x38] sm:$0xff]
    %v396 = vld [vmem:[#allocation12 + $0x40] sm:$0xff]
    %v397 = vld [vmem:[#allocation12 + $0x48] sm:$0xff]
    %v398 = vld [vmem:[#allocation12 + $0x50] sm:$0xff]
    %v399 = vld [vmem:[#allocation12 + $0x58] sm:$0xff]
    %v400 = vld [vmem:[#allocation12 + $0x60] sm:$0xff]
    %v401 = vld [vmem:[#allocation12 + $0x68] sm:$0xff]
    %v402 = vld [vmem:[#allocation12 + $0x70] sm:$0xff]
    %v403 = vld [vmem:[#allocation12 + $0x78] sm:$0xff]
    %v404 = vld [vmem:[#allocation12 + $0x80] sm:$0xff]
    %v405 = vld [vmem:[#allocation12 + $0x88] sm:$0xff]
    %v406 = vld [vmem:[#allocation12 + $0x90] sm:$0xff]
    %v407 = vld [vmem:[#allocation12 + $0x98] sm:$0xff]
    %v408 = vld [vmem:[#allocation12 + $0xa0] sm:$0xff]
    %v409 = vld [vmem:[#allocation12 + $0xa8] sm:$0xff]
    %v410 = vld [vmem:[#allocation12 + $0xb0] sm:$0xff]
    %v411 = vld [vmem:[#allocation12 + $0xb8] sm:$0xff]
    %v412 = vld [vmem:[#allocation12 + $0xc0] sm:$0xff]
    %v413 = vld [vmem:[#allocation12 + $0xc8] sm:$0xff]
    %v414 = vld [vmem:[#allocation12 + $0xd0] sm:$0xff]
    %v415 = vld [vmem:[#allocation12 + $0xd8] sm:$0xff]
    %v416 = vld [vmem:[#allocation12 + $0xe0] sm:$0xff]
    %v417 = vld [vmem:[#allocation12 + $0xe8] sm:$0xff]
    %v418 = vld [vmem:[#allocation12 + $0xf0] sm:$0xff]
    %v419 = vld [vmem:[#allocation12 + $0xf8] sm:$0xff]
    %v420 = vld [vmem:[#allocation12 + $0x100] sm:$0xff]
    %v421 = vld [vmem:[#allocation12 + $0x108] sm:$0xff]
    %v422 = vld [vmem:[#allocation12 + $0x110] sm:$0xff]
    %v423 = vld [vmem:[#allocation12 + $0x118] sm:$0xff]
    %v424 = vld [vmem:[#allocation12 + $0x120] sm:$0xff]
    %v425 = vld [vmem:[#allocation12 + $0x128] sm:$0xff]
    %v426 = vld [vmem:[#allocation12 + $0x130] sm:$0xff]
    %v427 = vld [vmem:[#allocation12 + $0x138] sm:$0xff]
    %v428 = vld [vmem:[#allocation12 + $0x140] sm:$0xff]
    %v429 = vld [vmem:[#allocation12 + $0x148] sm:$0xff]
    %v430 = vld [vmem:[#allocation12 + $0x150] sm:$0xff]
    %v431 = vld [vmem:[#allocation12 + $0x158] sm:$0xff]
    %v432 = vld [vmem:[#allocation12 + $0x160] sm:$0xff]
    %v433 = vld [vmem:[#allocation12 + $0x168] sm:$0xff]
    %v434 = vld [vmem:[#allocation12 + $0x170] sm:$0xff]
    %v435 = vld [vmem:[#allocation12 + $0x178] sm:$0xff]
    %v436 = vld [vmem:[#allocation12 + $0x180] sm:$0xff]
    %v437 = vld [vmem:[#allocation12 + $0x188] sm:$0xff]
    %v438 = vld [vmem:[#allocation12 + $0x190] sm:$0xff]
    %v439 = vld [vmem:[#allocation12 + $0x198] sm:$0xff]
    %v440 = vld [vmem:[#allocation12 + $0x1a0] sm:$0xff]
    %v441 = vld [vmem:[#allocation12 + $0x1a8] sm:$0xff]
    %v442 = vld [vmem:[#allocation12 + $0x1b0] sm:$0xff]
    %v443 = vld [vmem:[#allocation12 + $0x1b8] sm:$0xff]
    %v444 = vld [vmem:[#allocation12 + $0x1c0] sm:$0xff]
    %v445 = vld [vmem:[#allocation12 + $0x1c8] sm:$0xff]
    %v446 = vld [vmem:[#allocation12 + $0x1d0] sm:$0xff]
    %v447 = vld [vmem:[#allocation12 + $0x1d8] sm:$0xff]
    %v448 = vld [vmem:[#allocation12 + $0x1e0] sm:$0xff]
    %v449 = vld [vmem:[#allocation12 + $0x1e8] sm:$0xff]
    %v450 = vld [vmem:[#allocation12 + $0x1f0] sm:$0xff]
    %v451 = vld [vmem:[#allocation12 + $0x1f8] sm:$0xff]
    %v452 = vld [vmem:[#allocation12 + $0x200] sm:$0xff]
    %v453 = vld [vmem:[#allocation12 + $0x208] sm:$0xff]
    %v454 = vld [vmem:[#allocation12 + $0x210] sm:$0xff]
    %v455 = vld [vmem:[#allocation12 + $0x218] sm:$0xff]
    %v456 = vld [vmem:[#allocation12 + $0x220] sm:$0xff]
    %v457 = vld [vmem:[#allocation12 + $0x228] sm:$0xff]
    %v458 = vld [vmem:[#allocation12 + $0x230] sm:$0xff]
    %v459 = vld [vmem:[#allocation12 + $0x238] sm:$0xff]
    %v460 = vld [vmem:[#allocation12 + $0x240] sm:$0xff]
    %v461 = vld [vmem:[#allocation12 + $0x248] sm:$0xff]
    %v462 = vld [vmem:[#allocation12 + $0x250] sm:$0xff]
    %v463 = vld [vmem:[#allocation12 + $0x258] sm:$0xff]
    %v464 = vld [vmem:[#allocation12 + $0x260] sm:$0xff]
    %v465 = vld [vmem:[#allocation12 + $0x268] sm:$0xff]
    %v466 = vld [vmem:[#allocation12 + $0x270] sm:$0xff]
    %v467 = vld [vmem:[#allocation12 + $0x278] sm:$0xff]
    %v468 = vld [vmem:[#allocation12 + $0x280] sm:$0xff]
    %v469 = vld [vmem:[#allocation12 + $0x288] sm:$0xff]
    %v470 = vld [vmem:[#allocation12 + $0x290] sm:$0xff]
    %v471 = vld [vmem:[#allocation12 + $0x298] sm:$0xff]
    %v472 = vld [vmem:[#allocation12 + $0x2a0] sm:$0xff]
    %v473 = vld [vmem:[#allocation12 + $0x2a8] sm:$0xff]
    %v474 = vld [vmem:[#allocation12 + $0x2b0] sm:$0xff]
    %v475 = vld [vmem:[#allocation12 + $0x2b8] sm:$0xff]
    %v476 = vld [vmem:[#allocation12 + $0x2c0] sm:$0xff]
    %v477 = vld [vmem:[#allocation12 + $0x2c8] sm:$0xff]
    %v478 = vld [vmem:[#allocation12 + $0x2d0] sm:$0xff]
    %v479 = vld [vmem:[#allocation12 + $0x2d8] sm:$0xff]
    %v480 = vld [vmem:[#allocation12 + $0x2e0] sm:$0xff]
    %v481 = vld [vmem:[#allocation12 + $0x2e8] sm:$0xff]
    %v482 = vld [vmem:[#allocation12 + $0x2f0] sm:$0xff]
    %v483 = vld [vmem:[#allocation12 + $0x2f8] sm:$0xff]
    %v484 = vld [vmem:[#allocation12 + $0x300] sm:$0xff]
    %v485 = vld [vmem:[#allocation12 + $0x308] sm:$0xff]
    %v486 = vld [vmem:[#allocation12 + $0x310] sm:$0xff]
    %v487 = vld [vmem:[#allocation12 + $0x318] sm:$0xff]
    %v488 = vld [vmem:[#allocation12 + $0x320] sm:$0xff]
    %v489 = vld [vmem:[#allocation12 + $0x328] sm:$0xff]
    %v490 = vld [vmem:[#allocation12 + $0x330] sm:$0xff]
    %v491 = vld [vmem:[#allocation12 + $0x338] sm:$0xff]
    %v492 = vld [vmem:[#allocation12 + $0x340] sm:$0xff]
    %v493 = vld [vmem:[#allocation12 + $0x348] sm:$0xff]
    %v494 = vld [vmem:[#allocation12 + $0x350] sm:$0xff]
    %v495 = vld [vmem:[#allocation12 + $0x358] sm:$0xff]
    %v496 = vld [vmem:[#allocation12 + $0x360] sm:$0xff]
    %v497 = vld [vmem:[#allocation12 + $0x368] sm:$0xff]
    %v498 = vld [vmem:[#allocation12 + $0x370] sm:$0xff]
    %v499 = vld [vmem:[#allocation12 + $0x378] sm:$0xff]
    %v500 = vld [vmem:[#allocation12 + $0x380] sm:$0xff]
    %v501 = vld [vmem:[#allocation12 + $0x388] sm:$0xff]
    %v502 = vld [vmem:[#allocation12 + $0x390] sm:$0xff]
    %v503 = vld [vmem:[#allocation12 + $0x398] sm:$0xff]
    %v504 = vld [vmem:[#allocation12 + $0x3a0] sm:$0xff]
    %v505 = vld [vmem:[#allocation12 + $0x3a8] sm:$0xff]
    %v506 = vld [vmem:[#allocation12 + $0x3b0] sm:$0xff]
    %v507 = vld [vmem:[#allocation12 + $0x3b8] sm:$0xff]
    %v508 = vld [vmem:[#allocation12 + $0x3c0] sm:$0xff]
    %v509 = vld [vmem:[#allocation12 + $0x3c8] sm:$0xff]
    %v510 = vld [vmem:[#allocation12 + $0x3d0] sm:$0xff]
    %v511 = vld [vmem:[#allocation12 + $0x3d8] sm:$0xff]
    %v512 = vld [vmem:[#allocation12 + $0x3e0] sm:$0xff]
    %v513 = vld [vmem:[#allocation12 + $0x3e8] sm:$0xff]
    %v514 = vld [vmem:[#allocation12 + $0x3f0] sm:$0xff]
    %v515 = vld [vmem:[#allocation12 + $0x3f8] sm:$0xff]
    %v516 = vld [vmem:[#allocation13] sm:$0xf]
    %v518 = vperm.slane %v516, 0
    %v519 = vperm.slane %v516, 1
    %v520 = vperm.slane %v516, 2
    %v521 = vperm.slane %v516, 3
    %526 = vmatpush.msra.mxu0 %v448
    %527 = vmatpush.msra.mxu0 %v444
    %528 = vmatpush.msra.mxu0 %v440
    %529 = vmatpush.msra.mxu0 %v436
    %530 = vmatpush.msra.mxu0 %v432
    %531 = vmatpush.msra.mxu0 %v428
    %532 = vmatpush.msra.mxu0 %v424
    %533 = vmatpush.msra.mxu0 %v420
    %534 = vmatpush.msra.mxu0 %v416
    %535 = vmatpush.msra.mxu0 %v412
    %536 = vmatpush.msra.mxu0 %v408
    %537 = vmatpush.msra.mxu0 %v404
    %538 = vmatpush.msra.mxu0 %v400
    %539 = vmatpush.msra.mxu0 %v396
    %540 = vmatpush.msra.mxu0 %v392
    %541 = vmatpush.msra.mxu0 %v388
    %542 = vmatmul.f32.gmra.mxu0 %v386
    %v543 = vpop.f32.mrf.mxu0
    %v544 = vadd.f32 %v518, %v543
    %545 = vdwg.mxu0
    %546 = vmatpush.msra.mxu0 %v512
    %547 = vmatpush.msra.mxu0 %v508
    %548 = vmatpush.msra.mxu0 %v504
    %549 = vmatpush.msra.mxu0 %v500
    %550 = vmatpush.msra.mxu0 %v496
    %551 = vmatpush.msra.mxu0 %v492
    %552 = vmatpush.msra.mxu0 %v488
    %553 = vmatpush.msra.mxu0 %v484
    %554 = vmatpush.msra.mxu0 %v480
    %555 = vmatpush.msra.mxu0 %v476
    %556 = vmatpush.msra.mxu0 %v472
    %557 = vmatpush.msra.mxu0 %v468
    %558 = vmatpush.msra.mxu0 %v464
    %559 = vmatpush.msra.mxu0 %v460
    %560 = vmatpush.msra.mxu0 %v456
    %561 = vmatpush.msra.mxu0 %v452
    %562 = vmatmul.f32.gmra.mxu0 %v387
    %v563 = vpop.f32.mrf.mxu0
    %v564 = vadd.f32 %v544, %v563
    %565 = vdwg.mxu0
    %566 = vmatpush.msra.mxu0 %v449
    %567 = vmatpush.msra.mxu0 %v445
    %568 = vmatpush.msra.mxu0 %v441
    %569 = vmatpush.msra.mxu0 %v437
    %570 = vmatpush.msra.mxu0 %v433
    %571 = vmatpush.msra.mxu0 %v429
    %572 = vmatpush.msra.mxu0 %v425
    %573 = vmatpush.msra.mxu0 %v421
    %574 = vmatpush.msra.mxu0 %v417
    %575 = vmatpush.msra.mxu0 %v413
    %576 = vmatpush.msra.mxu0 %v409
    %577 = vmatpush.msra.mxu0 %v405
    %578 = vmatpush.msra.mxu0 %v401
    %579 = vmatpush.msra.mxu0 %v397
    %580 = vmatpush.msra.mxu0 %v393
    %581 = vmatpush.msra.mxu0 %v389
    %582 = vmatmul.f32.gmra.mxu0 %v386
    %v583 = vpop.f32.mrf.mxu0
    %v584 = vadd.f32 %v519, %v583
    %585 = vdwg.mxu0
    %586 = vmatpush.msra.mxu0 %v513
    %587 = vmatpush.msra.mxu0 %v509
    %588 = vmatpush.msra.mxu0 %v505
    %589 = vmatpush.msra.mxu0 %v501
    %590 = vmatpush.msra.mxu0 %v497
    %591 = vmatpush.msra.mxu0 %v493
    %592 = vmatpush.msra.mxu0 %v489
    %593 = vmatpush.msra.mxu0 %v485
    %594 = vmatpush.msra.mxu0 %v481
    %595 = vmatpush.msra.mxu0 %v477
    %596 = vmatpush.msra.mxu0 %v473
    %597 = vmatpush.msra.mxu0 %v469
    %598 = vmatpush.msra.mxu0 %v465
    %599 = vmatpush.msra.mxu0 %v461
    %600 = vmatpush.msra.mxu0 %v457
    %601 = vmatpush.msra.mxu0 %v453
    %602 = vmatmul.f32.gmra.mxu0 %v387
    %v603 = vpop.f32.mrf.mxu0
    %v604 = vadd.f32 %v584, %v603
    %605 = vdwg.mxu0
    %606 = vmatpush.msra.mxu0 %v450
    %607 = vmatpush.msra.mxu0 %v446
    %608 = vmatpush.msra.mxu0 %v442
    %609 = vmatpush.msra.mxu0 %v438
    %610 = vmatpush.msra.mxu0 %v434
    %611 = vmatpush.msra.mxu0 %v430
    %612 = vmatpush.msra.mxu0 %v426
    %613 = vmatpush.msra.mxu0 %v422
    %614 = vmatpush.msra.mxu0 %v418
    %615 = vmatpush.msra.mxu0 %v414
    %616 = vmatpush.msra.mxu0 %v410
    %617 = vmatpush.msra.mxu0 %v406
    %618 = vmatpush.msra.mxu0 %v402
    %619 = vmatpush.msra.mxu0 %v398
    %620 = vmatpush.msra.mxu0 %v394
    %621 = vmatpush.msra.mxu0 %v390
    %622 = vmatmul.f32.gmra.mxu0 %v386
    %v623 = vpop.f32.mrf.mxu0
    %v624 = vadd.f32 %v520, %v623
    %625 = vdwg.mxu0
    %626 = vmatpush.msra.mxu0 %v514
    %627 = vmatpush.msra.mxu0 %v510
    %628 = vmatpush.msra.mxu0 %v506
    %629 = vmatpush.msra.mxu0 %v502
    %630 = vmatpush.msra.mxu0 %v498
    %631 = vmatpush.msra.mxu0 %v494
    %632 = vmatpush.msra.mxu0 %v490
    %633 = vmatpush.msra.mxu0 %v486
    %634 = vmatpush.msra.mxu0 %v482
    %635 = vmatpush.msra.mxu0 %v478
    %636 = vmatpush.msra.mxu0 %v474
    %637 = vmatpush.msra.mxu0 %v470
    %638 = vmatpush.msra.mxu0 %v466
    %639 = vmatpush.msra.mxu0 %v462
    %640 = vmatpush.msra.mxu0 %v458
    %641 = vmatpush.msra.mxu0 %v454
    %642 = vmatmul.f32.gmra.mxu0 %v387
    %v643 = vpop.f32.mrf.mxu0
    %v644 = vadd.f32 %v624, %v643
    %645 = vdwg.mxu0
    %646 = vmatpush.msra.mxu0 %v451
    %647 = vmatpush.msra.mxu0 %v447
    %648 = vmatpush.msra.mxu0 %v443
    %649 = vmatpush.msra.mxu0 %v439
    %650 = vmatpush.msra.mxu0 %v435
    %651 = vmatpush.msra.mxu0 %v431
    %652 = vmatpush.msra.mxu0 %v427
    %653 = vmatpush.msra.mxu0 %v423
    %654 = vmatpush.msra.mxu0 %v419
    %655 = vmatpush.msra.mxu0 %v415
    %656 = vmatpush.msra.mxu0 %v411
    %657 = vmatpush.msra.mxu0 %v407
    %658 = vmatpush.msra.mxu0 %v403
    %659 = vmatpush.msra.mxu0 %v399
    %660 = vmatpush.msra.mxu0 %v395
    %661 = vmatpush.msra.mxu0 %v391
    %662 = vmatmul.f32.gmra.mxu0 %v386
    %v663 = vpop.f32.mrf.mxu0
    %v664 = vadd.f32 %v521, %v663
    %665 = vdwg.mxu0
    %666 = vmatpush.msra.mxu0 %v515
    %667 = vmatpush.msra.mxu0 %v511
    %668 = vmatpush.msra.mxu0 %v507
    %669 = vmatpush.msra.mxu0 %v503
    %670 = vmatpush.msra.mxu0 %v499
    %671 = vmatpush.msra.mxu0 %v495
    %672 = vmatpush.msra.mxu0 %v491
    %673 = vmatpush.msra.mxu0 %v487
    %674 = vmatpush.msra.mxu0 %v483
    %675 = vmatpush.msra.mxu0 %v479
    %676 = vmatpush.msra.mxu0 %v475
    %677 = vmatpush.msra.mxu0 %v471
    %678 = vmatpush.msra.mxu0 %v467
    %679 = vmatpush.msra.mxu0 %v463
    %680 = vmatpush.msra.mxu0 %v459
    %681 = vmatpush.msra.mxu0 %v455
    %682 = vmatmul.f32.gmra.mxu0 %v387
    %v683 = vpop.f32.mrf.mxu0
    %v684 = vadd.f32 %v664, %v683
    %685 = vdwg.mxu0
    %v686 = vld [vmem:[#allocation15] sm:$0xf]
    %v687 = vld [vmem:[#allocation16] sm:$0xf]
    %v688 = vrot.slane %v564, 4
    %v689 = vadd.f32 %v564, %v688
    %v690 = vrot.slane %v689, 2
    %v691 = vadd.f32 %v689, %v690
    %v692 = vrot.slane %v691, 1
    %v693 = vadd.f32 %v691, %v692
    %v694 = vrot.slane %v604, 4
    %v695 = vadd.f32 %v604, %v694
    %v696 = vrot.slane %v695, 2
    %v697 = vadd.f32 %v695, %v696
    %v698 = vrot.slane %v697, 1
    %v699 = vadd.f32 %v697, %v698
    %v700 = vrot.slane %v644, 4
    %v701 = vadd.f32 %v644, %v700
    %v702 = vrot.slane %v701, 2
    %v703 = vadd.f32 %v701, %v702
    %v704 = vrot.slane %v703, 1
    %v705 = vadd.f32 %v703, %v704
    %v706 = vrot.slane %v684, 4
    %v707 = vadd.f32 %v684, %v706
    %v708 = vrot.slane %v707, 2
    %v709 = vadd.f32 %v707, %v708
    %v710 = vrot.slane %v709, 1
    %v711 = vadd.f32 %v709, %v710
    %v712 = vmul.f32 %v693, %v323
    %v713 = vmul.f32 %v699, %v323
    %v714 = vmul.f32 %v705, %v323
    %v715 = vmul.f32 %v711, %v323
    %v716 = vsub.f32 %v564, %v712
    %v717 = vsub.f32 %v604, %v713
    %v718 = vsub.f32 %v644, %v714
    %v719 = vsub.f32 %v684, %v715
    %v720 = vmul.f32 %v716, %v716
    %v721 = vmul.f32 %v717, %v717
    %v722 = vmul.f32 %v718, %v718
    %v723 = vmul.f32 %v719, %v719
    %v724 = vrot.slane %v720, 4
    %v725 = vadd.f32 %v720, %v724
    %v726 = vrot.slane %v725, 2
    %v727 = vadd.f32 %v725, %v726
    %v728 = vrot.slane %v727, 1
    %v729 = vadd.f32 %v727, %v728
    %v730 = vrot.slane %v721, 4
    %v731 = vadd.f32 %v721, %v730
    %v732 = vrot.slane %v731, 2
    %v733 = vadd.f32 %v731, %v732
    %v734 = vrot.slane %v733, 1
    %v735 = vadd.f32 %v733, %v734
    %v736 = vrot.slane %v722, 4
    %v737 = vadd.f32 %v722, %v736
    %v738 = vrot.slane %v737, 2
    %v739 = vadd.f32 %v737, %v738
    %v740 = vrot.slane %v739, 1
    %v741 = vadd.f32 %v739, %v740
    %v742 = vrot.slane %v723, 4
    %v743 = vadd.f32 %v723, %v742
    %v744 = vrot.slane %v743, 2
    %v745 = vadd.f32 %v743, %v744
    %v746 = vrot.slane %v745, 1
    %v747 = vadd.f32 %v745, %v746
    %v748 = vmul.f32 %v729, %v323
    %v749 = vmul.f32 %v735, %v323
    %v750 = vmul.f32 %v741, %v323
    %v751 = vmul.f32 %v747, %v323
    %v752 = vadd.f32 %v748, 1e-05
    %v753 = vadd.f32 %v749, 1e-05
    %v754 = vadd.f32 %v750, 1e-05
    %v755 = vadd.f32 %v751, 1e-05
    %v756 = vrsqrt.pop %v752
    %v757 = vmul.f32 %v756, %v752
    %v758 = vmul.f32 %v757, %v756
    %v759 = vmul.f32 0.5, %v758
    %v760 = vsub.f32 1.5, %v759
    %v761 = vmul.f32 %v756, %v760
    %vm762 = vweird.f32 %v752
    %vm763 = vweird.f32 %v756
    %vm764 = vmor %vm762, %vm763
    %v765 = vsel %vm764, %v756, %v761
    %v766 = vrsqrt.pop %v753
    %v767 = vmul.f32 %v766, %v753
    %v768 = vmul.f32 %v767, %v766
    %v769 = vmul.f32 0.5, %v768
    %v770 = vsub.f32 1.5, %v769
    %v771 = vmul.f32 %v766, %v770
    %vm772 = vweird.f32 %v753
    %vm773 = vweird.f32 %v766
    %vm774 = vmor %vm772, %vm773
    %v775 = vsel %vm774, %v766, %v771
    %v776 = vrsqrt.pop %v754
    %v777 = vmul.f32 %v776, %v754
    %v778 = vmul.f32 %v777, %v776
    %v779 = vmul.f32 0.5, %v778
    %v780 = vsub.f32 1.5, %v779
    %v781 = vmul.f32 %v776, %v780
    %vm782 = vweird.f32 %v754
    %vm783 = vweird.f32 %v776
    %vm784 = vmor %vm782, %vm783
    %v785 = vsel %vm784, %v776, %v781
    %v786 = vrsqrt.pop %v755
    %v787 = vmul.f32 %v786, %v755
    %v788 = vmul.f32 %v787, %v786
    %v789 = vmul.f32 0.5, %v788
    %v790 = vsub.f32 1.5, %v789
    %v791 = vmul.f32 %v786, %v790
    %vm792 = vweird.f32 %v755
    %vm793 = vweird.f32 %v786
    %vm794 = vmor %vm792, %vm793
    %v795 = vsel %vm794, %v786, %v791
    %v796 = vmul.f32 %v716, %v765
    %v797 = vmul.f32 %v717, %v775
    %v798 = vmul.f32 %v718, %v785
    %v799 = vmul.f32 %v719, %v795
    %v801 = vperm.slane %v686, 0
    %v802 = vperm.slane %v686, 1
    %v803 = vperm.slane %v686, 2
    %v804 = vperm.slane %v686, 3
    %v809 = vmul.f32 %v796, %v801
    %v810 = vmul.f32 %v797, %v802
    %v811 = vmul.f32 %v798, %v803
    %v812 = vmul.f32 %v799, %v804
    %v814 = vperm.slane %v687, 0
    %v815 = vperm.slane %v687, 1
    %v816 = vperm.slane %v687, 2
    %v817 = vperm.slane %v687, 3
    %v822 = vadd.f32 %v809, %v814
    %v823 = vadd.f32 %v810, %v815
    %v824 = vadd.f32 %v811, %v816
    %v825 = vadd.f32 %v812, %v817
    %vm826 = vcmp.gt.f32.partialorder %v822, 0.0
    %vm827 = vcmp.gt.f32.partialorder %v823, 0.0
    %vm828 = vcmp.gt.f32.partialorder %v824, 0.0
    %vm829 = vcmp.gt.f32.partialorder %v825, 0.0
    %v830 = vmul.f32 %v822, 0.2
    %v831 = vmul.f32 %v823, 0.2
    %v832 = vmul.f32 %v824, 0.2
    %v833 = vmul.f32 %v825, 0.2
    %v834 = vsel %vm826, %v822, %v830
    %v835 = vsel %vm827, %v823, %v831
    %v836 = vsel %vm828, %v824, %v832
    %v837 = vsel %vm829, %v825, %v833
    %v838 = vpack.c.bf16 %v835, %v834
    %v839 = vpack.c.bf16 %v837, %v836
    %840 = vst [vmem:[%s11] sm:$0xff] %v838
    %841 = vst [vmem:[%s11 + $0x8] sm:$0xff] %v839
    // Predicated region
    $region86: #{generator_forward.2} parent=1 // pred_check
      _
    $region87: #{generator_forward.2} parent=1 // pred_check_branch
      %843 = sbr.rel (0) target = $region89
    $region88: #{generator_forward.2} parent=1 // pred_region
      _
    $region89: #{generator_forward.2} parent=1 // pred_fallthru
      _
    // Predicated region
    $region90: #{generator_forward.2} parent=1 // pred_check
      _
    $region91: #{generator_forward.2} parent=1 // pred_check_branch
      %845 = sbr.rel (0) target = $region93
    $region92: #{generator_forward.2} parent=1 // pred_region
      _
    $region93: #{generator_forward.2} parent=1 // pred_fallthru
      _
    %846 = vsyncpa [#allocation3], 1
    %847 = vsyncpa [#allocation5], 1
    %848 = vsyncpa [#allocation8], 1
    %849 = vsyncpa [#allocation11], 1
    %850 = vsyncpa [#allocation14], 1
    %851 = vsyncpa [#allocation17], 1

// kernel: generator_forward.3
$region0: #{generator_forward.3}
  #allocation0 [shape = 'u32[]', space=smem, size = 0x4, offset = 0x4, fixed_abs, tag = 'smem constant byte address 0x4 - core index']
  #allocation1 [shape = 'u32[72,128]{1,0:T(1,128)}', space=vmem, size = 0x9000, scoped, tag = 'internal scratch']
  %s0 = inlined_call_operand.vmem [shape: bf16[8,512], index: 0, kind: input, shape index: {}]
  %s1 = inlined_call_operand.hbm [shape: bf16[6,512,2048], index: 1, kind: input, shape index: {}]
  %s2 = inlined_call_operand.hbm [shape: f32[1,12288], index: 2, kind: input, shape index: {}]
  %s3 = inlined_call_operand.vmem [shape: f32[8,12288], index: 3, kind: output, shape index: {}]
  %s4 = sld [smem:[#allocation0]]
  $region53: #{generator_forward.3} parent=0
    _
  %s6 = ssub.s32 1, %s4
  %s7 = scalar_select 0, %s6, %s4
  $region1: #{generator_forward.3} parent=0
    #allocation2 [shape = 'u8[4194304]{0}', space=vmem, size = 0x400000, scoped, tag = 'input window, operand 1']
    #allocation3 [shape = 's32[2]{0}', space=sflag, size = 0x8, scoped, tag = 'scoped memory for generator_forward.3']
    #allocation4 [shape = 'u8[16384]{0}', space=vmem, size = 0x4000, scoped, tag = 'input window, operand 2']
    #allocation5 [shape = 's32[2]{0}', space=sflag, size = 0x8, scoped, tag = 'scoped memory for generator_forward.3']
    %8 = vsyncpa [#allocation3], 0
    %s9 = scalar_lea.sflag [#allocation3], 1
    %10 = vsyncpa %s9, 0
    %11 = vsyncpa [#allocation5], 0
    %s12 = scalar_lea.sflag [#allocation5], 1
    %13 = vsyncpa %s12, 0
    loop: start=0, step=1, limit=8
    $region2: #{generator_forward.3} parent=1 // loop_pre_header
      _
    $region3: #{generator_forward.3} parent=1 // loop_header
      %s15 = sphi 0, %s19
      %p16 = scmp.ge.s32.totalorder %s15, 8
      %s23 = sphi 0, %s23
      %s25 = sphi 0, %s23
      %s26 = sphi 0, %s25
      %s40 = sphi 0, %s26
      %s46 = sphi 0, %s48
      %s49 = sphi 0, %s46
      %s50 = sphi 0, %s49
      %s66 = sphi 0, %s50
      %s72 = sphi 0, %s74
      %s75 = sphi 0, %s72
      %s76 = sphi 0, %s75
      %s92 = sphi 0, %s76
      %s98 = sphi 0, %s100
      %s101 = sphi 0, %s98
      %s102 = sphi 0, %s101
      %s118 = sphi 0, %s102
    $region4: #{generator_forward.3} parent=1 // loop_header_branch
      %18 = sbr.rel (%p16) target = $region8
    $region5: #{generator_forward.3} parent=1 // loop_body
      %s20 = ssub.s32 %s15, 1
      %s21 = ssub.s32 %s15, 2
      %s22 = sadd.s32 %s15, 1
      %s24 = sadd.s32 %s23, 1
      %p27 = scmp.eq.s32.totalorder %s15, 5
      %p28 = scmp.ne.s32.totalorder %s23, %s25
      %p29 = scmp.eq.s32.totalorder %s15, 0
      %p30 = por %p28, %p29
      %p31 = scmp.ne.s32.totalorder %s23, %s25
      %p32 = scmp.eq.s32.totalorder %s20, 5
      %p33 = por %p31, %p32
      %p34 = scmp.ne.s32.totalorder %s25, %s26
      %p35 = scmp.eq.s32.totalorder %s20, 0
      %p36 = por %p34, %p35
      %p37 = scmp.ne.s32.totalorder %s25, %s26
      %p38 = scmp.eq.s32.totalorder %s21, 5
      %p39 = por %p37, %p38
      %p41 = scmp.ne.s32.totalorder %s26, %s40
      %p42 = scmp.eq.s32.totalorder %s21, 0
      %p43 = por %p41, %p42
      %s44 = ssub.s32 %s15, %s22
      %p45 = scmp.eq.s32.totalorder %s44, 0
      %s47 = sadd.s32 %s46, 1
      %s48 = scalar_select %p45, %s46, %s47
      %p51 = pneg %p45
      %p52 = scmp.eq.s32.totalorder %s15, 5
      %p53 = por %p51, %p52
      %p54 = scmp.ne.s32.totalorder %s46, %s49
      %p55 = scmp.eq.s32.totalorder %s15, 0
      %p56 = por %p54, %p55
      %p57 = scmp.ne.s32.totalorder %s46, %s49
      %p58 = scmp.eq.s32.totalorder %s20, 5
      %p59 = por %p57, %p58
      %p60 = scmp.ne.s32.totalorder %s49, %s50
      %p61 = scmp.eq.s32.totalorder %s20, 0
      %p62 = por %p60, %p61
      %p63 = scmp.ne.s32.totalorder %s49, %s50
      %p64 = scmp.eq.s32.totalorder %s21, 5
      %p65 = por %p63, %p64
      %p67 = scmp.ne.s32.totalorder %s50, %s66
      %p68 = scmp.eq.s32.totalorder %s21, 0
      %p69 = por %p67, %p68
      %s70 = ssub.s32 %s15, %s22
      %p71 = scmp.eq.s32.totalorder %s70, 0
      %s73 = sadd.s32 %s72, 1
      %s74 = scalar_select %p71, %s72, %s73
      %p77 = pneg %p71
      %p78 = scmp.eq.s32.totalorder %s15, 5
      %p79 = por %p77, %p78
      %p80 = scmp.ne.s32.totalorder %s72, %s75
      %p81 = scmp.eq.s32.totalorder %s15, 0
      %p82 = por %p80, %p81
      %p83 = scmp.ne.s32.totalorder %s72, %s75
      %p84 = scmp.eq.s32.totalorder %s20, 5
      %p85 = por %p83, %p84
      %p86 = scmp.ne.s32.totalorder %s75, %s76
      %p87 = scmp.eq.s32.totalorder %s20, 0
      %p88 = por %p86, %p87
      %p89 = scmp.ne.s32.totalorder %s75, %s76
      %p90 = scmp.eq.s32.totalorder %s21, 5
      %p91 = por %p89, %p90
      %p93 = scmp.ne.s32.totalorder %s76, %s92
      %p94 = scmp.eq.s32.totalorder %s21, 0
      %p95 = por %p93, %p94
      %s96 = ssub.s32 %s15, %s22
      %p97 = scmp.eq.s32.totalorder %s96, 0
      %s99 = sadd.s32 %s98, 1
      %s100 = scalar_select %p97, %s98, %s99
      %p103 = pneg %p97
      %p104 = scmp.eq.s32.totalorder %s15, 5
      %p105 = por %p103, %p104
      %p106 = scmp.ne.s32.totalorder %s98, %s101
      %p107 = scmp.eq.s32.totalorder %s15, 0
      %p108 = por %p106, %p107
      %p109 = scmp.ne.s32.totalorder %s98, %s101
      %p110 = scmp.eq.s32.totalorder %s20, 5
      %p111 = por %p109, %p110
      %p112 = scmp.ne.s32.totalorder %s101, %s102
      %p113 = scmp.eq.s32.totalorder %s20, 0
      %p114 = por %p112, %p113
      %p115 = scmp.ne.s32.totalorder %s101, %s102
      %p116 = scmp.eq.s32.totalorder %s21, 5
      %p117 = por %p115, %p116
      %p119 = scmp.ne.s32.totalorder %s102, %s118
      %p120 = scmp.eq.s32.totalorder %s21, 0
      %p121 = por %p119, %p120
      %p122 = scmp.le.s32.totalorder 1, %s15
      %p123 = scmp.lt.s32.totalorder %s15, 7
      %p124 = pnand %p122, %p123
      %p125 = pneg %p124
      // Predicated region
      $region9: #{generator_forward.3} parent=5 // pred_check
        _
      $region10: #{generator_forward.3} parent=5 // pred_check_branch
        %127 = sbr.rel (%p124) target = $region12
      $region11: #{generator_forward.3} parent=5 // pred_region
        %s128 = ssub.s32 %s15, 1
        // Predicated region
        $region13: #{generator_forward.3} parent=11 // pred_check
          %p129 = pneg %p36
        $region14: #{generator_forward.3} parent=11 // pred_check_branch
          %131 = sbr.rel (%p129) target = $region16
        $region15: #{generator_forward.3} parent=11 // pred_region
          _
        $region16: #{generator_forward.3} parent=11 // pred_fallthru
          _
      $region12: #{generator_forward.3} parent=5 // pred_fallthru
        _
      %p132 = scmp.lt.s32.totalorder %s15, 6
      // Predicated region
      $region17: #{generator_forward.3} parent=5 // pred_check
        %p133 = pneg %p132
      $region18: #{generator_forward.3} parent=5 // pred_check_branch
        %135 = sbr.rel (%p133) target = $region20
      $region19: #{generator_forward.3} parent=5 // pred_region
        // Predicated region
        $region21: #{generator_forward.3} parent=19 // pred_check
          %p136 = pneg %p56
        $region22: #{generator_forward.3} parent=19 // pred_check_branch
          %138 = sbr.rel (%p136) target = $region24
        $region23: #{generator_forward.3} parent=19 // pred_region
          %s139 = sand.u32 %s46, 1
          %s140 = scalar_lea.sflag [#allocation3], %s139
          %s141 = sand.u32 %s46, 1
          %s142 = smul.addr %s141, 4096
          %s143 = scalar_lea.vmem [#allocation2], %s142
          %145 = vsyncadd %s140, 0
          %s146 = smul.addr %s15, 1024
          %s147 = smul.addr %s146, 4
          %s148 = scalar_lea.hbm %s1, %s147
          %s149 = sshll.u32 %s148, 4
          %s150 = int_to_ptr.hbm [resolvable:$true] %s149
          %s151 = sshll.u32 %s143, 4
          %s152 = int_to_ptr.vmem [resolvable:$true] %s151
          %157 = dma.hbm_to_vmem [thread:$0]  %s150, 65536, %s152, %s140, 1024, 1024, 64
        $region24: #{generator_forward.3} parent=19 // pred_fallthru
          _
        // Predicated region
        $region25: #{generator_forward.3} parent=19 // pred_check
          %p158 = pneg %p82
        $region26: #{generator_forward.3} parent=19 // pred_check_branch
          %160 = sbr.rel (%p158) target = $region28
        $region27: #{generator_forward.3} parent=19 // pred_region
          %s161 = sand.u32 %s72, 1
          %s162 = scalar_lea.sflag [#allocation5], %s161
          %s163 = sand.u32 %s72, 1
          %s164 = smul.addr %s163, 16
          %s165 = scalar_lea.vmem [#allocation4], %s164
          %s166 = smul.u32 16, %s15
          %168 = vsyncadd %s162, 0
          %s169 = scalar_lea.hbm %s2, %s166
          %s171 = sshll.u32 %s169, 4
          %s172 = int_to_ptr.hbm [resolvable:$true] %s171
          %s173 = sshll.u32 %s165, 4
          %s174 = int_to_ptr.vmem [resolvable:$true] %s173
          %176 = dma.hbm_to_vmem [thread:$0]  %s172, 256, %s174, %s162
        $region28: #{generator_forward.3} parent=19 // pred_fallthru
          _
      $region20: #{generator_forward.3} parent=5 // pred_fallthru
        _
      %p177 = scmp.le.s32.totalorder 1, %s15
      %p178 = scmp.lt.s32.totalorder %s15, 7
      %p179 = pnand %p177, %p178
      %p180 = pneg %p179
      // Predicated region
      $region29: #{generator_forward.3} parent=5 // pred_check
        _
      $region30: #{generator_forward.3} parent=5 // pred_check_branch
        %182 = sbr.rel (%p179) target = $region32
      $region31: #{generator_forward.3} parent=5 // pred_region
        %s183 = ssub.s32 %s15, 1
        %s184 = sand.u32 %s49, 1
        %s185 = scalar_lea.sflag [#allocation3], %s184
        %s186 = sand.u32 %s49, 1
        %s187 = smul.addr %s186, 4096
        %s188 = scalar_lea.vmem [#allocation2], %s187
        // Predicated region
        $region33: #{generator_forward.3} parent=31 // pred_check
          %p189 = pneg %p62
        $region34: #{generator_forward.3} parent=31 // pred_check_branch
          %191 = sbr.rel (%p189) target = $region36
        $region35: #{generator_forward.3} parent=31 // pred_region
          %193 = dma.done %s185, 65536
        $region36: #{generator_forward.3} parent=31 // pred_fallthru
          _
        %s194 = sand.u32 %s75, 1
        %s195 = scalar_lea.sflag [#allocation5], %s194
        %s196 = sand.u32 %s75, 1
        %s197 = smul.addr %s196, 16
        %s198 = scalar_lea.vmem [#allocation4], %s197
        // Predicated region
        $region37: #{generator_forward.3} parent=31 // pred_check
          %p199 = pneg %p88
        $region38: #{generator_forward.3} parent=31 // pred_check_branch
          %201 = sbr.rel (%p199) target = $region40
        $region39: #{generator_forward.3} parent=31 // pred_region
          %203 = dma.done %s195, 256
        $region40: #{generator_forward.3} parent=31 // pred_fallthru
          _
        %p204 = pneg %p36
        %p205 = pneg %p33
        %s206 = sand.u32 %s49, 1
        %s207 = scalar_lea.sflag [#allocation3], %s206
        %s208 = sand.u32 %s49, 1
        %s209 = smul.addr %s208, 4096
        %s210 = scalar_lea.vmem [#allocation2], %s209
        %p211 = pneg %p62
        %p212 = pneg %p59
        %s213 = sand.u32 %s75, 1
        %s214 = scalar_lea.sflag [#allocation5], %s213
        %s215 = sand.u32 %s75, 1
        %s216 = smul.addr %s215, 16
        %s217 = scalar_lea.vmem [#allocation4], %s216
        %p218 = pneg %p88
        %p219 = pneg %p85
        %p220 = pneg %p114
        %p221 = pneg %p111
        %s222 = smul.u32 16, %s20
        %p223 = scmp.lt.s32.totalorder %s222, 95
        %s224 = scalar_select %p223, %s222, 95
        %s225 = smul.addr %s224, 8
        %s226 = scalar_lea.vmem %s3, %s225
        %s227 = smul.u32 16, %s20
        %s228 = smul.u32 16, %s20
        %p229 = scmp.lt.s32.totalorder %s228, 95
        %s230 = scalar_select %p229, %s228, 95
        %s231 = smul.addr %s230, 8
        %s232 = scalar_lea.vmem %s3, %s231
        %s233 = smul.u32 16, %s20
        %v234 = vld [vmem:[%s0] sm:$0xff]
        %v235 = vld [vmem:[%s0 + $0x8] sm:$0xff]
        %v236 = vld [vmem:[%s188] sm:$0xff]
        %v237 = vld [vmem:[%s188 + $0x8] sm:$0xff]
        %v238 = vld [vmem:[%s188 + $0x10] sm:$0xff]
        %v239 = vld [vmem:[%s188 + $0x18] sm:$0xff]
        %v240 = vld [vmem:[%s188 + $0x20] sm:$0xff]
        %v241 = vld [vmem:[%s188 + $0x28] sm:$0xff]
        %v242 = vld [vmem:[%s188 + $0x30] sm:$0xff]
        %v243 = vld [vmem:[%s188 + $0x38] sm:$0xff]
        %v244 = vld [vmem:[%s188 + $0x40] sm:$0xff]
        %v245 = vld [vmem:[%s188 + $0x48] sm:$0xff]
        %v246 = vld [vmem:[%s188 + $0x50] sm:$0xff]
        %v247 = vld [vmem:[%s188 + $0x58] sm:$0xff]
        %v248 = vld [vmem:[%s188 + $0x60] sm:$0xff]
        %v249 = vld [vmem:[%s188 + $0x68] sm:$0xff]
        %v250 = vld [vmem:[%s188 + $0x70] sm:$0xff]
        %v251 = vld [vmem:[%s188 + $0x78] sm:$0xff]
        %v252 = vld [vmem:[%s188 + $0x80] sm:$0xff]
        %v253 = vld [vmem:[%s188 + $0x88] sm:$0xff]
        %v254 = vld [vmem:[%s188 + $0x90] sm:$0xff]
        %v255 = vld [vmem:[%s188 + $0x98] sm:$0xff]
        %v256 = vld [vmem:[%s188 + $0xa0] sm:$0xff]
        %v257 = vld [vmem:[%s188 + $0xa8] sm:$0xff]
        %v258 = vld [vmem:[%s188 + $0xb0] sm:$0xff]
        %v259 = vld [vmem:[%s188 + $0xb8] sm:$0xff]
        %v260 = vld [vmem:[%s188 + $0xc0] sm:$0xff]
        %v261 = vld [vmem:[%s188 + $0xc8] sm:$0xff]
        %v262 = vld [vmem:[%s188 + $0xd0] sm:$0xff]
        %v263 = vld [vmem:[%s188 + $0xd8] sm:$0xff]
        %v264 = vld [vmem:[%s188 + $0xe0] sm:$0xff]
        %v265 = vld [vmem:[%s188 + $0xe8] sm:$0xff]
        %v266 = vld [vmem:[%s188 + $0xf0] sm:$0xff]
        %v267 = vld [vmem:[%s188 + $0xf8] sm:$0xff]
        %v268 = vld [vmem:[%s188 + $0x100] sm:$0xff]
        %v269 = vld [vmem:[%s188 + $0x108] sm:$0xff]
        %v270 = vld [vmem:[%s188 + $0x110] sm:$0xff]
        %v271 = vld [vmem:[%s188 + $0x118] sm:$0xff]
        %v272 = vld [vmem:[%s188 + $0x120] sm:$0xff]
        %v273 = vld [vmem:[%s188 + $0x128] sm:$0xff]
        %v274 = vld [vmem:[%s188 + $0x130] sm:$0xff]
        %v275 = vld [vmem:[%s188 + $0x138] sm:$0xff]
        %v276 = vld [vmem:[%s188 + $0x140] sm:$0xff]
        %v277 = vld [vmem:[%s188 + $0x148] sm:$0xff]
        %v278 = vld [vmem:[%s188 + $0x150] sm:$0xff]
        %v279 = vld [vmem:[%s188 + $0x158] sm:$0xff]
        %v280 = vld [vmem:[%s188 + $0x160] sm:$0xff]
        %v281 = vld [vmem:[%s188 + $0x168] sm:$0xff]
        %v282 = vld [vmem:[%s188 + $0x170] sm:$0xff]
        %v283 = vld [vmem:[%s188 + $0x178] sm:$0xff]
        %v284 = vld [vmem:[%s188 + $0x180] sm:$0xff]
        %v285 = vld [vmem:[%s188 + $0x188] sm:$0xff]
        %v286 = vld [vmem:[%s188 + $0x190] sm:$0xff]
        %v287 = vld [vmem:[%s188 + $0x198] sm:$0xff]
        %v288 = vld [vmem:[%s188 + $0x1a0] sm:$0xff]
        %v289 = vld [vmem:[%s188 + $0x1a8] sm:$0xff]
        %v290 = vld [vmem:[%s188 + $0x1b0] sm:$0xff]
        %v291 = vld [vmem:[%s188 + $0x1b8] sm:$0xff]
        %v292 = vld [vmem:[%s188 + $0x1c0] sm:$0xff]
        %v293 = vld [vmem:[%s188 + $0x1c8] sm:$0xff]
        %v294 = vld [vmem:[%s188 + $0x1d0] sm:$0xff]
        %v295 = vld [vmem:[%s188 + $0x1d8] sm:$0xff]
        %v296 = vld [vmem:[%s188 + $0x1e0] sm:$0xff]
        %v297 = vld [vmem:[%s188 + $0x1e8] sm:$0xff]
        %v298 = vld [vmem:[%s188 + $0x1f0] sm:$0xff]
        %v299 = vld [vmem:[%s188 + $0x1f8] sm:$0xff]
        %v300 = vld [vmem:[%s188 + $0x200] sm:$0xff]
        %v301 = vld [vmem:[%s188 + $0x208] sm:$0xff]
        %v302 = vld [vmem:[%s188 + $0x210] sm:$0xff]
        %v303 = vld [vmem:[%s188 + $0x218] sm:$0xff]
        %v304 = vld [vmem:[%s188 + $0x220] sm:$0xff]
        %v305 = vld [vmem:[%s188 + $0x228] sm:$0xff]
        %v306 = vld [vmem:[%s188 + $0x230] sm:$0xff]
        %v307 = vld [vmem:[%s188 + $0x238] sm:$0xff]
        %v308 = vld [vmem:[%s188 + $0x240] sm:$0xff]
        %v309 = vld [vmem:[%s188 + $0x248] sm:$0xff]
        %v310 = vld [vmem:[%s188 + $0x250] sm:$0xff]
        %v311 = vld [vmem:[%s188 + $0x258] sm:$0xff]
        %v312 = vld [vmem:[%s188 + $0x260] sm:$0xff]
        %v313 = vld [vmem:[%s188 + $0x268] sm:$0xff]
        %v314 = vld [vmem:[%s188 + $0x270] sm:$0xff]
        %v315 = vld [vmem:[%s188 + $0x278] sm:$0xff]
        %v316 = vld [vmem:[%s188 + $0x280] sm:$0xff]
        %v317 = vld [vmem:[%s188 + $0x288] sm:$0xff]
        %v318 = vld [vmem:[%s188 + $0x290] sm:$0xff]
        %v319 = vld [vmem:[%s188 + $0x298] sm:$0xff]
        %v320 = vld [vmem:[%s188 + $0x2a0] sm:$0xff]
        %v321 = vld [vmem:[%s188 + $0x2a8] sm:$0xff]
        %v322 = vld [vmem:[%s188 + $0x2b0] sm:$0xff]
        %v323 = vld [vmem:[%s188 + $0x2b8] sm:$0xff]
        %v324 = vld [vmem:[%s188 + $0x2c0] sm:$0xff]
        %v325 = vld [vmem:[%s188 + $0x2c8] sm:$0xff]
        %v326 = vld [vmem:[%s188 + $0x2d0] sm:$0xff]
        %v327 = vld [vmem:[%s188 + $0x2d8] sm:$0xff]
        %v328 = vld [vmem:[%s188 + $0x2e0] sm:$0xff]
        %v329 = vld [vmem:[%s188 + $0x2e8] sm:$0xff]
        %v330 = vld [vmem:[%s188 + $0x2f0] sm:$0xff]
        %v331 = vld [vmem:[%s188 + $0x2f8] sm:$0xff]
        %v332 = vld [vmem:[%s188 + $0x300] sm:$0xff]
        %v333 = vld [vmem:[%s188 + $0x308] sm:$0xff]
        %v334 = vld [vmem:[%s188 + $0x310] sm:$0xff]
        %v335 = vld [vmem:[%s188 + $0x318] sm:$0xff]
        %v336 = vld [vmem:[%s188 + $0x320] sm:$0xff]
        %v337 = vld [vmem:[%s188 + $0x328] sm:$0xff]
        %v338 = vld [vmem:[%s188 + $0x330] sm:$0xff]
        %v339 = vld [vmem:[%s188 + $0x338] sm:$0xff]
        %v340 = vld [vmem:[%s188 + $0x340] sm:$0xff]
        %v341 = vld [vmem:[%s188 + $0x348] sm:$0xff]
        %v342 = vld [vmem:[%s188 + $0x350] sm:$0xff]
        %v343 = vld [vmem:[%s188 + $0x358] sm:$0xff]
        %v344 = vld [vmem:[%s188 + $0x360] sm:$0xff]
        %v345 = vld [vmem:[%s188 + $0x368] sm:$0xff]
        %v346 = vld [vmem:[%s188 + $0x370] sm:$0xff]
        %v347 = vld [vmem:[%s188 + $0x378] sm:$0xff]
        %v348 = vld [vmem:[%s188 + $0x380] sm:$0xff]
        %v349 = vld [vmem:[%s188 + $0x388] sm:$0xff]
        %v350 = vld [vmem:[%s188 + $0x390] sm:$0xff]
        %v351 = vld [vmem:[%s188 + $0x398] sm:$0xff]
        %v352 = vld [vmem:[%s188 + $0x3a0] sm:$0xff]
        %v353 = vld [vmem:[%s188 + $0x3a8] sm:$0xff]
        %v354 = vld [vmem:[%s188 + $0x3b0] sm:$0xff]
        %v355 = vld [vmem:[%s188 + $0x3b8] sm:$0xff]
        %v356 = vld [vmem:[%s188 + $0x3c0] sm:$0xff]
        %v357 = vld [vmem:[%s188 + $0x3c8] sm:$0xff]
        %v358 = vld [vmem:[%s188 + $0x3d0] sm:$0xff]
        %v359 = vld [vmem:[%s188 + $0x3d8] sm:$0xff]
        %v360 = vld [vmem:[%s188 + $0x3e0] sm:$0xff]
        %v361 = vld [vmem:[%s188 + $0x3e8] sm:$0xff]
        %v362 = vld [vmem:[%s188 + $0x3f0] sm:$0xff]
        %v363 = vld [vmem:[%s188 + $0x3f8] sm:$0xff]
        %v364 = vld [vmem:[%s188 + $0x400] sm:$0xff]
        %v365 = vld [vmem:[%s188 + $0x408] sm:$0xff]
        %v366 = vld [vmem:[%s188 + $0x410] sm:$0xff]
        %v367 = vld [vmem:[%s188 + $0x418] sm:$0xff]
        %v368 = vld [vmem:[%s188 + $0x420] sm:$0xff]
        %v369 = vld [vmem:[%s188 + $0x428] sm:$0xff]
        %v370 = vld [vmem:[%s188 + $0x430] sm:$0xff]
        %v371 = vld [vmem:[%s188 + $0x438] sm:$0xff]
        %v372 = vld [vmem:[%s188 + $0x440] sm:$0xff]
        %v373 = vld [vmem:[%s188 + $0x448] sm:$0xff]
        %v374 = vld [vmem:[%s188 + $0x450] sm:$0xff]
        %v375 = vld [vmem:[%s188 + $0x458] sm:$0xff]
        %v376 = vld [vmem:[%s188 + $0x460] sm:$0xff]
        %v377 = vld [vmem:[%s188 + $0x468] sm:$0xff]
        %v378 = vld [vmem:[%s188 + $0x470] sm:$0xff]
        %v379 = vld [vmem:[%s188 + $0x478] sm:$0xff]
        %v380 = vld [vmem:[%s188 + $0x480] sm:$0xff]
        %v381 = vld [vmem:[%s188 + $0x488] sm:$0xff]
        %v382 = vld [vmem:[%s188 + $0x490] sm:$0xff]
        %v383 = vld [vmem:[%s188 + $0x498] sm:$0xff]
        %v384 = vld [vmem:[%s188 + $0x4a0] sm:$0xff]
        %v385 = vld [vmem:[%s188 + $0x4a8] sm:$0xff]
        %v386 = vld [vmem:[%s188 + $0x4b0] sm:$0xff]
        %v387 = vld [vmem:[%s188 + $0x4b8] sm:$0xff]
        %v388 = vld [vmem:[%s188 + $0x4c0] sm:$0xff]
        %v389 = vld [vmem:[%s188 + $0x4c8] sm:$0xff]
        %v390 = vld [vmem:[%s188 + $0x4d0] sm:$0xff]
        %v391 = vld [vmem:[%s188 + $0x4d8] sm:$0xff]
        %v392 = vld [vmem:[%s188 + $0x4e0] sm:$0xff]
        %v393 = vld [vmem:[%s188 + $0x4e8] sm:$0xff]
        %v394 = vld [vmem:[%s188 + $0x4f0] sm:$0xff]
        %v395 = vld [vmem:[%s188 + $0x4f8] sm:$0xff]
        %v396 = vld [vmem:[%s188 + $0x500] sm:$0xff]
        %v397 = vld [vmem:[%s188 + $0x508] sm:$0xff]
        %v398 = vld [vmem:[%s188 + $0x510] sm:$0xff]
        %v399 = vld [vmem:[%s188 + $0x518] sm:$0xff]
        %v400 = vld [vmem:[%s188 + $0x520] sm:$0xff]
        %v401 = vld [vmem:[%s188 + $0x528] sm:$0xff]
        %v402 = vld [vmem:[%s188 + $0x530] sm:$0xff]
        %v403 = vld [vmem:[%s188 + $0x538] sm:$0xff]
        %v404 = vld [vmem:[%s188 + $0x540] sm:$0xff]
        %v405 = vld [vmem:[%s188 + $0x548] sm:$0xff]
        %v406 = vld [vmem:[%s188 + $0x550] sm:$0xff]
        %v407 = vld [vmem:[%s188 + $0x558] sm:$0xff]
        %v408 = vld [vmem:[%s188 + $0x560] sm:$0xff]
        %v409 = vld [vmem:[%s188 + $0x568] sm:$0xff]
        %v410 = vld [vmem:[%s188 + $0x570] sm:$0xff]
        %v411 = vld [vmem:[%s188 + $0x578] sm:$0xff]
        %v412 = vld [vmem:[%s188 + $0x580] sm:$0xff]
        %v413 = vld [vmem:[%s188 + $0x588] sm:$0xff]
        %v414 = vld [vmem:[%s188 + $0x590] sm:$0xff]
        %v415 = vld [vmem:[%s188 + $0x598] sm:$0xff]
        %v416 = vld [vmem:[%s188 + $0x5a0] sm:$0xff]
        %v417 = vld [vmem:[%s188 + $0x5a8] sm:$0xff]
        %v418 = vld [vmem:[%s188 + $0x5b0] sm:$0xff]
        %v419 = vld [vmem:[%s188 + $0x5b8] sm:$0xff]
        %v420 = vld [vmem:[%s188 + $0x5c0] sm:$0xff]
        %v421 = vld [vmem:[%s188 + $0x5c8] sm:$0xff]
        %v422 = vld [vmem:[%s188 + $0x5d0] sm:$0xff]
        %v423 = vld [vmem:[%s188 + $0x5d8] sm:$0xff]
        %v424 = vld [vmem:[%s188 + $0x5e0] sm:$0xff]
        %v425 = vld [vmem:[%s188 + $0x5e8] sm:$0xff]
        %v426 = vld [vmem:[%s188 + $0x5f0] sm:$0xff]
        %v427 = vld [vmem:[%s188 + $0x5f8] sm:$0xff]
        %v428 = vld [vmem:[%s188 + $0x600] sm:$0xff]
        %v429 = vld [vmem:[%s188 + $0x608] sm:$0xff]
        %v430 = vld [vmem:[%s188 + $0x610] sm:$0xff]
        %v431 = vld [vmem:[%s188 + $0x618] sm:$0xff]
        %v432 = vld [vmem:[%s188 + $0x620] sm:$0xff]
        %v433 = vld [vmem:[%s188 + $0x628] sm:$0xff]
        %v434 = vld [vmem:[%s188 + $0x630] sm:$0xff]
        %v435 = vld [vmem:[%s188 + $0x638] sm:$0xff]
        %v436 = vld [vmem:[%s188 + $0x640] sm:$0xff]
        %v437 = vld [vmem:[%s188 + $0x648] sm:$0xff]
        %v438 = vld [vmem:[%s188 + $0x650] sm:$0xff]
        %v439 = vld [vmem:[%s188 + $0x658] sm:$0xff]
        %v440 = vld [vmem:[%s188 + $0x660] sm:$0xff]
        %v441 = vld [vmem:[%s188 + $0x668] sm:$0xff]
        %v442 = vld [vmem:[%s188 + $0x670] sm:$0xff]
        %v443 = vld [vmem:[%s188 + $0x678] sm:$0xff]
        %v444 = vld [vmem:[%s188 + $0x680] sm:$0xff]
        %v445 = vld [vmem:[%s188 + $0x688] sm:$0xff]
        %v446 = vld [vmem:[%s188 + $0x690] sm:$0xff]
        %v447 = vld [vmem:[%s188 + $0x698] sm:$0xff]
        %v448 = vld [vmem:[%s188 + $0x6a0] sm:$0xff]
        %v449 = vld [vmem:[%s188 + $0x6a8] sm:$0xff]
        %v450 = vld [vmem:[%s188 + $0x6b0] sm:$0xff]
        %v451 = vld [vmem:[%s188 + $0x6b8] sm:$0xff]
        %v452 = vld [vmem:[%s188 + $0x6c0] sm:$0xff]
        %v453 = vld [vmem:[%s188 + $0x6c8] sm:$0xff]
        %v454 = vld [vmem:[%s188 + $0x6d0] sm:$0xff]
        %v455 = vld [vmem:[%s188 + $0x6d8] sm:$0xff]
        %v456 = vld [vmem:[%s188 + $0x6e0] sm:$0xff]
        %v457 = vld [vmem:[%s188 + $0x6e8] sm:$0xff]
        %v458 = vld [vmem:[%s188 + $0x6f0] sm:$0xff]
        %v459 = vld [vmem:[%s188 + $0x6f8] sm:$0xff]
        %v460 = vld [vmem:[%s188 + $0x700] sm:$0xff]
        %v461 = vld [vmem:[%s188 + $0x708] sm:$0xff]
        %v462 = vld [vmem:[%s188 + $0x710] sm:$0xff]
        %v463 = vld [vmem:[%s188 + $0x718] sm:$0xff]
        %v464 = vld [vmem:[%s188 + $0x720] sm:$0xff]
        %v465 = vld [vmem:[%s188 + $0x728] sm:$0xff]
        %v466 = vld [vmem:[%s188 + $0x730] sm:$0xff]
        %v467 = vld [vmem:[%s188 + $0x738] sm:$0xff]
        %v468 = vld [vmem:[%s188 + $0x740] sm:$0xff]
        %v469 = vld [vmem:[%s188 + $0x748] sm:$0xff]
        %v470 = vld [vmem:[%s188 + $0x750] sm:$0xff]
        %v471 = vld [vmem:[%s188 + $0x758] sm:$0xff]
        %v472 = vld [vmem:[%s188 + $0x760] sm:$0xff]
        %v473 = vld [vmem:[%s188 + $0x768] sm:$0xff]
        %v474 = vld [vmem:[%s188 + $0x770] sm:$0xff]
        %v475 = vld [vmem:[%s188 + $0x778] sm:$0xff]
        %v476 = vld [vmem:[%s188 + $0x780] sm:$0xff]
        %v477 = vld [vmem:[%s188 + $0x788] sm:$0xff]
        %v478 = vld [vmem:[%s188 + $0x790] sm:$0xff]
        %v479 = vld [vmem:[%s188 + $0x798] sm:$0xff]
        %v480 = vld [vmem:[%s188 + $0x7a0] sm:$0xff]
        %v481 = vld [vmem:[%s188 + $0x7a8] sm:$0xff]
        %v482 = vld [vmem:[%s188 + $0x7b0] sm:$0xff]
        %v483 = vld [vmem:[%s188 + $0x7b8] sm:$0xff]
        %v484 = vld [vmem:[%s188 + $0x7c0] sm:$0xff]
        %v485 = vld [vmem:[%s188 + $0x7c8] sm:$0xff]
        %v486 = vld [vmem:[%s188 + $0x7d0] sm:$0xff]
        %v487 = vld [vmem:[%s188 + $0x7d8] sm:$0xff]
        %v488 = vld [vmem:[%s188 + $0x7e0] sm:$0xff]
        %v489 = vld [vmem:[%s188 + $0x7e8] sm:$0xff]
        %v490 = vld [vmem:[%s188 + $0x7f0] sm:$0xff]
        %v491 = vld [vmem:[%s188 + $0x7f8] sm:$0xff]
        %v492 = vld [vmem:[%s188 + $0x800] sm:$0xff]
        %v493 = vld [vmem:[%s188 + $0x808] sm:$0xff]
        %v494 = vld [vmem:[%s188 + $0x810] sm:$0xff]
        %v495 = vld [vmem:[%s188 + $0x818] sm:$0xff]
        %v496 = vld [vmem:[%s188 + $0x820] sm:$0xff]
        %v497 = vld [vmem:[%s188 + $0x828] sm:$0xff]
        %v498 = vld [vmem:[%s188 + $0x830] sm:$0xff]
        %v499 = vld [vmem:[%s188 + $0x838] sm:$0xff]
        %v500 = vld [vmem:[%s188 + $0x840] sm:$0xff]
        %v501 = vld [vmem:[%s188 + $0x848] sm:$0xff]
        %v502 = vld [vmem:[%s188 + $0x850] sm:$0xff]
        %v503 = vld [vmem:[%s188 + $0x858] sm:$0xff]
        %v504 = vld [vmem:[%s188 + $0x860] sm:$0xff]
        %v505 = vld [vmem:[%s188 + $0x868] sm:$0xff]
        %v506 = vld [vmem:[%s188 + $0x870] sm:$0xff]
        %v507 = vld [vmem:[%s188 + $0x878] sm:$0xff]
        %v508 = vld [vmem:[%s188 + $0x880] sm:$0xff]
        %v509 = vld [vmem:[%s188 + $0x888] sm:$0xff]
        %v510 = vld [vmem:[%s188 + $0x890] sm:$0xff]
        %v511 = vld [vmem:[%s188 + $0x898] sm:$0xff]
        %v512 = vld [vmem:[%s188 + $0x8a0] sm:$0xff]
        %v513 = vld [vmem:[%s188 + $0x8a8] sm:$0xff]
        %v514 = vld [vmem:[%s188 + $0x8b0] sm:$0xff]
        %v515 = vld [vmem:[%s188 + $0x8b8] sm:$0xff]
        %v516 = vld [vmem:[%s188 + $0x8c0] sm:$0xff]
        %v517 = vld [vmem:[%s188 + $0x8c8] sm:$0xff]
        %v518 = vld [vmem:[%s188 + $0x8d0] sm:$0xff]
        %v519 = vld [vmem:[%s188 + $0x8d8] sm:$0xff]
        %v520 = vld [vmem:[%s188 + $0x8e0] sm:$0xff]
        %v521 = vld [vmem:[%s188 + $0x8e8] sm:$0xff]
        %v522 = vld [vmem:[%s188 + $0x8f0] sm:$0xff]
        %v523 = vld [vmem:[%s188 + $0x8f8] sm:$0xff]
        %v524 = vld [vmem:[%s188 + $0x900] sm:$0xff]
        %v525 = vld [vmem:[%s188 + $0x908] sm:$0xff]
        %v526 = vld [vmem:[%s188 + $0x910] sm:$0xff]
        %v527 = vld [vmem:[%s188 + $0x918] sm:$0xff]
        %v528 = vld [vmem:[%s188 + $0x920] sm:$0xff]
        %v529 = vld [vmem:[%s188 + $0x928] sm:$0xff]
        %v530 = vld [vmem:[%s188 + $0x930] sm:$0xff]
        %v531 = vld [vmem:[%s188 + $0x938] sm:$0xff]
        %v532 = vld [vmem:[%s188 + $0x940] sm:$0xff]
        %v533 = vld [vmem:[%s188 + $0x948] sm:$0xff]
        %v534 = vld [vmem:[%s188 + $0x950] sm:$0xff]
        %v535 = vld [vmem:[%s188 + $0x958] sm:$0xff]
        %v536 = vld [vmem:[%s188 + $0x960] sm:$0xff]
        %v537 = vld [vmem:[%s188 + $0x968] sm:$0xff]
        %v538 = vld [vmem:[%s188 + $0x970] sm:$0xff]
        %v539 = vld [vmem:[%s188 + $0x978] sm:$0xff]
        %v540 = vld [vmem:[%s188 + $0x980] sm:$0xff]
        %v541 = vld [vmem:[%s188 + $0x988] sm:$0xff]
        %v542 = vld [vmem:[%s188 + $0x990] sm:$0xff]
        %v543 = vld [vmem:[%s188 + $0x998] sm:$0xff]
        %v544 = vld [vmem:[%s188 + $0x9a0] sm:$0xff]
        %v545 = vld [vmem:[%s188 + $0x9a8] sm:$0xff]
        %v546 = vld [vmem:[%s188 + $0x9b0] sm:$0xff]
        %v547 = vld [vmem:[%s188 + $0x9b8] sm:$0xff]
        %v548 = vld [vmem:[%s188 + $0x9c0] sm:$0xff]
        %v549 = vld [vmem:[%s188 + $0x9c8] sm:$0xff]
        %v550 = vld [vmem:[%s188 + $0x9d0] sm:$0xff]
        %v551 = vld [vmem:[%s188 + $0x9d8] sm:$0xff]
        %v552 = vld [vmem:[%s188 + $0x9e0] sm:$0xff]
        %v553 = vld [vmem:[%s188 + $0x9e8] sm:$0xff]
        %v554 = vld [vmem:[%s188 + $0x9f0] sm:$0xff]
        %v555 = vld [vmem:[%s188 + $0x9f8] sm:$0xff]
        %v556 = vld [vmem:[%s188 + $0xa00] sm:$0xff]
        %v557 = vld [vmem:[%s188 + $0xa08] sm:$0xff]
        %v558 = vld [vmem:[%s188 + $0xa10] sm:$0xff]
        %v559 = vld [vmem:[%s188 + $0xa18] sm:$0xff]
        %v560 = vld [vmem:[%s188 + $0xa20] sm:$0xff]
        %v561 = vld [vmem:[%s188 + $0xa28] sm:$0xff]
        %v562 = vld [vmem:[%s188 + $0xa30] sm:$0xff]
        %v563 = vld [vmem:[%s188 + $0xa38] sm:$0xff]
        %v564 = vld [vmem:[%s188 + $0xa40] sm:$0xff]
        %v565 = vld [vmem:[%s188 + $0xa48] sm:$0xff]
        %v566 = vld [vmem:[%s188 + $0xa50] sm:$0xff]
        %v567 = vld [vmem:[%s188 + $0xa58] sm:$0xff]
        %v568 = vld [vmem:[%s188 + $0xa60] sm:$0xff]
        %v569 = vld [vmem:[%s188 + $0xa68] sm:$0xff]
        %v570 = vld [vmem:[%s188 + $0xa70] sm:$0xff]
        %v571 = vld [vmem:[%s188 + $0xa78] sm:$0xff]
        %v572 = vld [vmem:[%s188 + $0xa80] sm:$0xff]
        %v573 = vld [vmem:[%s188 + $0xa88] sm:$0xff]
        %v574 = vld [vmem:[%s188 + $0xa90] sm:$0xff]
        %v575 = vld [vmem:[%s188 + $0xa98] sm:$0xff]
        %v576 = vld [vmem:[%s188 + $0xaa0] sm:$0xff]
        %v577 = vld [vmem:[%s188 + $0xaa8] sm:$0xff]
        %v578 = vld [vmem:[%s188 + $0xab0] sm:$0xff]
        %v579 = vld [vmem:[%s188 + $0xab8] sm:$0xff]
        %v580 = vld [vmem:[%s188 + $0xac0] sm:$0xff]
        %v581 = vld [vmem:[%s188 + $0xac8] sm:$0xff]
        %v582 = vld [vmem:[%s188 + $0xad0] sm:$0xff]
        %v583 = vld [vmem:[%s188 + $0xad8] sm:$0xff]
        %v584 = vld [vmem:[%s188 + $0xae0] sm:$0xff]
        %v585 = vld [vmem:[%s188 + $0xae8] sm:$0xff]
        %v586 = vld [vmem:[%s188 + $0xaf0] sm:$0xff]
        %v587 = vld [vmem:[%s188 + $0xaf8] sm:$0xff]
        %v588 = vld [vmem:[%s188 + $0xb00] sm:$0xff]
        %v589 = vld [vmem:[%s188 + $0xb08] sm:$0xff]
        %v590 = vld [vmem:[%s188 + $0xb10] sm:$0xff]
        %v591 = vld [vmem:[%s188 + $0xb18] sm:$0xff]
        %v592 = vld [vmem:[%s188 + $0xb20] sm:$0xff]
        %v593 = vld [vmem:[%s188 + $0xb28] sm:$0xff]
        %v594 = vld [vmem:[%s188 + $0xb30] sm:$0xff]
        %v595 = vld [vmem:[%s188 + $0xb38] sm:$0xff]
        %v596 = vld [vmem:[%s188 + $0xb40] sm:$0xff]
        %v597 = vld [vmem:[%s188 + $0xb48] sm:$0xff]
        %v598 = vld [vmem:[%s188 + $0xb50] sm:$0xff]
        %v599 = vld [vmem:[%s188 + $0xb58] sm:$0xff]
        %v600 = vld [vmem:[%s188 + $0xb60] sm:$0xff]
        %v601 = vld [vmem:[%s188 + $0xb68] sm:$0xff]
        %v602 = vld [vmem:[%s188 + $0xb70] sm:$0xff]
        %v603 = vld [vmem:[%s188 + $0xb78] sm:$0xff]
        %v604 = vld [vmem:[%s188 + $0xb80] sm:$0xff]
        %v605 = vld [vmem:[%s188 + $0xb88] sm:$0xff]
        %v606 = vld [vmem:[%s188 + $0xb90] sm:$0xff]
        %v607 = vld [vmem:[%s188 + $0xb98] sm:$0xff]
        %v608 = vld [vmem:[%s188 + $0xba0] sm:$0xff]
        %v609 = vld [vmem:[%s188 + $0xba8] sm:$0xff]
        %v610 = vld [vmem:[%s188 + $0xbb0] sm:$0xff]
        %v611 = vld [vmem:[%s188 + $0xbb8] sm:$0xff]
        %v612 = vld [vmem:[%s188 + $0xbc0] sm:$0xff]
        %v613 = vld [vmem:[%s188 + $0xbc8] sm:$0xff]
        %v614 = vld [vmem:[%s188 + $0xbd0] sm:$0xff]
        %v615 = vld [vmem:[%s188 + $0xbd8] sm:$0xff]
        %v616 = vld [vmem:[%s188 + $0xbe0] sm:$0xff]
        %v617 = vld [vmem:[%s188 + $0xbe8] sm:$0xff]
        %v618 = vld [vmem:[%s188 + $0xbf0] sm:$0xff]
        %v619 = vld [vmem:[%s188 + $0xbf8] sm:$0xff]
        %v620 = vld [vmem:[%s188 + $0xc00] sm:$0xff]
        %v621 = vld [vmem:[%s188 + $0xc08] sm:$0xff]
        %v622 = vld [vmem:[%s188 + $0xc10] sm:$0xff]
        %v623 = vld [vmem:[%s188 + $0xc18] sm:$0xff]
        %v624 = vld [vmem:[%s188 + $0xc20] sm:$0xff]
        %v625 = vld [vmem:[%s188 + $0xc28] sm:$0xff]
        %v626 = vld [vmem:[%s188 + $0xc30] sm:$0xff]
        %v627 = vld [vmem:[%s188 + $0xc38] sm:$0xff]
        %v628 = vld [vmem:[%s188 + $0xc40] sm:$0xff]
        %v629 = vld [vmem:[%s188 + $0xc48] sm:$0xff]
        %v630 = vld [vmem:[%s188 + $0xc50] sm:$0xff]
        %v631 = vld [vmem:[%s188 + $0xc58] sm:$0xff]
        %v632 = vld [vmem:[%s188 + $0xc60] sm:$0xff]
        %v633 = vld [vmem:[%s188 + $0xc68] sm:$0xff]
        %v634 = vld [vmem:[%s188 + $0xc70] sm:$0xff]
        %v635 = vld [vmem:[%s188 + $0xc78] sm:$0xff]
        %v636 = vld [vmem:[%s188 + $0xc80] sm:$0xff]
        %v637 = vld [vmem:[%s188 + $0xc88] sm:$0xff]
        %v638 = vld [vmem:[%s188 + $0xc90] sm:$0xff]
        %v639 = vld [vmem:[%s188 + $0xc98] sm:$0xff]
        %v640 = vld [vmem:[%s188 + $0xca0] sm:$0xff]
        %v641 = vld [vmem:[%s188 + $0xca8] sm:$0xff]
        %v642 = vld [vmem:[%s188 + $0xcb0] sm:$0xff]
        %v643 = vld [vmem:[%s188 + $0xcb8] sm:$0xff]
        %v644 = vld [vmem:[%s188 + $0xcc0] sm:$0xff]
        %v645 = vld [vmem:[%s188 + $0xcc8] sm:$0xff]
        %v646 = vld [vmem:[%s188 + $0xcd0] sm:$0xff]
        %v647 = vld [vmem:[%s188 + $0xcd8] sm:$0xff]
        %v648 = vld [vmem:[%s188 + $0xce0] sm:$0xff]
        %v649 = vld [vmem:[%s188 + $0xce8] sm:$0xff]
        %v650 = vld [vmem:[%s188 + $0xcf0] sm:$0xff]
        %v651 = vld [vmem:[%s188 + $0xcf8] sm:$0xff]
        %v652 = vld [vmem:[%s188 + $0xd00] sm:$0xff]
        %v653 = vld [vmem:[%s188 + $0xd08] sm:$0xff]
        %v654 = vld [vmem:[%s188 + $0xd10] sm:$0xff]
        %v655 = vld [vmem:[%s188 + $0xd18] sm:$0xff]
        %v656 = vld [vmem:[%s188 + $0xd20] sm:$0xff]
        %v657 = vld [vmem:[%s188 + $0xd28] sm:$0xff]
        %v658 = vld [vmem:[%s188 + $0xd30] sm:$0xff]
        %v659 = vld [vmem:[%s188 + $0xd38] sm:$0xff]
        %v660 = vld [vmem:[%s188 + $0xd40] sm:$0xff]
        %v661 = vld [vmem:[%s188 + $0xd48] sm:$0xff]
        %v662 = vld [vmem:[%s188 + $0xd50] sm:$0xff]
        %v663 = vld [vmem:[%s188 + $0xd58] sm:$0xff]
        %v664 = vld [vmem:[%s188 + $0xd60] sm:$0xff]
        %v665 = vld [vmem:[%s188 + $0xd68] sm:$0xff]
        %v666 = vld [vmem:[%s188 + $0xd70] sm:$0xff]
        %v667 = vld [vmem:[%s188 + $0xd78] sm:$0xff]
        %v668 = vld [vmem:[%s188 + $0xd80] sm:$0xff]
        %v669 = vld [vmem:[%s188 + $0xd88] sm:$0xff]
        %v670 = vld [vmem:[%s188 + $0xd90] sm:$0xff]
        %v671 = vld [vmem:[%s188 + $0xd98] sm:$0xff]
        %v672 = vld [vmem:[%s188 + $0xda0] sm:$0xff]
        %v673 = vld [vmem:[%s188 + $0xda8] sm:$0xff]
        %v674 = vld [vmem:[%s188 + $0xdb0] sm:$0xff]
        %v675 = vld [vmem:[%s188 + $0xdb8] sm:$0xff]
        %v676 = vld [vmem:[%s188 + $0xdc0] sm:$0xff]
        %v677 = vld [vmem:[%s188 + $0xdc8] sm:$0xff]
        %v678 = vld [vmem:[%s188 + $0xdd0] sm:$0xff]
        %v679 = vld [vmem:[%s188 + $0xdd8] sm:$0xff]
        %v680 = vld [vmem:[%s188 + $0xde0] sm:$0xff]
        %v681 = vld [vmem:[%s188 + $0xde8] sm:$0xff]
        %v682 = vld [vmem:[%s188 + $0xdf0] sm:$0xff]
        %v683 = vld [vmem:[%s188 + $0xdf8] sm:$0xff]
        %v684 = vld [vmem:[%s188 + $0xe00] sm:$0xff]
        %v685 = vld [vmem:[%s188 + $0xe08] sm:$0xff]
        %v686 = vld [vmem:[%s188 + $0xe10] sm:$0xff]
        %v687 = vld [vmem:[%s188 + $0xe18] sm:$0xff]
        %v688 = vld [vmem:[%s188 + $0xe20] sm:$0xff]
        %v689 = vld [vmem:[%s188 + $0xe28] sm:$0xff]
        %v690 = vld [vmem:[%s188 + $0xe30] sm:$0xff]
        %v691 = vld [vmem:[%s188 + $0xe38] sm:$0xff]
        %v692 = vld [vmem:[%s188 + $0xe40] sm:$0xff]
        %v693 = vld [vmem:[%s188 + $0xe48] sm:$0xff]
        %v694 = vld [vmem:[%s188 + $0xe50] sm:$0xff]
        %v695 = vld [vmem:[%s188 + $0xe58] sm:$0xff]
        %v696 = vld [vmem:[%s188 + $0xe60] sm:$0xff]
        %v697 = vld [vmem:[%s188 + $0xe68] sm:$0xff]
        %v698 = vld [vmem:[%s188 + $0xe70] sm:$0xff]
        %v699 = vld [vmem:[%s188 + $0xe78] sm:$0xff]
        %v700 = vld [vmem:[%s188 + $0xe80] sm:$0xff]
        %v701 = vld [vmem:[%s188 + $0xe88] sm:$0xff]
        %v702 = vld [vmem:[%s188 + $0xe90] sm:$0xff]
        %v703 = vld [vmem:[%s188 + $0xe98] sm:$0xff]
        %v704 = vld [vmem:[%s188 + $0xea0] sm:$0xff]
        %v705 = vld [vmem:[%s188 + $0xea8] sm:$0xff]
        %v706 = vld [vmem:[%s188 + $0xeb0] sm:$0xff]
        %v707 = vld [vmem:[%s188 + $0xeb8] sm:$0xff]
        %v708 = vld [vmem:[%s188 + $0xec0] sm:$0xff]
        %v709 = vld [vmem:[%s188 + $0xec8] sm:$0xff]
        %v710 = vld [vmem:[%s188 + $0xed0] sm:$0xff]
        %v711 = vld [vmem:[%s188 + $0xed8] sm:$0xff]
        %v712 = vld [vmem:[%s188 + $0xee0] sm:$0xff]
        %v713 = vld [vmem:[%s188 + $0xee8] sm:$0xff]
        %v714 = vld [vmem:[%s188 + $0xef0] sm:$0xff]
        %v715 = vld [vmem:[%s188 + $0xef8] sm:$0xff]
        %v716 = vld [vmem:[%s188 + $0xf00] sm:$0xff]
        %v717 = vld [vmem:[%s188 + $0xf08] sm:$0xff]
        %v718 = vld [vmem:[%s188 + $0xf10] sm:$0xff]
        %v719 = vld [vmem:[%s188 + $0xf18] sm:$0xff]
        %v720 = vld [vmem:[%s188 + $0xf20] sm:$0xff]
        %v721 = vld [vmem:[%s188 + $0xf28] sm:$0xff]
        %v722 = vld [vmem:[%s188 + $0xf30] sm:$0xff]
        %v723 = vld [vmem:[%s188 + $0xf38] sm:$0xff]
        %v724 = vld [vmem:[%s188 + $0xf40] sm:$0xff]
        %v725 = vld [vmem:[%s188 + $0xf48] sm:$0xff]
        %v726 = vld [vmem:[%s188 + $0xf50] sm:$0xff]
        %v727 = vld [vmem:[%s188 + $0xf58] sm:$0xff]
        %v728 = vld [vmem:[%s188 + $0xf60] sm:$0xff]
        %v729 = vld [vmem:[%s188 + $0xf68] sm:$0xff]
        %v730 = vld [vmem:[%s188 + $0xf70] sm:$0xff]
        %v731 = vld [vmem:[%s188 + $0xf78] sm:$0xff]
        %v732 = vld [vmem:[%s188 + $0xf80] sm:$0xff]
        %v733 = vld [vmem:[%s188 + $0xf88] sm:$0xff]
        %v734 = vld [vmem:[%s188 + $0xf90] sm:$0xff]
        %v735 = vld [vmem:[%s188 + $0xf98] sm:$0xff]
        %v736 = vld [vmem:[%s188 + $0xfa0] sm:$0xff]
        %v737 = vld [vmem:[%s188 + $0xfa8] sm:$0xff]
        %v738 = vld [vmem:[%s188 + $0xfb0] sm:$0xff]
        %v739 = vld [vmem:[%s188 + $0xfb8] sm:$0xff]
        %v740 = vld [vmem:[%s188 + $0xfc0] sm:$0xff]
        %v741 = vld [vmem:[%s188 + $0xfc8] sm:$0xff]
        %v742 = vld [vmem:[%s188 + $0xfd0] sm:$0xff]
        %v743 = vld [vmem:[%s188 + $0xfd8] sm:$0xff]
        %v744 = vld [vmem:[%s188 + $0xfe0] sm:$0xff]
        %v745 = vld [vmem:[%s188 + $0xfe8] sm:$0xff]
        %v746 = vld [vmem:[%s188 + $0xff0] sm:$0xff]
        %v747 = vld [vmem:[%s188 + $0xff8] sm:$0xff]
        %v748 = vld [vmem:[%s198] sm:$0xff]
        %v749 = vld [vmem:[%s198 + $0x8] sm:$0xff]
        %v752 = vperm.slane %v748, 0
        %v753 = vperm.slane %v748, 1
        %v754 = vperm.slane %v748, 2
        %v755 = vperm.slane %v748, 3
        %v756 = vperm.slane %v748, 4
        %v757 = vperm.slane %v748, 5
        %v758 = vperm.slane %v748, 6
        %v759 = vperm.slane %v748, 7
        %v760 = vperm.slane %v749, 0
        %v761 = vperm.slane %v749, 1
        %v762 = vperm.slane %v749, 2
        %v763 = vperm.slane %v749, 3
        %v764 = vperm.slane %v749, 4
        %v765 = vperm.slane %v749, 5
        %v766 = vperm.slane %v749, 6
        %v767 = vperm.slane %v749, 7
        %v786 = vunpack.c.l.b16 %v234
        %v787 = vunpack.c.h.b16 %v234
        %v788 = vunpack.c.l.b16 %v235
        %v789 = vunpack.c.h.b16 %v235
        %v790 = vpack.c.b16 %v786, %v786
        %v791 = vpack.c.b16 %v787, %v787
        %v792 = vpack.c.b16 %v788, %v788
        %v793 = vpack.c.b16 %v789, %v789
        %v1310 = vunpack.c.l.b16 %v236
        %v1311 = vunpack.c.h.b16 %v236
        %v1312 = vunpack.c.l.b16 %v237
        %v1313 = vunpack.c.h.b16 %v237
        %v1314 = vunpack.c.l.b16 %v238
        %v1315 = vunpack.c.h.b16 %v238
        %v1316 = vunpack.c.l.b16 %v239
        %v1317 = vunpack.c.h.b16 %v239
        %v1318 = vunpack.c.l.b16 %v240
        %v1319 = vunpack.c.h.b16 %v240
        %v1320 = vunpack.c.l.b16 %v241
        %v1321 = vunpack.c.h.b16 %v241
        %v1322 = vunpack.c.l.b16 %v242
        %v1323 = vunpack.c.h.b16 %v242
        %v1324 = vunpack.c.l.b16 %v243
        %v1325 = vunpack.c.h.b16 %v243
        %v1326 = vunpack.c.l.b16 %v244
        %v1327 = vunpack.c.h.b16 %v244
        %v1328 = vunpack.c.l.b16 %v245
        %v1329 = vunpack.c.h.b16 %v245
        %v1330 = vunpack.c.l.b16 %v246
        %v1331 = vunpack.c.h.b16 %v246
        %v1332 = vunpack.c.l.b16 %v247
        %v1333 = vunpack.c.h.b16 %v247
        %v1334 = vunpack.c.l.b16 %v248
        %v1335 = vunpack.c.h.b16 %v248
        %v1336 = vunpack.c.l.b16 %v249
        %v1337 = vunpack.c.h.b16 %v249
        %v1338 = vunpack.c.l.b16 %v250
        %v1339 = vunpack.c.h.b16 %v250
        %v1340 = vunpack.c.l.b16 %v251
        %v1341 = vunpack.c.h.b16 %v251
        %v1342 = vunpack.c.l.b16 %v252
        %v1343 = vunpack.c.h.b16 %v252
        %v1344 = vunpack.c.l.b16 %v253
        %v1345 = vunpack.c.h.b16 %v253
        %v1346 = vunpack.c.l.b16 %v254
        %v1347 = vunpack.c.h.b16 %v254
        %v1348 = vunpack.c.l.b16 %v255
        %v1349 = vunpack.c.h.b16 %v255
        %v1350 = vunpack.c.l.b16 %v256
        %v1351 = vunpack.c.h.b16 %v256
        %v1352 = vunpack.c.l.b16 %v257
        %v1353 = vunpack.c.h.b16 %v257
        %v1354 = vunpack.c.l.b16 %v258
        %v1355 = vunpack.c.h.b16 %v258
        %v1356 = vunpack.c.l.b16 %v259
        %v1357 = vunpack.c.h.b16 %v259
        %v1358 = vunpack.c.l.b16 %v260
        %v1359 = vunpack.c.h.b16 %v260
        %v1360 = vunpack.c.l.b16 %v261
        %v1361 = vunpack.c.h.b16 %v261
        %v1362 = vunpack.c.l.b16 %v262
        %v1363 = vunpack.c.h.b16 %v262
        %v1364 = vunpack.c.l.b16 %v263
        %v1365 = vunpack.c.h.b16 %v263
        %v1366 = vunpack.c.l.b16 %v264
        %v1367 = vunpack.c.h.b16 %v264
        %v1368 = vunpack.c.l.b16 %v265
        %v1369 = vunpack.c.h.b16 %v265
        %v1370 = vunpack.c.l.b16 %v266
        %v1371 = vunpack.c.h.b16 %v266
        %v1372 = vunpack.c.l.b16 %v267
        %v1373 = vunpack.c.h.b16 %v267
        %v1374 = vunpack.c.l.b16 %v268
        %v1375 = vunpack.c.h.b16 %v268
        %v1376 = vunpack.c.l.b16 %v269
        %v1377 = vunpack.c.h.b16 %v269
        %v1378 = vunpack.c.l.b16 %v270
        %v1379 = vunpack.c.h.b16 %v270
        %v1380 = vunpack.c.l.b16 %v271
        %v1381 = vunpack.c.h.b16 %v271
        %v1382 = vunpack.c.l.b16 %v272
        %v1383 = vunpack.c.h.b16 %v272
        %v1384 = vunpack.c.l.b16 %v273
        %v1385 = vunpack.c.h.b16 %v273
        %v1386 = vunpack.c.l.b16 %v274
        %v1387 = vunpack.c.h.b16 %v274
        %v1388 = vunpack.c.l.b16 %v275
        %v1389 = vunpack.c.h.b16 %v275
        %v1390 = vunpack.c.l.b16 %v276
        %v1391 = vunpack.c.h.b16 %v276
        %v1392 = vunpack.c.l.b16 %v277
        %v1393 = vunpack.c.h.b16 %v277
        %v1394 = vunpack.c.l.b16 %v278
        %v1395 = vunpack.c.h.b16 %v278
        %v1396 = vunpack.c.l.b16 %v279
        %v1397 = vunpack.c.h.b16 %v279
        %v1398 = vunpack.c.l.b16 %v280
        %v1399 = vunpack.c.h.b16 %v280
        %v1400 = vunpack.c.l.b16 %v281
        %v1401 = vunpack.c.h.b16 %v281
        %v1402 = vunpack.c.l.b16 %v282
        %v1403 = vunpack.c.h.b16 %v282
        %v1404 = vunpack.c.l.b16 %v283
        %v1405 = vunpack.c.h.b16 %v283
        %v1406 = vunpack.c.l.b16 %v284
        %v1407 = vunpack.c.h.b16 %v284
        %v1408 = vunpack.c.l.b16 %v285
        %v1409 = vunpack.c.h.b16 %v285
        %v1410 = vunpack.c.l.b16 %v286
        %v1411 = vunpack.c.h.b16 %v286
        %v1412 = vunpack.c.l.b16 %v287
        %v1413 = vunpack.c.h.b16 %v287
        %v1414 = vunpack.c.l.b16 %v288
        %v1415 = vunpack.c.h.b16 %v288
        %v1416 = vunpack.c.l.b16 %v289
        %v1417 = vunpack.c.h.b16 %v289
        %v1418 = vunpack.c.l.b16 %v290
        %v1419 = vunpack.c.h.b16 %v290
        %v1420 = vunpack.c.l.b16 %v291
        %v1421 = vunpack.c.h.b16 %v291
        %v1422 = vunpack.c.l.b16 %v292
        %v1423 = vunpack.c.h.b16 %v292
        %v1424 = vunpack.c.l.b16 %v293
        %v1425 = vunpack.c.h.b16 %v293
        %v1426 = vunpack.c.l.b16 %v294
        %v1427 = vunpack.c.h.b16 %v294
        %v1428 = vunpack.c.l.b16 %v295
        %v1429 = vunpack.c.h.b16 %v295
        %v1430 = vunpack.c.l.b16 %v296
        %v1431 = vunpack.c.h.b16 %v296
        %v1432 = vunpack.c.l.b16 %v297
        %v1433 = vunpack.c.h.b16 %v297
        %v1434 = vunpack.c.l.b16 %v298
        %v1435 = vunpack.c.h.b16 %v298
        %v1436 = vunpack.c.l.b16 %v299
        %v1437 = vunpack.c.h.b16 %v299
        %v1438 = vunpack.c.l.b16 %v300
        %v1439 = vunpack.c.h.b16 %v300
        %v1440 = vunpack.c.l.b16 %v301
        %v1441 = vunpack.c.h.b16 %v301
        %v1442 = vunpack.c.l.b16 %v302
        %v1443 = vunpack.c.h.b16 %v302
        %v1444 = vunpack.c.l.b16 %v303
        %v1445 = vunpack.c.h.b16 %v303
        %v1446 = vunpack.c.l.b16 %v304
        %v1447 = vunpack.c.h.b16 %v304
        %v1448 = vunpack.c.l.b16 %v305
        %v1449 = vunpack.c.h.b16 %v305
        %v1450 = vunpack.c.l.b16 %v306
        %v1451 = vunpack.c.h.b16 %v306
        %v1452 = vunpack.c.l.b16 %v307
        %v1453 = vunpack.c.h.b16 %v307
        %v1454 = vunpack.c.l.b16 %v308
        %v1455 = vunpack.c.h.b16 %v308
        %v1456 = vunpack.c.l.b16 %v309
        %v1457 = vunpack.c.h.b16 %v309
        %v1458 = vunpack.c.l.b16 %v310
        %v1459 = vunpack.c.h.b16 %v310
        %v1460 = vunpack.c.l.b16 %v311
        %v1461 = vunpack.c.h.b16 %v311
        %v1462 = vunpack.c.l.b16 %v312
        %v1463 = vunpack.c.h.b16 %v312
        %v1464 = vunpack.c.l.b16 %v313
        %v1465 = vunpack.c.h.b16 %v313
        %v1466 = vunpack.c.l.b16 %v314
        %v1467 = vunpack.c.h.b16 %v314
        %v1468 = vunpack.c.l.b16 %v315
        %v1469 = vunpack.c.h.b16 %v315
        %v1470 = vunpack.c.l.b16 %v316
        %v1471 = vunpack.c.h.b16 %v316
        %v1472 = vunpack.c.l.b16 %v317
        %v1473 = vunpack.c.h.b16 %v317
        %v1474 = vunpack.c.l.b16 %v318
        %v1475 = vunpack.c.h.b16 %v318
        %v1476 = vunpack.c.l.b16 %v319
        %v1477 = vunpack.c.h.b16 %v319
        %v1478 = vunpack.c.l.b16 %v320
        %v1479 = vunpack.c.h.b16 %v320
        %v1480 = vunpack.c.l.b16 %v321
        %v1481 = vunpack.c.h.b16 %v321
        %v1482 = vunpack.c.l.b16 %v322
        %v1483 = vunpack.c.h.b16 %v322
        %v1484 = vunpack.c.l.b16 %v323
        %v1485 = vunpack.c.h.b16 %v323
        %v1486 = vunpack.c.l.b16 %v324
        %v1487 = vunpack.c.h.b16 %v324
        %v1488 = vunpack.c.l.b16 %v325
        %v1489 = vunpack.c.h.b16 %v325
        %v1490 = vunpack.c.l.b16 %v326
        %v1491 = vunpack.c.h.b16 %v326
        %v1492 = vunpack.c.l.b16 %v327
        %v1493 = vunpack.c.h.b16 %v327
        %v1494 = vunpack.c.l.b16 %v328
        %v1495 = vunpack.c.h.b16 %v328
        %v1496 = vunpack.c.l.b16 %v329
        %v1497 = vunpack.c.h.b16 %v329
        %v1498 = vunpack.c.l.b16 %v330
        %v1499 = vunpack.c.h.b16 %v330
        %v1500 = vunpack.c.l.b16 %v331
        %v1501 = vunpack.c.h.b16 %v331
        %v1502 = vunpack.c.l.b16 %v332
        %v1503 = vunpack.c.h.b16 %v332
        %v1504 = vunpack.c.l.b16 %v333
        %v1505 = vunpack.c.h.b16 %v333
        %v1506 = vunpack.c.l.b16 %v334
        %v1507 = vunpack.c.h.b16 %v334
        %v1508 = vunpack.c.l.b16 %v335
        %v1509 = vunpack.c.h.b16 %v335
        %v1510 = vunpack.c.l.b16 %v336
        %v1511 = vunpack.c.h.b16 %v336
        %v1512 = vunpack.c.l.b16 %v337
        %v1513 = vunpack.c.h.b16 %v337
        %v1514 = vunpack.c.l.b16 %v338
        %v1515 = vunpack.c.h.b16 %v338
        %v1516 = vunpack.c.l.b16 %v339
        %v1517 = vunpack.c.h.b16 %v339
        %v1518 = vunpack.c.l.b16 %v340
        %v1519 = vunpack.c.h.b16 %v340
        %v1520 = vunpack.c.l.b16 %v341
        %v1521 = vunpack.c.h.b16 %v341
        %v1522 = vunpack.c.l.b16 %v342
        %v1523 = vunpack.c.h.b16 %v342
        %v1524 = vunpack.c.l.b16 %v343
        %v1525 = vunpack.c.h.b16 %v343
        %v1526 = vunpack.c.l.b16 %v344
        %v1527 = vunpack.c.h.b16 %v344
        %v1528 = vunpack.c.l.b16 %v345
        %v1529 = vunpack.c.h.b16 %v345
        %v1530 = vunpack.c.l.b16 %v346
        %v1531 = vunpack.c.h.b16 %v346
        %v1532 = vunpack.c.l.b16 %v347
        %v1533 = vunpack.c.h.b16 %v347
        %v1534 = vunpack.c.l.b16 %v348
        %v1535 = vunpack.c.h.b16 %v348
        %v1536 = vunpack.c.l.b16 %v349
        %v1537 = vunpack.c.h.b16 %v349
        %v1538 = vunpack.c.l.b16 %v350
        %v1539 = vunpack.c.h.b16 %v350
        %v1540 = vunpack.c.l.b16 %v351
        %v1541 = vunpack.c.h.b16 %v351
        %v1542 = vunpack.c.l.b16 %v352
        %v1543 = vunpack.c.h.b16 %v352
        %v1544 = vunpack.c.l.b16 %v353
        %v1545 = vunpack.c.h.b16 %v353
        %v1546 = vunpack.c.l.b16 %v354
        %v1547 = vunpack.c.h.b16 %v354
        %v1548 = vunpack.c.l.b16 %v355
        %v1549 = vunpack.c.h.b16 %v355
        %v1550 = vunpack.c.l.b16 %v356
        %v1551 = vunpack.c.h.b16 %v356
        %v1552 = vunpack.c.l.b16 %v357
        %v1553 = vunpack.c.h.b16 %v357
        %v1554 = vunpack.c.l.b16 %v358
        %v1555 = vunpack.c.h.b16 %v358
        %v1556 = vunpack.c.l.b16 %v359
        %v1557 = vunpack.c.h.b16 %v359
        %v1558 = vunpack.c.l.b16 %v360
        %v1559 = vunpack.c.h.b16 %v360
        %v1560 = vunpack.c.l.b16 %v361
        %v1561 = vunpack.c.h.b16 %v361
        %v1562 = vunpack.c.l.b16 %v362
        %v1563 = vunpack.c.h.b16 %v362
        %v1564 = vunpack.c.l.b16 %v363
        %v1565 = vunpack.c.h.b16 %v363
        %v1566 = vunpack.c.l.b16 %v364
        %v1567 = vunpack.c.h.b16 %v364
        %v1568 = vunpack.c.l.b16 %v365
        %v1569 = vunpack.c.h.b16 %v365
        %v1570 = vunpack.c.l.b16 %v366
        %v1571 = vunpack.c.h.b16 %v366
        %v1572 = vunpack.c.l.b16 %v367
        %v1573 = vunpack.c.h.b16 %v367
        %v1574 = vunpack.c.l.b16 %v368
        %v1575 = vunpack.c.h.b16 %v368
        %v1576 = vunpack.c.l.b16 %v369
        %v1577 = vunpack.c.h.b16 %v369
        %v1578 = vunpack.c.l.b16 %v370
        %v1579 = vunpack.c.h.b16 %v370
        %v1580 = vunpack.c.l.b16 %v371
        %v1581 = vunpack.c.h.b16 %v371
        %v1582 = vunpack.c.l.b16 %v372
        %v1583 = vunpack.c.h.b16 %v372
        %v1584 = vunpack.c.l.b16 %v373
        %v1585 = vunpack.c.h.b16 %v373
        %v1586 = vunpack.c.l.b16 %v374
        %v1587 = vunpack.c.h.b16 %v374
        %v1588 = vunpack.c.l.b16 %v375
        %v1589 = vunpack.c.h.b16 %v375
        %v1590 = vunpack.c.l.b16 %v376
        %v1591 = vunpack.c.h.b16 %v376
        %v1592 = vunpack.c.l.b16 %v377
        %v1593 = vunpack.c.h.b16 %v377
        %v1594 = vunpack.c.l.b16 %v378
        %v1595 = vunpack.c.h.b16 %v378
        %v1596 = vunpack.c.l.b16 %v379
        %v1597 = vunpack.c.h.b16 %v379
        %v1598 = vunpack.c.l.b16 %v380
        %v1599 = vunpack.c.h.b16 %v380
        %v1600 = vunpack.c.l.b16 %v381
        %v1601 = vunpack.c.h.b16 %v381
        %v1602 = vunpack.c.l.b16 %v382
        %v1603 = vunpack.c.h.b16 %v382
        %v1604 = vunpack.c.l.b16 %v383
        %v1605 = vunpack.c.h.b16 %v383
        %v1606 = vunpack.c.l.b16 %v384
        %v1607 = vunpack.c.h.b16 %v384
        %v1608 = vunpack.c.l.b16 %v385
        %v1609 = vunpack.c.h.b16 %v385
        %v1610 = vunpack.c.l.b16 %v386
        %v1611 = vunpack.c.h.b16 %v386
        %v1612 = vunpack.c.l.b16 %v387
        %v1613 = vunpack.c.h.b16 %v387
        %v1614 = vunpack.c.l.b16 %v388
        %v1615 = vunpack.c.h.b16 %v388
        %v1616 = vunpack.c.l.b16 %v389
        %v1617 = vunpack.c.h.b16 %v389
        %v1618 = vunpack.c.l.b16 %v390
        %v1619 = vunpack.c.h.b16 %v390
        %v1620 = vunpack.c.l.b16 %v391
        %v1621 = vunpack.c.h.b16 %v391
        %v1622 = vunpack.c.l.b16 %v392
        %v1623 = vunpack.c.h.b16 %v392
        %v1624 = vunpack.c.l.b16 %v393
        %v1625 = vunpack.c.h.b16 %v393
        %v1626 = vunpack.c.l.b16 %v394
        %v1627 = vunpack.c.h.b16 %v394
        %v1628 = vunpack.c.l.b16 %v395
        %v1629 = vunpack.c.h.b16 %v395
        %v1630 = vunpack.c.l.b16 %v396
        %v1631 = vunpack.c.h.b16 %v396
        %v1632 = vunpack.c.l.b16 %v397
        %v1633 = vunpack.c.h.b16 %v397
        %v1634 = vunpack.c.l.b16 %v398
        %v1635 = vunpack.c.h.b16 %v398
        %v1636 = vunpack.c.l.b16 %v399
        %v1637 = vunpack.c.h.b16 %v399
        %v1638 = vunpack.c.l.b16 %v400
        %v1639 = vunpack.c.h.b16 %v400
        %v1640 = vunpack.c.l.b16 %v401
        %v1641 = vunpack.c.h.b16 %v401
        %v1642 = vunpack.c.l.b16 %v402
        %v1643 = vunpack.c.h.b16 %v402
        %v1644 = vunpack.c.l.b16 %v403
        %v1645 = vunpack.c.h.b16 %v403
        %v1646 = vunpack.c.l.b16 %v404
        %v1647 = vunpack.c.h.b16 %v404
        %v1648 = vunpack.c.l.b16 %v405
        %v1649 = vunpack.c.h.b16 %v405
        %v1650 = vunpack.c.l.b16 %v406
        %v1651 = vunpack.c.h.b16 %v406
        %v1652 = vunpack.c.l.b16 %v407
        %v1653 = vunpack.c.h.b16 %v407
        %v1654 = vunpack.c.l.b16 %v408
        %v1655 = vunpack.c.h.b16 %v408
        %v1656 = vunpack.c.l.b16 %v409
        %v1657 = vunpack.c.h.b16 %v409
        %v1658 = vunpack.c.l.b16 %v410
        %v1659 = vunpack.c.h.b16 %v410
        %v1660 = vunpack.c.l.b16 %v411
        %v1661 = vunpack.c.h.b16 %v411
        %v1662 = vunpack.c.l.b16 %v412
        %v1663 = vunpack.c.h.b16 %v412
        %v1664 = vunpack.c.l.b16 %v413
        %v1665 = vunpack.c.h.b16 %v413
        %v1666 = vunpack.c.l.b16 %v414
        %v1667 = vunpack.c.h.b16 %v414
        %v1668 = vunpack.c.l.b16 %v415
        %v1669 = vunpack.c.h.b16 %v415
        %v1670 = vunpack.c.l.b16 %v416
        %v1671 = vunpack.c.h.b16 %v416
        %v1672 = vunpack.c.l.b16 %v417
        %v1673 = vunpack.c.h.b16 %v417
        %v1674 = vunpack.c.l.b16 %v418
        %v1675 = vunpack.c.h.b16 %v418
        %v1676 = vunpack.c.l.b16 %v419
        %v1677 = vunpack.c.h.b16 %v419
        %v1678 = vunpack.c.l.b16 %v420
        %v1679 = vunpack.c.h.b16 %v420
        %v1680 = vunpack.c.l.b16 %v421
        %v1681 = vunpack.c.h.b16 %v421
        %v1682 = vunpack.c.l.b16 %v422
        %v1683 = vunpack.c.h.b16 %v422
        %v1684 = vunpack.c.l.b16 %v423
        %v1685 = vunpack.c.h.b16 %v423
        %v1686 = vunpack.c.l.b16 %v424
        %v1687 = vunpack.c.h.b16 %v424
        %v1688 = vunpack.c.l.b16 %v425
        %v1689 = vunpack.c.h.b16 %v425
        %v1690 = vunpack.c.l.b16 %v426
        %v1691 = vunpack.c.h.b16 %v426
        %v1692 = vunpack.c.l.b16 %v427
        %v1693 = vunpack.c.h.b16 %v427
        %v1694 = vunpack.c.l.b16 %v428
        %v1695 = vunpack.c.h.b16 %v428
        %v1696 = vunpack.c.l.b16 %v429
        %v1697 = vunpack.c.h.b16 %v429
        %v1698 = vunpack.c.l.b16 %v430
        %v1699 = vunpack.c.h.b16 %v430
        %v1700 = vunpack.c.l.b16 %v431
        %v1701 = vunpack.c.h.b16 %v431
        %v1702 = vunpack.c.l.b16 %v432
        %v1703 = vunpack.c.h.b16 %v432
        %v1704 = vunpack.c.l.b16 %v433
        %v1705 = vunpack.c.h.b16 %v433
        %v1706 = vunpack.c.l.b16 %v434
        %v1707 = vunpack.c.h.b16 %v434
        %v1708 = vunpack.c.l.b16 %v435
        %v1709 = vunpack.c.h.b16 %v435
        %v1710 = vunpack.c.l.b16 %v436
        %v1711 = vunpack.c.h.b16 %v436
        %v1712 = vunpack.c.l.b16 %v437
        %v1713 = vunpack.c.h.b16 %v437
        %v1714 = vunpack.c.l.b16 %v438
        %v1715 = vunpack.c.h.b16 %v438
        %v1716 = vunpack.c.l.b16 %v439
        %v1717 = vunpack.c.h.b16 %v439
        %v1718 = vunpack.c.l.b16 %v440
        %v1719 = vunpack.c.h.b16 %v440
        %v1720 = vunpack.c.l.b16 %v441
        %v1721 = vunpack.c.h.b16 %v441
        %v1722 = vunpack.c.l.b16 %v442
        %v1723 = vunpack.c.h.b16 %v442
        %v1724 = vunpack.c.l.b16 %v443
        %v1725 = vunpack.c.h.b16 %v443
        %v1726 = vunpack.c.l.b16 %v444
        %v1727 = vunpack.c.h.b16 %v444
        %v1728 = vunpack.c.l.b16 %v445
        %v1729 = vunpack.c.h.b16 %v445
        %v1730 = vunpack.c.l.b16 %v446
        %v1731 = vunpack.c.h.b16 %v446
        %v1732 = vunpack.c.l.b16 %v447
        %v1733 = vunpack.c.h.b16 %v447
        %v1734 = vunpack.c.l.b16 %v448
        %v1735 = vunpack.c.h.b16 %v448
        %v1736 = vunpack.c.l.b16 %v449
        %v1737 = vunpack.c.h.b16 %v449
        %v1738 = vunpack.c.l.b16 %v450
        %v1739 = vunpack.c.h.b16 %v450
        %v1740 = vunpack.c.l.b16 %v451
        %v1741 = vunpack.c.h.b16 %v451
        %v1742 = vunpack.c.l.b16 %v452
        %v1743 = vunpack.c.h.b16 %v452
        %v1744 = vunpack.c.l.b16 %v453
        %v1745 = vunpack.c.h.b16 %v453
        %v1746 = vunpack.c.l.b16 %v454
        %v1747 = vunpack.c.h.b16 %v454
        %v1748 = vunpack.c.l.b16 %v455
        %v1749 = vunpack.c.h.b16 %v455
        %v1750 = vunpack.c.l.b16 %v456
        %v1751 = vunpack.c.h.b16 %v456
        %v1752 = vunpack.c.l.b16 %v457
        %v1753 = vunpack.c.h.b16 %v457
        %v1754 = vunpack.c.l.b16 %v458
        %v1755 = vunpack.c.h.b16 %v458
        %v1756 = vunpack.c.l.b16 %v459
        %v1757 = vunpack.c.h.b16 %v459
        %v1758 = vunpack.c.l.b16 %v460
        %v1759 = vunpack.c.h.b16 %v460
        %v1760 = vunpack.c.l.b16 %v461
        %v1761 = vunpack.c.h.b16 %v461
        %v1762 = vunpack.c.l.b16 %v462
        %v1763 = vunpack.c.h.b16 %v462
        %v1764 = vunpack.c.l.b16 %v463
        %v1765 = vunpack.c.h.b16 %v463
        %v1766 = vunpack.c.l.b16 %v464
        %v1767 = vunpack.c.h.b16 %v464
        %v1768 = vunpack.c.l.b16 %v465
        %v1769 = vunpack.c.h.b16 %v465
        %v1770 = vunpack.c.l.b16 %v466
        %v1771 = vunpack.c.h.b16 %v466
        %v1772 = vunpack.c.l.b16 %v467
        %v1773 = vunpack.c.h.b16 %v467
        %v1774 = vunpack.c.l.b16 %v468
        %v1775 = vunpack.c.h.b16 %v468
        %v1776 = vunpack.c.l.b16 %v469
        %v1777 = vunpack.c.h.b16 %v469
        %v1778 = vunpack.c.l.b16 %v470
        %v1779 = vunpack.c.h.b16 %v470
        %v1780 = vunpack.c.l.b16 %v471
        %v1781 = vunpack.c.h.b16 %v471
        %v1782 = vunpack.c.l.b16 %v472
        %v1783 = vunpack.c.h.b16 %v472
        %v1784 = vunpack.c.l.b16 %v473
        %v1785 = vunpack.c.h.b16 %v473
        %v1786 = vunpack.c.l.b16 %v474
        %v1787 = vunpack.c.h.b16 %v474
        %v1788 = vunpack.c.l.b16 %v475
        %v1789 = vunpack.c.h.b16 %v475
        %v1790 = vunpack.c.l.b16 %v476
        %v1791 = vunpack.c.h.b16 %v476
        %v1792 = vunpack.c.l.b16 %v477
        %v1793 = vunpack.c.h.b16 %v477
        %v1794 = vunpack.c.l.b16 %v478
        %v1795 = vunpack.c.h.b16 %v478
        %v1796 = vunpack.c.l.b16 %v479
        %v1797 = vunpack.c.h.b16 %v479
        %v1798 = vunpack.c.l.b16 %v480
        %v1799 = vunpack.c.h.b16 %v480
        %v1800 = vunpack.c.l.b16 %v481
        %v1801 = vunpack.c.h.b16 %v481
        %v1802 = vunpack.c.l.b16 %v482
        %v1803 = vunpack.c.h.b16 %v482
        %v1804 = vunpack.c.l.b16 %v483
        %v1805 = vunpack.c.h.b16 %v483
        %v1806 = vunpack.c.l.b16 %v484
        %v1807 = vunpack.c.h.b16 %v484
        %v1808 = vunpack.c.l.b16 %v485
        %v1809 = vunpack.c.h.b16 %v485
        %v1810 = vunpack.c.l.b16 %v486
        %v1811 = vunpack.c.h.b16 %v486
        %v1812 = vunpack.c.l.b16 %v487
        %v1813 = vunpack.c.h.b16 %v487
        %v1814 = vunpack.c.l.b16 %v488
        %v1815 = vunpack.c.h.b16 %v488
        %v1816 = vunpack.c.l.b16 %v489
        %v1817 = vunpack.c.h.b16 %v489
        %v1818 = vunpack.c.l.b16 %v490
        %v1819 = vunpack.c.h.b16 %v490
        %v1820 = vunpack.c.l.b16 %v491
        %v1821 = vunpack.c.h.b16 %v491
        %v1822 = vunpack.c.l.b16 %v492
        %v1823 = vunpack.c.h.b16 %v492
        %v1824 = vunpack.c.l.b16 %v493
        %v1825 = vunpack.c.h.b16 %v493
        %v1826 = vunpack.c.l.b16 %v494
        %v1827 = vunpack.c.h.b16 %v494
        %v1828 = vunpack.c.l.b16 %v495
        %v1829 = vunpack.c.h.b16 %v495
        %v1830 = vunpack.c.l.b16 %v496
        %v1831 = vunpack.c.h.b16 %v496
        %v1832 = vunpack.c.l.b16 %v497
        %v1833 = vunpack.c.h.b16 %v497
        %v1834 = vunpack.c.l.b16 %v498
        %v1835 = vunpack.c.h.b16 %v498
        %v1836 = vunpack.c.l.b16 %v499
        %v1837 = vunpack.c.h.b16 %v499
        %v1838 = vunpack.c.l.b16 %v500
        %v1839 = vunpack.c.h.b16 %v500
        %v1840 = vunpack.c.l.b16 %v501
        %v1841 = vunpack.c.h.b16 %v501
        %v1842 = vunpack.c.l.b16 %v502
        %v1843 = vunpack.c.h.b16 %v502
        %v1844 = vunpack.c.l.b16 %v503
        %v1845 = vunpack.c.h.b16 %v503
        %v1846 = vunpack.c.l.b16 %v504
        %v1847 = vunpack.c.h.b16 %v504
        %v1848 = vunpack.c.l.b16 %v505
        %v1849 = vunpack.c.h.b16 %v505
        %v1850 = vunpack.c.l.b16 %v506
        %v1851 = vunpack.c.h.b16 %v506
        %v1852 = vunpack.c.l.b16 %v507
        %v1853 = vunpack.c.h.b16 %v507
        %v1854 = vunpack.c.l.b16 %v508
        %v1855 = vunpack.c.h.b16 %v508
        %v1856 = vunpack.c.l.b16 %v509
        %v1857 = vunpack.c.h.b16 %v509
        %v1858 = vunpack.c.l.b16 %v510
        %v1859 = vunpack.c.h.b16 %v510
        %v1860 = vunpack.c.l.b16 %v511
        %v1861 = vunpack.c.h.b16 %v511
        %v1862 = vunpack.c.l.b16 %v512
        %v1863 = vunpack.c.h.b16 %v512
        %v1864 = vunpack.c.l.b16 %v513
        %v1865 = vunpack.c.h.b16 %v513
        %v1866 = vunpack.c.l.b16 %v514
        %v1867 = vunpack.c.h.b16 %v514
        %v1868 = vunpack.c.l.b16 %v515
        %v1869 = vunpack.c.h.b16 %v515
        %v1870 = vunpack.c.l.b16 %v516
        %v1871 = vunpack.c.h.b16 %v516
        %v1872 = vunpack.c.l.b16 %v517
        %v1873 = vunpack.c.h.b16 %v517
        %v1874 = vunpack.c.l.b16 %v518
        %v1875 = vunpack.c.h.b16 %v518
        %v1876 = vunpack.c.l.b16 %v519
        %v1877 = vunpack.c.h.b16 %v519
        %v1878 = vunpack.c.l.b16 %v520
        %v1879 = vunpack.c.h.b16 %v520
        %v1880 = vunpack.c.l.b16 %v521
        %v1881 = vunpack.c.h.b16 %v521
        %v1882 = vunpack.c.l.b16 %v522
        %v1883 = vunpack.c.h.b16 %v522
        %v1884 = vunpack.c.l.b16 %v523
        %v1885 = vunpack.c.h.b16 %v523
        %v1886 = vunpack.c.l.b16 %v524
        %v1887 = vunpack.c.h.b16 %v524
        %v1888 = vunpack.c.l.b16 %v525
        %v1889 = vunpack.c.h.b16 %v525
        %v1890 = vunpack.c.l.b16 %v526
        %v1891 = vunpack.c.h.b16 %v526
        %v1892 = vunpack.c.l.b16 %v527
        %v1893 = vunpack.c.h.b16 %v527
        %v1894 = vunpack.c.l.b16 %v528
        %v1895 = vunpack.c.h.b16 %v528
        %v1896 = vunpack.c.l.b16 %v529
        %v1897 = vunpack.c.h.b16 %v529
        %v1898 = vunpack.c.l.b16 %v530
        %v1899 = vunpack.c.h.b16 %v530
        %v1900 = vunpack.c.l.b16 %v531
        %v1901 = vunpack.c.h.b16 %v531
        %v1902 = vunpack.c.l.b16 %v532
        %v1903 = vunpack.c.h.b16 %v532
        %v1904 = vunpack.c.l.b16 %v533
        %v1905 = vunpack.c.h.b16 %v533
        %v1906 = vunpack.c.l.b16 %v534
        %v1907 = vunpack.c.h.b16 %v534
        %v1908 = vunpack.c.l.b16 %v535
        %v1909 = vunpack.c.h.b16 %v535
        %v1910 = vunpack.c.l.b16 %v536
        %v1911 = vunpack.c.h.b16 %v536
        %v1912 = vunpack.c.l.b16 %v537
        %v1913 = vunpack.c.h.b16 %v537
        %v1914 = vunpack.c.l.b16 %v538
        %v1915 = vunpack.c.h.b16 %v538
        %v1916 = vunpack.c.l.b16 %v539
        %v1917 = vunpack.c.h.b16 %v539
        %v1918 = vunpack.c.l.b16 %v540
        %v1919 = vunpack.c.h.b16 %v540
        %v1920 = vunpack.c.l.b16 %v541
        %v1921 = vunpack.c.h.b16 %v541
        %v1922 = vunpack.c.l.b16 %v542
        %v1923 = vunpack.c.h.b16 %v542
        %v1924 = vunpack.c.l.b16 %v543
        %v1925 = vunpack.c.h.b16 %v543
        %v1926 = vunpack.c.l.b16 %v544
        %v1927 = vunpack.c.h.b16 %v544
        %v1928 = vunpack.c.l.b16 %v545
        %v1929 = vunpack.c.h.b16 %v545
        %v1930 = vunpack.c.l.b16 %v546
        %v1931 = vunpack.c.h.b16 %v546
        %v1932 = vunpack.c.l.b16 %v547
        %v1933 = vunpack.c.h.b16 %v547
        %v1934 = vunpack.c.l.b16 %v548
        %v1935 = vunpack.c.h.b16 %v548
        %v1936 = vunpack.c.l.b16 %v549
        %v1937 = vunpack.c.h.b16 %v549
        %v1938 = vunpack.c.l.b16 %v550
        %v1939 = vunpack.c.h.b16 %v550
        %v1940 = vunpack.c.l.b16 %v551
        %v1941 = vunpack.c.h.b16 %v551
        %v1942 = vunpack.c.l.b16 %v552
        %v1943 = vunpack.c.h.b16 %v552
        %v1944 = vunpack.c.l.b16 %v553
        %v1945 = vunpack.c.h.b16 %v553
        %v1946 = vunpack.c.l.b16 %v554
        %v1947 = vunpack.c.h.b16 %v554
        %v1948 = vunpack.c.l.b16 %v555
        %v1949 = vunpack.c.h.b16 %v555
        %v1950 = vunpack.c.l.b16 %v556
        %v1951 = vunpack.c.h.b16 %v556
        %v1952 = vunpack.c.l.b16 %v557
        %v1953 = vunpack.c.h.b16 %v557
        %v1954 = vunpack.c.l.b16 %v558
        %v1955 = vunpack.c.h.b16 %v558
        %v1956 = vunpack.c.l.b16 %v559
        %v1957 = vunpack.c.h.b16 %v559
        %v1958 = vunpack.c.l.b16 %v560
        %v1959 = vunpack.c.h.b16 %v560
        %v1960 = vunpack.c.l.b16 %v561
        %v1961 = vunpack.c.h.b16 %v561
        %v1962 = vunpack.c.l.b16 %v562
        %v1963 = vunpack.c.h.b16 %v562
        %v1964 = vunpack.c.l.b16 %v563
        %v1965 = vunpack.c.h.b16 %v563
        %v1966 = vunpack.c.l.b16 %v564
        %v1967 = vunpack.c.h.b16 %v564
        %v1968 = vunpack.c.l.b16 %v565
        %v1969 = vunpack.c.h.b16 %v565
        %v1970 = vunpack.c.l.b16 %v566
        %v1971 = vunpack.c.h.b16 %v566
        %v1972 = vunpack.c.l.b16 %v567
        %v1973 = vunpack.c.h.b16 %v567
        %v1974 = vunpack.c.l.b16 %v568
        %v1975 = vunpack.c.h.b16 %v568
        %v1976 = vunpack.c.l.b16 %v569
        %v1977 = vunpack.c.h.b16 %v569
        %v1978 = vunpack.c.l.b16 %v570
        %v1979 = vunpack.c.h.b16 %v570
        %v1980 = vunpack.c.l.b16 %v571
        %v1981 = vunpack.c.h.b16 %v571
        %v1982 = vunpack.c.l.b16 %v572
        %v1983 = vunpack.c.h.b16 %v572
        %v1984 = vunpack.c.l.b16 %v573
        %v1985 = vunpack.c.h.b16 %v573
        %v1986 = vunpack.c.l.b16 %v574
        %v1987 = vunpack.c.h.b16 %v574
        %v1988 = vunpack.c.l.b16 %v575
        %v1989 = vunpack.c.h.b16 %v575
        %v1990 = vunpack.c.l.b16 %v576
        %v1991 = vunpack.c.h.b16 %v576
        %v1992 = vunpack.c.l.b16 %v577
        %v1993 = vunpack.c.h.b16 %v577
        %v1994 = vunpack.c.l.b16 %v578
        %v1995 = vunpack.c.h.b16 %v578
        %v1996 = vunpack.c.l.b16 %v579
        %v1997 = vunpack.c.h.b16 %v579
        %v1998 = vunpack.c.l.b16 %v580
        %v1999 = vunpack.c.h.b16 %v580
        %v2000 = vunpack.c.l.b16 %v581
        %v2001 = vunpack.c.h.b16 %v581
        %v2002 = vunpack.c.l.b16 %v582
        %v2003 = vunpack.c.h.b16 %v582
        %v2004 = vunpack.c.l.b16 %v583
        %v2005 = vunpack.c.h.b16 %v583
        %v2006 = vunpack.c.l.b16 %v584
        %v2007 = vunpack.c.h.b16 %v584
        %v2008 = vunpack.c.l.b16 %v585
        %v2009 = vunpack.c.h.b16 %v585
        %v2010 = vunpack.c.l.b16 %v586
        %v2011 = vunpack.c.h.b16 %v586
        %v2012 = vunpack.c.l.b16 %v587
        %v2013 = vunpack.c.h.b16 %v587
        %v2014 = vunpack.c.l.b16 %v588
        %v2015 = vunpack.c.h.b16 %v588
        %v2016 = vunpack.c.l.b16 %v589
        %v2017 = vunpack.c.h.b16 %v589
        %v2018 = vunpack.c.l.b16 %v590
        %v2019 = vunpack.c.h.b16 %v590
        %v2020 = vunpack.c.l.b16 %v591
        %v2021 = vunpack.c.h.b16 %v591
        %v2022 = vunpack.c.l.b16 %v592
        %v2023 = vunpack.c.h.b16 %v592
        %v2024 = vunpack.c.l.b16 %v593
        %v2025 = vunpack.c.h.b16 %v593
        %v2026 = vunpack.c.l.b16 %v594
        %v2027 = vunpack.c.h.b16 %v594
        %v2028 = vunpack.c.l.b16 %v595
        %v2029 = vunpack.c.h.b16 %v595
        %v2030 = vunpack.c.l.b16 %v596
        %v2031 = vunpack.c.h.b16 %v596
        %v2032 = vunpack.c.l.b16 %v597
        %v2033 = vunpack.c.h.b16 %v597
        %v2034 = vunpack.c.l.b16 %v598
        %v2035 = vunpack.c.h.b16 %v598
        %v2036 = vunpack.c.l.b16 %v599
        %v2037 = vunpack.c.h.b16 %v599
        %v2038 = vunpack.c.l.b16 %v600
        %v2039 = vunpack.c.h.b16 %v600
        %v2040 = vunpack.c.l.b16 %v601
        %v2041 = vunpack.c.h.b16 %v601
        %v2042 = vunpack.c.l.b16 %v602
        %v2043 = vunpack.c.h.b16 %v602
        %v2044 = vunpack.c.l.b16 %v603
        %v2045 = vunpack.c.h.b16 %v603
        %v2046 = vunpack.c.l.b16 %v604
        %v2047 = vunpack.c.h.b16 %v604
        %v2048 = vunpack.c.l.b16 %v605
        %v2049 = vunpack.c.h.b16 %v605
        %v2050 = vunpack.c.l.b16 %v606
        %v2051 = vunpack.c.h.b16 %v606
        %v2052 = vunpack.c.l.b16 %v607
        %v2053 = vunpack.c.h.b16 %v607
        %v2054 = vunpack.c.l.b16 %v608
        %v2055 = vunpack.c.h.b16 %v608
        %v2056 = vunpack.c.l.b16 %v609
        %v2057 = vunpack.c.h.b16 %v609
        %v2058 = vunpack.c.l.b16 %v610
        %v2059 = vunpack.c.h.b16 %v610
        %v2060 = vunpack.c.l.b16 %v611
        %v2061 = vunpack.c.h.b16 %v611
        %v2062 = vunpack.c.l.b16 %v612
        %v2063 = vunpack.c.h.b16 %v612
        %v2064 = vunpack.c.l.b16 %v613
        %v2065 = vunpack.c.h.b16 %v613
        %v2066 = vunpack.c.l.b16 %v614
        %v2067 = vunpack.c.h.b16 %v614
        %v2068 = vunpack.c.l.b16 %v615
        %v2069 = vunpack.c.h.b16 %v615
        %v2070 = vunpack.c.l.b16 %v616
        %v2071 = vunpack.c.h.b16 %v616
        %v2072 = vunpack.c.l.b16 %v617
        %v2073 = vunpack.c.h.b16 %v617
        %v2074 = vunpack.c.l.b16 %v618
        %v2075 = vunpack.c.h.b16 %v618
        %v2076 = vunpack.c.l.b16 %v619
        %v2077 = vunpack.c.h.b16 %v619
        %v2078 = vunpack.c.l.b16 %v620
        %v2079 = vunpack.c.h.b16 %v620
        %v2080 = vunpack.c.l.b16 %v621
        %v2081 = vunpack.c.h.b16 %v621
        %v2082 = vunpack.c.l.b16 %v622
        %v2083 = vunpack.c.h.b16 %v622
        %v2084 = vunpack.c.l.b16 %v623
        %v2085 = vunpack.c.h.b16 %v623
        %v2086 = vunpack.c.l.b16 %v624
        %v2087 = vunpack.c.h.b16 %v624
        %v2088 = vunpack.c.l.b16 %v625
        %v2089 = vunpack.c.h.b16 %v625
        %v2090 = vunpack.c.l.b16 %v626
        %v2091 = vunpack.c.h.b16 %v626
        %v2092 = vunpack.c.l.b16 %v627
        %v2093 = vunpack.c.h.b16 %v627
        %v2094 = vunpack.c.l.b16 %v628
        %v2095 = vunpack.c.h.b16 %v628
        %v2096 = vunpack.c.l.b16 %v629
        %v2097 = vunpack.c.h.b16 %v629
        %v2098 = vunpack.c.l.b16 %v630
        %v2099 = vunpack.c.h.b16 %v630
        %v2100 = vunpack.c.l.b16 %v631
        %v2101 = vunpack.c.h.b16 %v631
        %v2102 = vunpack.c.l.b16 %v632
        %v2103 = vunpack.c.h.b16 %v632
        %v2104 = vunpack.c.l.b16 %v633
        %v2105 = vunpack.c.h.b16 %v633
        %v2106 = vunpack.c.l.b16 %v634
        %v2107 = vunpack.c.h.b16 %v634
        %v2108 = vunpack.c.l.b16 %v635
        %v2109 = vunpack.c.h.b16 %v635
        %v2110 = vunpack.c.l.b16 %v636
        %v2111 = vunpack.c.h.b16 %v636
        %v2112 = vunpack.c.l.b16 %v637
        %v2113 = vunpack.c.h.b16 %v637
        %v2114 = vunpack.c.l.b16 %v638
        %v2115 = vunpack.c.h.b16 %v638
        %v2116 = vunpack.c.l.b16 %v639
        %v2117 = vunpack.c.h.b16 %v639
        %v2118 = vunpack.c.l.b16 %v640
        %v2119 = vunpack.c.h.b16 %v640
        %v2120 = vunpack.c.l.b16 %v641
        %v2121 = vunpack.c.h.b16 %v641
        %v2122 = vunpack.c.l.b16 %v642
        %v2123 = vunpack.c.h.b16 %v642
        %v2124 = vunpack.c.l.b16 %v643
        %v2125 = vunpack.c.h.b16 %v643
        %v2126 = vunpack.c.l.b16 %v644
        %v2127 = vunpack.c.h.b16 %v644
        %v2128 = vunpack.c.l.b16 %v645
        %v2129 = vunpack.c.h.b16 %v645
        %v2130 = vunpack.c.l.b16 %v646
        %v2131 = vunpack.c.h.b16 %v646
        %v2132 = vunpack.c.l.b16 %v647
        %v2133 = vunpack.c.h.b16 %v647
        %v2134 = vunpack.c.l.b16 %v648
        %v2135 = vunpack.c.h.b16 %v648
        %v2136 = vunpack.c.l.b16 %v649
        %v2137 = vunpack.c.h.b16 %v649
        %v2138 = vunpack.c.l.b16 %v650
        %v2139 = vunpack.c.h.b16 %v650
        %v2140 = vunpack.c.l.b16 %v651
        %v2141 = vunpack.c.h.b16 %v651
        %v2142 = vunpack.c.l.b16 %v652
        %v2143 = vunpack.c.h.b16 %v652
        %v2144 = vunpack.c.l.b16 %v653
        %v2145 = vunpack.c.h.b16 %v653
        %v2146 = vunpack.c.l.b16 %v654
        %v2147 = vunpack.c.h.b16 %v654
        %v2148 = vunpack.c.l.b16 %v655
        %v2149 = vunpack.c.h.b16 %v655
        %v2150 = vunpack.c.l.b16 %v656
        %v2151 = vunpack.c.h.b16 %v656
        %v2152 = vunpack.c.l.b16 %v657
        %v2153 = vunpack.c.h.b16 %v657
        %v2154 = vunpack.c.l.b16 %v658
        %v2155 = vunpack.c.h.b16 %v658
        %v2156 = vunpack.c.l.b16 %v659
        %v2157 = vunpack.c.h.b16 %v659
        %v2158 = vunpack.c.l.b16 %v660
        %v2159 = vunpack.c.h.b16 %v660
        %v2160 = vunpack.c.l.b16 %v661
        %v2161 = vunpack.c.h.b16 %v661
        %v2162 = vunpack.c.l.b16 %v662
        %v2163 = vunpack.c.h.b16 %v662
        %v2164 = vunpack.c.l.b16 %v663
        %v2165 = vunpack.c.h.b16 %v663
        %v2166 = vunpack.c.l.b16 %v664
        %v2167 = vunpack.c.h.b16 %v664
        %v2168 = vunpack.c.l.b16 %v665
        %v2169 = vunpack.c.h.b16 %v665
        %v2170 = vunpack.c.l.b16 %v666
        %v2171 = vunpack.c.h.b16 %v666
        %v2172 = vunpack.c.l.b16 %v667
        %v2173 = vunpack.c.h.b16 %v667
        %v2174 = vunpack.c.l.b16 %v668
        %v2175 = vunpack.c.h.b16 %v668
        %v2176 = vunpack.c.l.b16 %v669
        %v2177 = vunpack.c.h.b16 %v669
        %v2178 = vunpack.c.l.b16 %v670
        %v2179 = vunpack.c.h.b16 %v670
        %v2180 = vunpack.c.l.b16 %v671
        %v2181 = vunpack.c.h.b16 %v671
        %v2182 = vunpack.c.l.b16 %v672
        %v2183 = vunpack.c.h.b16 %v672
        %v2184 = vunpack.c.l.b16 %v673
        %v2185 = vunpack.c.h.b16 %v673
        %v2186 = vunpack.c.l.b16 %v674
        %v2187 = vunpack.c.h.b16 %v674
        %v2188 = vunpack.c.l.b16 %v675
        %v2189 = vunpack.c.h.b16 %v675
        %v2190 = vunpack.c.l.b16 %v676
        %v2191 = vunpack.c.h.b16 %v676
        %v2192 = vunpack.c.l.b16 %v677
        %v2193 = vunpack.c.h.b16 %v677
        %v2194 = vunpack.c.l.b16 %v678
        %v2195 = vunpack.c.h.b16 %v678
        %v2196 = vunpack.c.l.b16 %v679
        %v2197 = vunpack.c.h.b16 %v679
        %v2198 = vunpack.c.l.b16 %v680
        %v2199 = vunpack.c.h.b16 %v680
        %v2200 = vunpack.c.l.b16 %v681
        %v2201 = vunpack.c.h.b16 %v681
        %v2202 = vunpack.c.l.b16 %v682
        %v2203 = vunpack.c.h.b16 %v682
        %v2204 = vunpack.c.l.b16 %v683
        %v2205 = vunpack.c.h.b16 %v683
        %v2206 = vunpack.c.l.b16 %v684
        %v2207 = vunpack.c.h.b16 %v684
        %v2208 = vunpack.c.l.b16 %v685
        %v2209 = vunpack.c.h.b16 %v685
        %v2210 = vunpack.c.l.b16 %v686
        %v2211 = vunpack.c.h.b16 %v686
        %v2212 = vunpack.c.l.b16 %v687
        %v2213 = vunpack.c.h.b16 %v687
        %v2214 = vunpack.c.l.b16 %v688
        %v2215 = vunpack.c.h.b16 %v688
        %v2216 = vunpack.c.l.b16 %v689
        %v2217 = vunpack.c.h.b16 %v689
        %v2218 = vunpack.c.l.b16 %v690
        %v2219 = vunpack.c.h.b16 %v690
        %v2220 = vunpack.c.l.b16 %v691
        %v2221 = vunpack.c.h.b16 %v691
        %v2222 = vunpack.c.l.b16 %v692
        %v2223 = vunpack.c.h.b16 %v692
        %v2224 = vunpack.c.l.b16 %v693
        %v2225 = vunpack.c.h.b16 %v693
        %v2226 = vunpack.c.l.b16 %v694
        %v2227 = vunpack.c.h.b16 %v694
        %v2228 = vunpack.c.l.b16 %v695
        %v2229 = vunpack.c.h.b16 %v695
        %v2230 = vunpack.c.l.b16 %v696
        %v2231 = vunpack.c.h.b16 %v696
        %v2232 = vunpack.c.l.b16 %v697
        %v2233 = vunpack.c.h.b16 %v697
        %v2234 = vunpack.c.l.b16 %v698
        %v2235 = vunpack.c.h.b16 %v698
        %v2236 = vunpack.c.l.b16 %v699
        %v2237 = vunpack.c.h.b16 %v699
        %v2238 = vunpack.c.l.b16 %v700
        %v2239 = vunpack.c.h.b16 %v700
        %v2240 = vunpack.c.l.b16 %v701
        %v2241 = vunpack.c.h.b16 %v701
        %v2242 = vunpack.c.l.b16 %v702
        %v2243 = vunpack.c.h.b16 %v702
        %v2244 = vunpack.c.l.b16 %v703
        %v2245 = vunpack.c.h.b16 %v703
        %v2246 = vunpack.c.l.b16 %v704
        %v2247 = vunpack.c.h.b16 %v704
        %v2248 = vunpack.c.l.b16 %v705
        %v2249 = vunpack.c.h.b16 %v705
        %v2250 = vunpack.c.l.b16 %v706
        %v2251 = vunpack.c.h.b16 %v706
        %v2252 = vunpack.c.l.b16 %v707
        %v2253 = vunpack.c.h.b16 %v707
        %v2254 = vunpack.c.l.b16 %v708
        %v2255 = vunpack.c.h.b16 %v708
        %v2256 = vunpack.c.l.b16 %v709
        %v2257 = vunpack.c.h.b16 %v709
        %v2258 = vunpack.c.l.b16 %v710
        %v2259 = vunpack.c.h.b16 %v710
        %v2260 = vunpack.c.l.b16 %v711
        %v2261 = vunpack.c.h.b16 %v711
        %v2262 = vunpack.c.l.b16 %v712
        %v2263 = vunpack.c.h.b16 %v712
        %v2264 = vunpack.c.l.b16 %v713
        %v2265 = vunpack.c.h.b16 %v713
        %v2266 = vunpack.c.l.b16 %v714
        %v2267 = vunpack.c.h.b16 %v714
        %v2268 = vunpack.c.l.b16 %v715
        %v2269 = vunpack.c.h.b16 %v715
        %v2270 = vunpack.c.l.b16 %v716
        %v2271 = vunpack.c.h.b16 %v716
        %v2272 = vunpack.c.l.b16 %v717
        %v2273 = vunpack.c.h.b16 %v717
        %v2274 = vunpack.c.l.b16 %v718
        %v2275 = vunpack.c.h.b16 %v718
        %v2276 = vunpack.c.l.b16 %v719
        %v2277 = vunpack.c.h.b16 %v719
        %v2278 = vunpack.c.l.b16 %v720
        %v2279 = vunpack.c.h.b16 %v720
        %v2280 = vunpack.c.l.b16 %v721
        %v2281 = vunpack.c.h.b16 %v721
        %v2282 = vunpack.c.l.b16 %v722
        %v2283 = vunpack.c.h.b16 %v722
        %v2284 = vunpack.c.l.b16 %v723
        %v2285 = vunpack.c.h.b16 %v723
        %v2286 = vunpack.c.l.b16 %v724
        %v2287 = vunpack.c.h.b16 %v724
        %v2288 = vunpack.c.l.b16 %v725
        %v2289 = vunpack.c.h.b16 %v725
        %v2290 = vunpack.c.l.b16 %v726
        %v2291 = vunpack.c.h.b16 %v726
        %v2292 = vunpack.c.l.b16 %v727
        %v2293 = vunpack.c.h.b16 %v727
        %v2294 = vunpack.c.l.b16 %v728
        %v2295 = vunpack.c.h.b16 %v728
        %v2296 = vunpack.c.l.b16 %v729
        %v2297 = vunpack.c.h.b16 %v729
        %v2298 = vunpack.c.l.b16 %v730
        %v2299 = vunpack.c.h.b16 %v730
        %v2300 = vunpack.c.l.b16 %v731
        %v2301 = vunpack.c.h.b16 %v731
        %v2302 = vunpack.c.l.b16 %v732
        %v2303 = vunpack.c.h.b16 %v732
        %v2304 = vunpack.c.l.b16 %v733
        %v2305 = vunpack.c.h.b16 %v733
        %v2306 = vunpack.c.l.b16 %v734
        %v2307 = vunpack.c.h.b16 %v734
        %v2308 = vunpack.c.l.b16 %v735
        %v2309 = vunpack.c.h.b16 %v735
        %v2310 = vunpack.c.l.b16 %v736
        %v2311 = vunpack.c.h.b16 %v736
        %v2312 = vunpack.c.l.b16 %v737
        %v2313 = vunpack.c.h.b16 %v737
        %v2314 = vunpack.c.l.b16 %v738
        %v2315 = vunpack.c.h.b16 %v738
        %v2316 = vunpack.c.l.b16 %v739
        %v2317 = vunpack.c.h.b16 %v739
        %v2318 = vunpack.c.l.b16 %v740
        %v2319 = vunpack.c.h.b16 %v740
        %v2320 = vunpack.c.l.b16 %v741
        %v2321 = vunpack.c.h.b16 %v741
        %v2322 = vunpack.c.l.b16 %v742
        %v2323 = vunpack.c.h.b16 %v742
        %v2324 = vunpack.c.l.b16 %v743
        %v2325 = vunpack.c.h.b16 %v743
        %v2326 = vunpack.c.l.b16 %v744
        %v2327 = vunpack.c.h.b16 %v744
        %v2328 = vunpack.c.l.b16 %v745
        %v2329 = vunpack.c.h.b16 %v745
        %v2330 = vunpack.c.l.b16 %v746
        %v2331 = vunpack.c.h.b16 %v746
        %v2332 = vunpack.c.l.b16 %v747
        %v2333 = vunpack.c.h.b16 %v747
        %v2334 = vpack.c.b16 %v1326, %v1310
        %v2335 = vpack.c.b16 %v1327, %v1311
        %v2336 = vpack.c.b16 %v1328, %v1312
        %v2337 = vpack.c.b16 %v1329, %v1313
        %v2338 = vpack.c.b16 %v1330, %v1314
        %v2339 = vpack.c.b16 %v1331, %v1315
        %v2340 = vpack.c.b16 %v1332, %v1316
        %v2341 = vpack.c.b16 %v1333, %v1317
        %v2342 = vpack.c.b16 %v1334, %v1318
        %v2343 = vpack.c.b16 %v1335, %v1319
        %v2344 = vpack.c.b16 %v1336, %v1320
        %v2345 = vpack.c.b16 %v1337, %v1321
        %v2346 = vpack.c.b16 %v1338, %v1322
        %v2347 = vpack.c.b16 %v1339, %v1323
        %v2348 = vpack.c.b16 %v1340, %v1324
        %v2349 = vpack.c.b16 %v1341, %v1325
        %v2350 = vpack.c.b16 %v1358, %v1342
        %v2351 = vpack.c.b16 %v1359, %v1343
        %v2352 = vpack.c.b16 %v1360, %v1344
        %v2353 = vpack.c.b16 %v1361, %v1345
        %v2354 = vpack.c.b16 %v1362, %v1346
        %v2355 = vpack.c.b16 %v1363, %v1347
        %v2356 = vpack.c.b16 %v1364, %v1348
        %v2357 = vpack.c.b16 %v1365, %v1349
        %v2358 = vpack.c.b16 %v1366, %v1350
        %v2359 = vpack.c.b16 %v1367, %v1351
        %v2360 = vpack.c.b16 %v1368, %v1352
        %v2361 = vpack.c.b16 %v1369, %v1353
        %v2362 = vpack.c.b16 %v1370, %v1354
        %v2363 = vpack.c.b16 %v1371, %v1355
        %v2364 = vpack.c.b16 %v1372, %v1356
        %v2365 = vpack.c.b16 %v1373, %v1357
        %v2366 = vpack.c.b16 %v1390, %v1374
        %v2367 = vpack.c.b16 %v1391, %v1375
        %v2368 = vpack.c.b16 %v1392, %v1376
        %v2369 = vpack.c.b16 %v1393, %v1377
        %v2370 = vpack.c.b16 %v1394, %v1378
        %v2371 = vpack.c.b16 %v1395, %v1379
        %v2372 = vpack.c.b16 %v1396, %v1380
        %v2373 = vpack.c.b16 %v1397, %v1381
        %v2374 = vpack.c.b16 %v1398, %v1382
        %v2375 = vpack.c.b16 %v1399, %v1383
        %v2376 = vpack.c.b16 %v1400, %v1384
        %v2377 = vpack.c.b16 %v1401, %v1385
        %v2378 = vpack.c.b16 %v1402, %v1386
        %v2379 = vpack.c.b16 %v1403, %v1387
        %v2380 = vpack.c.b16 %v1404, %v1388
        %v2381 = vpack.c.b16 %v1405, %v1389
        %v2382 = vpack.c.b16 %v1422, %v1406
        %v2383 = vpack.c.b16 %v1423, %v1407
        %v2384 = vpack.c.b16 %v1424, %v1408
        %v2385 = vpack.c.b16 %v1425, %v1409
        %v2386 = vpack.c.b16 %v1426, %v1410
        %v2387 = vpack.c.b16 %v1427, %v1411
        %v2388 = vpack.c.b16 %v1428, %v1412
        %v2389 = vpack.c.b16 %v1429, %v1413
        %v2390 = vpack.c.b16 %v1430, %v1414
        %v2391 = vpack.c.b16 %v1431, %v1415
        %v2392 = vpack.c.b16 %v1432, %v1416
        %v2393 = vpack.c.b16 %v1433, %v1417
        %v2394 = vpack.c.b16 %v1434, %v1418
        %v2395 = vpack.c.b16 %v1435, %v1419
        %v2396 = vpack.c.b16 %v1436, %v1420
        %v2397 = vpack.c.b16 %v1437, %v1421
        %v2398 = vpack.c.b16 %v1454, %v1438
        %v2399 = vpack.c.b16 %v1455, %v1439
        %v2400 = vpack.c.b16 %v1456, %v1440
        %v2401 = vpack.c.b16 %v1457, %v1441
        %v2402 = vpack.c.b16 %v1458, %v1442
        %v2403 = vpack.c.b16 %v1459, %v1443
        %v2404 = vpack.c.b16 %v1460, %v1444
        %v2405 = vpack.c.b16 %v1461, %v1445
        %v2406 = vpack.c.b16 %v1462, %v1446
        %v2407 = vpack.c.b16 %v1463, %v1447
        %v2408 = vpack.c.b16 %v1464, %v1448
        %v2409 = vpack.c.b16 %v1465, %v1449
        %v2410 = vpack.c.b16 %v1466, %v1450
        %v2411 = vpack.c.b16 %v1467, %v1451
        %v2412 = vpack.c.b16 %v1468, %v1452
        %v2413 = vpack.c.b16 %v1469, %v1453
        %v2414 = vpack.c.b16 %v1486, %v1470
        %v2415 = vpack.c.b16 %v1487, %v1471
        %v2416 = vpack.c.b16 %v1488, %v1472
        %v2417 = vpack.c.b16 %v1489, %v1473
        %v2418 = vpack.c.b16 %v1490, %v1474
        %v2419 = vpack.c.b16 %v1491, %v1475
        %v2420 = vpack.c.b16 %v1492, %v1476
        %v2421 = vpack.c.b16 %v1493, %v1477
        %v2422 = vpack.c.b16 %v1494, %v1478
        %v2423 = vpack.c.b16 %v1495, %v1479
        %v2424 = vpack.c.b16 %v1496, %v1480
        %v2425 = vpack.c.b16 %v1497, %v1481
        %v2426 = vpack.c.b16 %v1498, %v1482
        %v2427 = vpack.c.b16 %v1499, %v1483
        %v2428 = vpack.c.b16 %v1500, %v1484
        %v2429 = vpack.c.b16 %v1501, %v1485
        %v2430 = vpack.c.b16 %v1518, %v1502
        %v2431 = vpack.c.b16 %v1519, %v1503
        %v2432 = vpack.c.b16 %v1520, %v1504
        %v2433 = vpack.c.b16 %v1521, %v1505
        %v2434 = vpack.c.b16 %v1522, %v1506
        %v2435 = vpack.c.b16 %v1523, %v1507
        %v2436 = vpack.c.b16 %v1524, %v1508
        %v2437 = vpack.c.b16 %v1525, %v1509
        %v2438 = vpack.c.b16 %v1526, %v1510
        %v2439 = vpack.c.b16 %v1527, %v1511
        %v2440 = vpack.c.b16 %v1528, %v1512
        %v2441 = vpack.c.b16 %v1529, %v1513
        %v2442 = vpack.c.b16 %v1530, %v1514
        %v2443 = vpack.c.b16 %v1531, %v1515
        %v2444 = vpack.c.b16 %v1532, %v1516
        %v2445 = vpack.c.b16 %v1533, %v1517
        %v2446 = vpack.c.b16 %v1550, %v1534
        %v2447 = vpack.c.b16 %v1551, %v1535
        %v2448 = vpack.c.b16 %v1552, %v1536
        %v2449 = vpack.c.b16 %v1553, %v1537
        %v2450 = vpack.c.b16 %v1554, %v1538
        %v2451 = vpack.c.b16 %v1555, %v1539
        %v2452 = vpack.c.b16 %v1556, %v1540
        %v2453 = vpack.c.b16 %v1557, %v1541
        %v2454 = vpack.c.b16 %v1558, %v1542
        %v2455 = vpack.c.b16 %v1559, %v1543
        %v2456 = vpack.c.b16 %v1560, %v1544
        %v2457 = vpack.c.b16 %v1561, %v1545
        %v2458 = vpack.c.b16 %v1562, %v1546
        %v2459 = vpack.c.b16 %v1563, %v1547
        %v2460 = vpack.c.b16 %v1564, %v1548
        %v2461 = vpack.c.b16 %v1565, %v1549
        %v2462 = vpack.c.b16 %v1582, %v1566
        %v2463 = vpack.c.b16 %v1583, %v1567
        %v2464 = vpack.c.b16 %v1584, %v1568
        %v2465 = vpack.c.b16 %v1585, %v1569
        %v2466 = vpack.c.b16 %v1586, %v1570
        %v2467 = vpack.c.b16 %v1587, %v1571
        %v2468 = vpack.c.b16 %v1588, %v1572
        %v2469 = vpack.c.b16 %v1589, %v1573
        %v2470 = vpack.c.b16 %v1590, %v1574
        %v2471 = vpack.c.b16 %v1591, %v1575
        %v2472 = vpack.c.b16 %v1592, %v1576
        %v2473 = vpack.c.b16 %v1593, %v1577
        %v2474 = vpack.c.b16 %v1594, %v1578
        %v2475 = vpack.c.b16 %v1595, %v1579
        %v2476 = vpack.c.b16 %v1596, %v1580
        %v2477 = vpack.c.b16 %v1597, %v1581
        %v2478 = vpack.c.b16 %v1614, %v1598
        %v2479 = vpack.c.b16 %v1615, %v1599
        %v2480 = vpack.c.b16 %v1616, %v1600
        %v2481 = vpack.c.b16 %v1617, %v1601
        %v2482 = vpack.c.b16 %v1618, %v1602
        %v2483 = vpack.c.b16 %v1619, %v1603
        %v2484 = vpack.c.b16 %v1620, %v1604
        %v2485 = vpack.c.b16 %v1621, %v1605
        %v2486 = vpack.c.b16 %v1622, %v1606
        %v2487 = vpack.c.b16 %v1623, %v1607
        %v2488 = vpack.c.b16 %v1624, %v1608
        %v2489 = vpack.c.b16 %v1625, %v1609
        %v2490 = vpack.c.b16 %v1626, %v1610
        %v2491 = vpack.c.b16 %v1627, %v1611
        %v2492 = vpack.c.b16 %v1628, %v1612
        %v2493 = vpack.c.b16 %v1629, %v1613
        %v2494 = vpack.c.b16 %v1646, %v1630
        %v2495 = vpack.c.b16 %v1647, %v1631
        %v2496 = vpack.c.b16 %v1648, %v1632
        %v2497 = vpack.c.b16 %v1649, %v1633
        %v2498 = vpack.c.b16 %v1650, %v1634
        %v2499 = vpack.c.b16 %v1651, %v1635
        %v2500 = vpack.c.b16 %v1652, %v1636
        %v2501 = vpack.c.b16 %v1653, %v1637
        %v2502 = vpack.c.b16 %v1654, %v1638
        %v2503 = vpack.c.b16 %v1655, %v1639
        %v2504 = vpack.c.b16 %v1656, %v1640
        %v2505 = vpack.c.b16 %v1657, %v1641
        %v2506 = vpack.c.b16 %v1658, %v1642
        %v2507 = vpack.c.b16 %v1659, %v1643
        %v2508 = vpack.c.b16 %v1660, %v1644
        %v2509 = vpack.c.b16 %v1661, %v1645
        %v2510 = vpack.c.b16 %v1678, %v1662
        %v2511 = vpack.c.b16 %v1679, %v1663
        %v2512 = vpack.c.b16 %v1680, %v1664
        %v2513 = vpack.c.b16 %v1681, %v1665
        %v2514 = vpack.c.b16 %v1682, %v1666
        %v2515 = vpack.c.b16 %v1683, %v1667
        %v2516 = vpack.c.b16 %v1684, %v1668
        %v2517 = vpack.c.b16 %v1685, %v1669
        %v2518 = vpack.c.b16 %v1686, %v1670
        %v2519 = vpack.c.b16 %v1687, %v1671
        %v2520 = vpack.c.b16 %v1688, %v1672
        %v2521 = vpack.c.b16 %v1689, %v1673
        %v2522 = vpack.c.b16 %v1690, %v1674
        %v2523 = vpack.c.b16 %v1691, %v1675
        %v2524 = vpack.c.b16 %v1692, %v1676
        %v2525 = vpack.c.b16 %v1693, %v1677
        %v2526 = vpack.c.b16 %v1710, %v1694
        %v2527 = vpack.c.b16 %v1711, %v1695
        %v2528 = vpack.c.b16 %v1712, %v1696
        %v2529 = vpack.c.b16 %v1713, %v1697
        %v2530 = vpack.c.b16 %v1714, %v1698
        %v2531 = vpack.c.b16 %v1715, %v1699
        %v2532 = vpack.c.b16 %v1716, %v1700
        %v2533 = vpack.c.b16 %v1717, %v1701
        %v2534 = vpack.c.b16 %v1718, %v1702
        %v2535 = vpack.c.b16 %v1719, %v1703
        %v2536 = vpack.c.b16 %v1720, %v1704
        %v2537 = vpack.c.b16 %v1721, %v1705
        %v2538 = vpack.c.b16 %v1722, %v1706
        %v2539 = vpack.c.b16 %v1723, %v1707
        %v2540 = vpack.c.b16 %v1724, %v1708
        %v2541 = vpack.c.b16 %v1725, %v1709
        %v2542 = vpack.c.b16 %v1742, %v1726
        %v2543 = vpack.c.b16 %v1743, %v1727
        %v2544 = vpack.c.b16 %v1744, %v1728
        %v2545 = vpack.c.b16 %v1745, %v1729
        %v2546 = vpack.c.b16 %v1746, %v1730
        %v2547 = vpack.c.b16 %v1747, %v1731
        %v2548 = vpack.c.b16 %v1748, %v1732
        %v2549 = vpack.c.b16 %v1749, %v1733
        %v2550 = vpack.c.b16 %v1750, %v1734
        %v2551 = vpack.c.b16 %v1751, %v1735
        %v2552 = vpack.c.b16 %v1752, %v1736
        %v2553 = vpack.c.b16 %v1753, %v1737
        %v2554 = vpack.c.b16 %v1754, %v1738
        %v2555 = vpack.c.b16 %v1755, %v1739
        %v2556 = vpack.c.b16 %v1756, %v1740
        %v2557 = vpack.c.b16 %v1757, %v1741
        %v2558 = vpack.c.b16 %v1774, %v1758
        %v2559 = vpack.c.b16 %v1775, %v1759
        %v2560 = vpack.c.b16 %v1776, %v1760
        %v2561 = vpack.c.b16 %v1777, %v1761
        %v2562 = vpack.c.b16 %v1778, %v1762
        %v2563 = vpack.c.b16 %v1779, %v1763
        %v2564 = vpack.c.b16 %v1780, %v1764
        %v2565 = vpack.c.b16 %v1781, %v1765
        %v2566 = vpack.c.b16 %v1782, %v1766
        %v2567 = vpack.c.b16 %v1783, %v1767
        %v2568 = vpack.c.b16 %v1784, %v1768
        %v2569 = vpack.c.b16 %v1785, %v1769
        %v2570 = vpack.c.b16 %v1786, %v1770
        %v2571 = vpack.c.b16 %v1787, %v1771
        %v2572 = vpack.c.b16 %v1788, %v1772
        %v2573 = vpack.c.b16 %v1789, %v1773
        %v2574 = vpack.c.b16 %v1806, %v1790
        %v2575 = vpack.c.b16 %v1807, %v1791
        %v2576 = vpack.c.b16 %v1808, %v1792
        %v2577 = vpack.c.b16 %v1809, %v1793
        %v2578 = vpack.c.b16 %v1810, %v1794
        %v2579 = vpack.c.b16 %v1811, %v1795
        %v2580 = vpack.c.b16 %v1812, %v1796
        %v2581 = vpack.c.b16 %v1813, %v1797
        %v2582 = vpack.c.b16 %v1814, %v1798
        %v2583 = vpack.c.b16 %v1815, %v1799
        %v2584 = vpack.c.b16 %v1816, %v1800
        %v2585 = vpack.c.b16 %v1817, %v1801
        %v2586 = vpack.c.b16 %v1818, %v1802
        %v2587 = vpack.c.b16 %v1819, %v1803
        %v2588 = vpack.c.b16 %v1820, %v1804
        %v2589 = vpack.c.b16 %v1821, %v1805
        %v2590 = vpack.c.b16 %v1838, %v1822
        %v2591 = vpack.c.b16 %v1839, %v1823
        %v2592 = vpack.c.b16 %v1840, %v1824
        %v2593 = vpack.c.b16 %v1841, %v1825
        %v2594 = vpack.c.b16 %v1842, %v1826
        %v2595 = vpack.c.b16 %v1843, %v1827
        %v2596 = vpack.c.b16 %v1844, %v1828
        %v2597 = vpack.c.b16 %v1845, %v1829
        %v2598 = vpack.c.b16 %v1846, %v1830
        %v2599 = vpack.c.b16 %v1847, %v1831
        %v2600 = vpack.c.b16 %v1848, %v1832
        %v2601 = vpack.c.b16 %v1849, %v1833
        %v2602 = vpack.c.b16 %v1850, %v1834
        %v2603 = vpack.c.b16 %v1851, %v1835
        %v2604 = vpack.c.b16 %v1852, %v1836
        %v2605 = vpack.c.b16 %v1853, %v1837
        %v2606 = vpack.c.b16 %v1870, %v1854
        %v2607 = vpack.c.b16 %v1871, %v1855
        %v2608 = vpack.c.b16 %v1872, %v1856
        %v2609 = vpack.c.b16 %v1873, %v1857
        %v2610 = vpack.c.b16 %v1874, %v1858
        %v2611 = vpack.c.b16 %v1875, %v1859
        %v2612 = vpack.c.b16 %v1876, %v1860
        %v2613 = vpack.c.b16 %v1877, %v1861
        %v2614 = vpack.c.b16 %v1878, %v1862
        %v2615 = vpack.c.b16 %v1879, %v1863
        %v2616 = vpack.c.b16 %v1880, %v1864
        %v2617 = vpack.c.b16 %v1881, %v1865
        %v2618 = vpack.c.b16 %v1882, %v1866
        %v2619 = vpack.c.b16 %v1883, %v1867
        %v2620 = vpack.c.b16 %v1884, %v1868
        %v2621 = vpack.c.b16 %v1885, %v1869
        %v2622 = vpack.c.b16 %v1902, %v1886
        %v2623 = vpack.c.b16 %v1903, %v1887
        %v2624 = vpack.c.b16 %v1904, %v1888
        %v2625 = vpack.c.b16 %v1905, %v1889
        %v2626 = vpack.c.b16 %v1906, %v1890
        %v2627 = vpack.c.b16 %v1907, %v1891
        %v2628 = vpack.c.b16 %v1908, %v1892
        %v2629 = vpack.c.b16 %v1909, %v1893
        %v2630 = vpack.c.b16 %v1910, %v1894
        %v2631 = vpack.c.b16 %v1911, %v1895
        %v2632 = vpack.c.b16 %v1912, %v1896
        %v2633 = vpack.c.b16 %v1913, %v1897
        %v2634 = vpack.c.b16 %v1914, %v1898
        %v2635 = vpack.c.b16 %v1915, %v1899
        %v2636 = vpack.c.b16 %v1916, %v1900
        %v2637 = vpack.c.b16 %v1917, %v1901
        %v2638 = vpack.c.b16 %v1934, %v1918
        %v2639 = vpack.c.b16 %v1935, %v1919
        %v2640 = vpack.c.b16 %v1936, %v1920
        %v2641 = vpack.c.b16 %v1937, %v1921
        %v2642 = vpack.c.b16 %v1938, %v1922
        %v2643 = vpack.c.b16 %v1939, %v1923
        %v2644 = vpack.c.b16 %v1940, %v1924
        %v2645 = vpack.c.b16 %v1941, %v1925
        %v2646 = vpack.c.b16 %v1942, %v1926
        %v2647 = vpack.c.b16 %v1943, %v1927
        %v2648 = vpack.c.b16 %v1944, %v1928
        %v2649 = vpack.c.b16 %v1945, %v1929
        %v2650 = vpack.c.b16 %v1946, %v1930
        %v2651 = vpack.c.b16 %v1947, %v1931
        %v2652 = vpack.c.b16 %v1948, %v1932
        %v2653 = vpack.c.b16 %v1949, %v1933
        %v2654 = vpack.c.b16 %v1966, %v1950
        %v2655 = vpack.c.b16 %v1967, %v1951
        %v2656 = vpack.c.b16 %v1968, %v1952
        %v2657 = vpack.c.b16 %v1969, %v1953
        %v2658 = vpack.c.b16 %v1970, %v1954
        %v2659 = vpack.c.b16 %v1971, %v1955
        %v2660 = vpack.c.b16 %v1972, %v1956
        %v2661 = vpack.c.b16 %v1973, %v1957
        %v2662 = vpack.c.b16 %v1974, %v1958
        %v2663 = vpack.c.b16 %v1975, %v1959
        %v2664 = vpack.c.b16 %v1976, %v1960
        %v2665 = vpack.c.b16 %v1977, %v1961
        %v2666 = vpack.c.b16 %v1978, %v1962
        %v2667 = vpack.c.b16 %v1979, %v1963
        %v2668 = vpack.c.b16 %v1980, %v1964
        %v2669 = vpack.c.b16 %v1981, %v1965
        %v2670 = vpack.c.b16 %v1998, %v1982
        %v2671 = vpack.c.b16 %v1999, %v1983
        %v2672 = vpack.c.b16 %v2000, %v1984
        %v2673 = vpack.c.b16 %v2001, %v1985
        %v2674 = vpack.c.b16 %v2002, %v1986
        %v2675 = vpack.c.b16 %v2003, %v1987
        %v2676 = vpack.c.b16 %v2004, %v1988
        %v2677 = vpack.c.b16 %v2005, %v1989
        %v2678 = vpack.c.b16 %v2006, %v1990
        %v2679 = vpack.c.b16 %v2007, %v1991
        %v2680 = vpack.c.b16 %v2008, %v1992
        %v2681 = vpack.c.b16 %v2009, %v1993
        %v2682 = vpack.c.b16 %v2010, %v1994
        %v2683 = vpack.c.b16 %v2011, %v1995
        %v2684 = vpack.c.b16 %v2012, %v1996
        %v2685 = vpack.c.b16 %v2013, %v1997
        %v2686 = vpack.c.b16 %v2030, %v2014
        %v2687 = vpack.c.b16 %v2031, %v2015
        %v2688 = vpack.c.b16 %v2032, %v2016
        %v2689 = vpack.c.b16 %v2033, %v2017
        %v2690 = vpack.c.b16 %v2034, %v2018
        %v2691 = vpack.c.b16 %v2035, %v2019
        %v2692 = vpack.c.b16 %v2036, %v2020
        %v2693 = vpack.c.b16 %v2037, %v2021
        %v2694 = vpack.c.b16 %v2038, %v2022
        %v2695 = vpack.c.b16 %v2039, %v2023
        %v2696 = vpack.c.b16 %v2040, %v2024
        %v2697 = vpack.c.b16 %v2041, %v2025
        %v2698 = vpack.c.b16 %v2042, %v2026
        %v2699 = vpack.c.b16 %v2043, %v2027
        %v2700 = vpack.c.b16 %v2044, %v2028
        %v2701 = vpack.c.b16 %v2045, %v2029
        %v2702 = vpack.c.b16 %v2062, %v2046
        %v2703 = vpack.c.b16 %v2063, %v2047
        %v2704 = vpack.c.b16 %v2064, %v2048
        %v2705 = vpack.c.b16 %v2065, %v2049
        %v2706 = vpack.c.b16 %v2066, %v2050
        %v2707 = vpack.c.b16 %v2067, %v2051
        %v2708 = vpack.c.b16 %v2068, %v2052
        %v2709 = vpack.c.b16 %v2069, %v2053
        %v2710 = vpack.c.b16 %v2070, %v2054
        %v2711 = vpack.c.b16 %v2071, %v2055
        %v2712 = vpack.c.b16 %v2072, %v2056
        %v2713 = vpack.c.b16 %v2073, %v2057
        %v2714 = vpack.c.b16 %v2074, %v2058
        %v2715 = vpack.c.b16 %v2075, %v2059
        %v2716 = vpack.c.b16 %v2076, %v2060
        %v2717 = vpack.c.b16 %v2077, %v2061
        %v2718 = vpack.c.b16 %v2094, %v2078
        %v2719 = vpack.c.b16 %v2095, %v2079
        %v2720 = vpack.c.b16 %v2096, %v2080
        %v2721 = vpack.c.b16 %v2097, %v2081
        %v2722 = vpack.c.b16 %v2098, %v2082
        %v2723 = vpack.c.b16 %v2099, %v2083
        %v2724 = vpack.c.b16 %v2100, %v2084
        %v2725 = vpack.c.b16 %v2101, %v2085
        %v2726 = vpack.c.b16 %v2102, %v2086
        %v2727 = vpack.c.b16 %v2103, %v2087
        %v2728 = vpack.c.b16 %v2104, %v2088
        %v2729 = vpack.c.b16 %v2105, %v2089
        %v2730 = vpack.c.b16 %v2106, %v2090
        %v2731 = vpack.c.b16 %v2107, %v2091
        %v2732 = vpack.c.b16 %v2108, %v2092
        %v2733 = vpack.c.b16 %v2109, %v2093
        %v2734 = vpack.c.b16 %v2126, %v2110
        %v2735 = vpack.c.b16 %v2127, %v2111
        %v2736 = vpack.c.b16 %v2128, %v2112
        %v2737 = vpack.c.b16 %v2129, %v2113
        %v2738 = vpack.c.b16 %v2130, %v2114
        %v2739 = vpack.c.b16 %v2131, %v2115
        %v2740 = vpack.c.b16 %v2132, %v2116
        %v2741 = vpack.c.b16 %v2133, %v2117
        %v2742 = vpack.c.b16 %v2134, %v2118
        %v2743 = vpack.c.b16 %v2135, %v2119
        %v2744 = vpack.c.b16 %v2136, %v2120
        %v2745 = vpack.c.b16 %v2137, %v2121
        %v2746 = vpack.c.b16 %v2138, %v2122
        %v2747 = vpack.c.b16 %v2139, %v2123
        %v2748 = vpack.c.b16 %v2140, %v2124
        %v2749 = vpack.c.b16 %v2141, %v2125
        %v2750 = vpack.c.b16 %v2158, %v2142
        %v2751 = vpack.c.b16 %v2159, %v2143
        %v2752 = vpack.c.b16 %v2160, %v2144
        %v2753 = vpack.c.b16 %v2161, %v2145
        %v2754 = vpack.c.b16 %v2162, %v2146
        %v2755 = vpack.c.b16 %v2163, %v2147
        %v2756 = vpack.c.b16 %v2164, %v2148
        %v2757 = vpack.c.b16 %v2165, %v2149
        %v2758 = vpack.c.b16 %v2166, %v2150
        %v2759 = vpack.c.b16 %v2167, %v2151
        %v2760 = vpack.c.b16 %v2168, %v2152
        %v2761 = vpack.c.b16 %v2169, %v2153
        %v2762 = vpack.c.b16 %v2170, %v2154
        %v2763 = vpack.c.b16 %v2171, %v2155
        %v2764 = vpack.c.b16 %v2172, %v2156
        %v2765 = vpack.c.b16 %v2173, %v2157
        %v2766 = vpack.c.b16 %v2190, %v2174
        %v2767 = vpack.c.b16 %v2191, %v2175
        %v2768 = vpack.c.b16 %v2192, %v2176
        %v2769 = vpack.c.b16 %v2193, %v2177
        %v2770 = vpack.c.b16 %v2194, %v2178
        %v2771 = vpack.c.b16 %v2195, %v2179
        %v2772 = vpack.c.b16 %v2196, %v2180
        %v2773 = vpack.c.b16 %v2197, %v2181
        %v2774 = vpack.c.b16 %v2198, %v2182
        %v2775 = vpack.c.b16 %v2199, %v2183
        %v2776 = vpack.c.b16 %v2200, %v2184
        %v2777 = vpack.c.b16 %v2201, %v2185
        %v2778 = vpack.c.b16 %v2202, %v2186
        %v2779 = vpack.c.b16 %v2203, %v2187
        %v2780 = vpack.c.b16 %v2204, %v2188
        %v2781 = vpack.c.b16 %v2205, %v2189
        %v2782 = vpack.c.b16 %v2222, %v2206
        %v2783 = vpack.c.b16 %v2223, %v2207
        %v2784 = vpack.c.b16 %v2224, %v2208
        %v2785 = vpack.c.b16 %v2225, %v2209
        %v2786 = vpack.c.b16 %v2226, %v2210
        %v2787 = vpack.c.b16 %v2227, %v2211
        %v2788 = vpack.c.b16 %v2228, %v2212
        %v2789 = vpack.c.b16 %v2229, %v2213
        %v2790 = vpack.c.b16 %v2230, %v2214
        %v2791 = vpack.c.b16 %v2231, %v2215
        %v2792 = vpack.c.b16 %v2232, %v2216
        %v2793 = vpack.c.b16 %v2233, %v2217
        %v2794 = vpack.c.b16 %v2234, %v2218
        %v2795 = vpack.c.b16 %v2235, %v2219
        %v2796 = vpack.c.b16 %v2236, %v2220
        %v2797 = vpack.c.b16 %v2237, %v2221
        %v2798 = vpack.c.b16 %v2254, %v2238
        %v2799 = vpack.c.b16 %v2255, %v2239
        %v2800 = vpack.c.b16 %v2256, %v2240
        %v2801 = vpack.c.b16 %v2257, %v2241
        %v2802 = vpack.c.b16 %v2258, %v2242
        %v2803 = vpack.c.b16 %v2259, %v2243
        %v2804 = vpack.c.b16 %v2260, %v2244
        %v2805 = vpack.c.b16 %v2261, %v2245
        %v2806 = vpack.c.b16 %v2262, %v2246
        %v2807 = vpack.c.b16 %v2263, %v2247
        %v2808 = vpack.c.b16 %v2264, %v2248
        %v2809 = vpack.c.b16 %v2265, %v2249
        %v2810 = vpack.c.b16 %v2266, %v2250
        %v2811 = vpack.c.b16 %v2267, %v2251
        %v2812 = vpack.c.b16 %v2268, %v2252
        %v2813 = vpack.c.b16 %v2269, %v2253
        %v2814 = vpack.c.b16 %v2286, %v2270
        %v2815 = vpack.c.b16 %v2287, %v2271
        %v2816 = vpack.c.b16 %v2288, %v2272
        %v2817 = vpack.c.b16 %v2289, %v2273
        %v2818 = vpack.c.b16 %v2290, %v2274
        %v2819 = vpack.c.b16 %v2291, %v2275
        %v2820 = vpack.c.b16 %v2292, %v2276
        %v2821 = vpack.c.b16 %v2293, %v2277
        %v2822 = vpack.c.b16 %v2294, %v2278
        %v2823 = vpack.c.b16 %v2295, %v2279
        %v2824 = vpack.c.b16 %v2296, %v2280
        %v2825 = vpack.c.b16 %v2297, %v2281
        %v2826 = vpack.c.b16 %v2298, %v2282
        %v2827 = vpack.c.b16 %v2299, %v2283
        %v2828 = vpack.c.b16 %v2300, %v2284
        %v2829 = vpack.c.b16 %v2301, %v2285
        %v2830 = vpack.c.b16 %v2318, %v2302
        %v2831 = vpack.c.b16 %v2319, %v2303
        %v2832 = vpack.c.b16 %v2320, %v2304
        %v2833 = vpack.c.b16 %v2321, %v2305
        %v2834 = vpack.c.b16 %v2322, %v2306
        %v2835 = vpack.c.b16 %v2323, %v2307
        %v2836 = vpack.c.b16 %v2324, %v2308
        %v2837 = vpack.c.b16 %v2325, %v2309
        %v2838 = vpack.c.b16 %v2326, %v2310
        %v2839 = vpack.c.b16 %v2327, %v2311
        %v2840 = vpack.c.b16 %v2328, %v2312
        %v2841 = vpack.c.b16 %v2329, %v2313
        %v2842 = vpack.c.b16 %v2330, %v2314
        %v2843 = vpack.c.b16 %v2331, %v2315
        %v2844 = vpack.c.b16 %v2332, %v2316
        %v2845 = vpack.c.b16 %v2333, %v2317
        %3358 = vmatpush.bf16.msra.mxu0 %v2446
        %3359 = vmatpush.bf16.msra.mxu0 %v2430
        %3360 = vmatpush.bf16.msra.mxu0 %v2414
        %3361 = vmatpush.bf16.msra.mxu0 %v2398
        %3362 = vmatpush.bf16.msra.mxu0 %v2382
        %3363 = vmatpush.bf16.msra.mxu0 %v2366
        %3364 = vmatpush.bf16.msra.mxu0 %v2350
        %3365 = vmatpush.bf16.msra.mxu0 %v2334
        %3366 = vmatmul.bf16.gmra.mxu0 %v790
        %v3367 = vpop.f32.mrf.mxu0
        %v3368 = vadd.f32 %v752, %v3367
        %v3369 = vpop.f32.mrf.mxu0
        %3370 = vdwg.mxu0
        %3371 = vmatpush.bf16.msra.mxu0 %v2574
        %3372 = vmatpush.bf16.msra.mxu0 %v2558
        %3373 = vmatpush.bf16.msra.mxu0 %v2542
        %3374 = vmatpush.bf16.msra.mxu0 %v2526
        %3375 = vmatpush.bf16.msra.mxu0 %v2510
        %3376 = vmatpush.bf16.msra.mxu0 %v2494
        %3377 = vmatpush.bf16.msra.mxu0 %v2478
        %3378 = vmatpush.bf16.msra.mxu0 %v2462
        %3379 = vmatmul.bf16.gmra.mxu0 %v791
        %v3380 = vpop.f32.mrf.mxu0
        %v3381 = vadd.f32 %v3368, %v3380
        %v3382 = vpop.f32.mrf.mxu0
        %3383 = vdwg.mxu0
        %3384 = vmatpush.bf16.msra.mxu0 %v2702
        %3385 = vmatpush.bf16.msra.mxu0 %v2686
        %3386 = vmatpush.bf16.msra.mxu0 %v2670
        %3387 = vmatpush.bf16.msra.mxu0 %v2654
        %3388 = vmatpush.bf16.msra.mxu0 %v2638
        %3389 = vmatpush.bf16.msra.mxu0 %v2622
        %3390 = vmatpush.bf16.msra.mxu0 %v2606
        %3391 = vmatpush.bf16.msra.mxu0 %v2590
        %3392 = vmatmul.bf16.gmra.mxu0 %v792
        %v3393 = vpop.f32.mrf.mxu0
        %v3394 = vadd.f32 %v3381, %v3393
        %v3395 = vpop.f32.mrf.mxu0
        %3396 = vdwg.mxu0
        %3397 = vmatpush.bf16.msra.mxu0 %v2830
        %3398 = vmatpush.bf16.msra.mxu0 %v2814
        %3399 = vmatpush.bf16.msra.mxu0 %v2798
        %3400 = vmatpush.bf16.msra.mxu0 %v2782
        %3401 = vmatpush.bf16.msra.mxu0 %v2766
        %3402 = vmatpush.bf16.msra.mxu0 %v2750
        %3403 = vmatpush.bf16.msra.mxu0 %v2734
        %3404 = vmatpush.bf16.msra.mxu0 %v2718
        %3405 = vmatmul.bf16.gmra.mxu0 %v793
        %v3406 = vpop.f32.mrf.mxu0
        %v3407 = vadd.f32 %v3394, %v3406
        %v3408 = vpop.f32.mrf.mxu0
        %3409 = vdwg.mxu0
        %3410 = vmatpush.bf16.msra.mxu0 %v2447
        %3411 = vmatpush.bf16.msra.mxu0 %v2431
        %3412 = vmatpush.bf16.msra.mxu0 %v2415
        %3413 = vmatpush.bf16.msra.mxu0 %v2399
        %3414 = vmatpush.bf16.msra.mxu0 %v2383
        %3415 = vmatpush.bf16.msra.mxu0 %v2367
        %3416 = vmatpush.bf16.msra.mxu0 %v2351
        %3417 = vmatpush.bf16.msra.mxu0 %v2335
        %3418 = vmatmul.bf16.gmra.mxu0 %v790
        %v3419 = vpop.f32.mrf.mxu0
        %v3420 = vadd.f32 %v753, %v3419
        %v3421 = vpop.f32.mrf.mxu0
        %3422 = vdwg.mxu0
        %3423 = vmatpush.bf16.msra.mxu0 %v2575
        %3424 = vmatpush.bf16.msra.mxu0 %v2559
        %3425 = vmatpush.bf16.msra.mxu0 %v2543
        %3426 = vmatpush.bf16.msra.mxu0 %v2527
        %3427 = vmatpush.bf16.msra.mxu0 %v2511
        %3428 = vmatpush.bf16.msra.mxu0 %v2495
        %3429 = vmatpush.bf16.msra.mxu0 %v2479
        %3430 = vmatpush.bf16.msra.mxu0 %v2463
        %3431 = vmatmul.bf16.gmra.mxu0 %v791
        %v3432 = vpop.f32.mrf.mxu0
        %v3433 = vadd.f32 %v3420, %v3432
        %v3434 = vpop.f32.mrf.mxu0
        %3435 = vdwg.mxu0
        %3436 = vmatpush.bf16.msra.mxu0 %v2703
        %3437 = vmatpush.bf16.msra.mxu0 %v2687
        %3438 = vmatpush.bf16.msra.mxu0 %v2671
        %3439 = vmatpush.bf16.msra.mxu0 %v2655
        %3440 = vmatpush.bf16.msra.mxu0 %v2639
        %3441 = vmatpush.bf16.msra.mxu0 %v2623
        %3442 = vmatpush.bf16.msra.mxu0 %v2607
        %3443 = vmatpush.bf16.msra.mxu0 %v2591
        %3444 = vmatmul.bf16.gmra.mxu0 %v792
        %v3445 = vpop.f32.mrf.mxu0
        %v3446 = vadd.f32 %v3433, %v3445
        %v3447 = vpop.f32.mrf.mxu0
        %3448 = vdwg.mxu0
        %3449 = vmatpush.bf16.msra.mxu0 %v2831
        %3450 = vmatpush.bf16.msra.mxu0 %v2815
        %3451 = vmatpush.bf16.msra.mxu0 %v2799
        %3452 = vmatpush.bf16.msra.mxu0 %v2783
        %3453 = vmatpush.bf16.msra.mxu0 %v2767
        %3454 = vmatpush.bf16.msra.mxu0 %v2751
        %3455 = vmatpush.bf16.msra.mxu0 %v2735
        %3456 = vmatpush.bf16.msra.mxu0 %v2719
        %3457 = vmatmul.bf16.gmra.mxu0 %v793
        %v3458 = vpop.f32.mrf.mxu0
        %v3459 = vadd.f32 %v3446, %v3458
        %v3460 = vpop.f32.mrf.mxu0
        %3461 = vdwg.mxu0
        %3462 = vmatpush.bf16.msra.mxu0 %v2448
        %3463 = vmatpush.bf16.msra.mxu0 %v2432
        %3464 = vmatpush.bf16.msra.mxu0 %v2416
        %3465 = vmatpush.bf16.msra.mxu0 %v2400
        %3466 = vmatpush.bf16.msra.mxu0 %v2384
        %3467 = vmatpush.bf16.msra.mxu0 %v2368
        %3468 = vmatpush.bf16.msra.mxu0 %v2352
        %3469 = vmatpush.bf16.msra.mxu0 %v2336
        %3470 = vmatmul.bf16.gmra.mxu0 %v790
        %v3471 = vpop.f32.mrf.mxu0
        %v3472 = vadd.f32 %v754, %v3471
        %v3473 = vpop.f32.mrf.mxu0
        %3474 = vdwg.mxu0
        %3475 = vmatpush.bf16.msra.mxu0 %v2576
        %3476 = vmatpush.bf16.msra.mxu0 %v2560
        %3477 = vmatpush.bf16.msra.mxu0 %v2544
        %3478 = vmatpush.bf16.msra.mxu0 %v2528
        %3479 = vmatpush.bf16.msra.mxu0 %v2512
        %3480 = vmatpush.bf16.msra.mxu0 %v2496
        %3481 = vmatpush.bf16.msra.mxu0 %v2480
        %3482 = vmatpush.bf16.msra.mxu0 %v2464
        %3483 = vmatmul.bf16.gmra.mxu0 %v791
        %v3484 = vpop.f32.mrf.mxu0
        %v3485 = vadd.f32 %v3472, %v3484
        %v3486 = vpop.f32.mrf.mxu0
        %3487 = vdwg.mxu0
        %3488 = vmatpush.bf16.msra.mxu0 %v2704
        %3489 = vmatpush.bf16.msra.mxu0 %v2688
        %3490 = vmatpush.bf16.msra.mxu0 %v2672
        %3491 = vmatpush.bf16.msra.mxu0 %v2656
        %3492 = vmatpush.bf16.msra.mxu0 %v2640
        %3493 = vmatpush.bf16.msra.mxu0 %v2624
        %3494 = vmatpush.bf16.msra.mxu0 %v2608
        %3495 = vmatpush.bf16.msra.mxu0 %v2592
        %3496 = vmatmul.bf16.gmra.mxu0 %v792
        %v3497 = vpop.f32.mrf.mxu0
        %v3498 = vadd.f32 %v3485, %v3497
        %v3499 = vpop.f32.mrf.mxu0
        %3500 = vdwg.mxu0
        %3501 = vmatpush.bf16.msra.mxu0 %v2832
        %3502 = vmatpush.bf16.msra.mxu0 %v2816
        %3503 = vmatpush.bf16.msra.mxu0 %v2800
        %3504 = vmatpush.bf16.msra.mxu0 %v2784
        %3505 = vmatpush.bf16.msra.mxu0 %v2768
        %3506 = vmatpush.bf16.msra.mxu0 %v2752
        %3507 = vmatpush.bf16.msra.mxu0 %v2736
        %3508 = vmatpush.bf16.msra.mxu0 %v2720
        %3509 = vmatmul.bf16.gmra.mxu0 %v793
        %v3510 = vpop.f32.mrf.mxu0
        %v3511 = vadd.f32 %v3498, %v3510
        %v3512 = vpop.f32.mrf.mxu0
        %3513 = vdwg.mxu0
        %3514 = vmatpush.bf16.msra.mxu0 %v2449
        %3515 = vmatpush.bf16.msra.mxu0 %v2433
        %3516 = vmatpush.bf16.msra.mxu0 %v2417
        %3517 = vmatpush.bf16.msra.mxu0 %v2401
        %3518 = vmatpush.bf16.msra.mxu0 %v2385
        %3519 = vmatpush.bf16.msra.mxu0 %v2369
        %3520 = vmatpush.bf16.msra.mxu0 %v2353
        %3521 = vmatpush.bf16.msra.mxu0 %v2337
        %3522 = vmatmul.bf16.gmra.mxu0 %v790
        %v3523 = vpop.f32.mrf.mxu0
        %v3524 = vadd.f32 %v755, %v3523
        %v3525 = vpop.f32.mrf.mxu0
        %3526 = vdwg.mxu0
        %3527 = vmatpush.bf16.msra.mxu0 %v2577
        %3528 = vmatpush.bf16.msra.mxu0 %v2561
        %3529 = vmatpush.bf16.msra.mxu0 %v2545
        %3530 = vmatpush.bf16.msra.mxu0 %v2529
        %3531 = vmatpush.bf16.msra.mxu0 %v2513
        %3532 = vmatpush.bf16.msra.mxu0 %v2497
        %3533 = vmatpush.bf16.msra.mxu0 %v2481
        %3534 = vmatpush.bf16.msra.mxu0 %v2465
        %3535 = vmatmul.bf16.gmra.mxu0 %v791
        %v3536 = vpop.f32.mrf.mxu0
        %v3537 = vadd.f32 %v3524, %v3536
        %v3538 = vpop.f32.mrf.mxu0
        %3539 = vdwg.mxu0
        %3540 = vmatpush.bf16.msra.mxu0 %v2705
        %3541 = vmatpush.bf16.msra.mxu0 %v2689
        %3542 = vmatpush.bf16.msra.mxu0 %v2673
        %3543 = vmatpush.bf16.msra.mxu0 %v2657
        %3544 = vmatpush.bf16.msra.mxu0 %v2641
        %3545 = vmatpush.bf16.msra.mxu0 %v2625
        %3546 = vmatpush.bf16.msra.mxu0 %v2609
        %3547 = vmatpush.bf16.msra.mxu0 %v2593
        %3548 = vmatmul.bf16.gmra.mxu0 %v792
        %v3549 = vpop.f32.mrf.mxu0
        %v3550 = vadd.f32 %v3537, %v3549
        %v3551 = vpop.f32.mrf.mxu0
        %3552 = vdwg.mxu0
        %3553 = vmatpush.bf16.msra.mxu0 %v2833
        %3554 = vmatpush.bf16.msra.mxu0 %v2817
        %3555 = vmatpush.bf16.msra.mxu0 %v2801
        %3556 = vmatpush.bf16.msra.mxu0 %v2785
        %3557 = vmatpush.bf16.msra.mxu0 %v2769
        %3558 = vmatpush.bf16.msra.mxu0 %v2753
        %3559 = vmatpush.bf16.msra.mxu0 %v2737
        %3560 = vmatpush.bf16.msra.mxu0 %v2721
        %3561 = vmatmul.bf16.gmra.mxu0 %v793
        %v3562 = vpop.f32.mrf.mxu0
        %v3563 = vadd.f32 %v3550, %v3562
        %v3564 = vpop.f32.mrf.mxu0
        %3565 = vdwg.mxu0
        %3566 = vmatpush.bf16.msra.mxu0 %v2450
        %3567 = vmatpush.bf16.msra.mxu0 %v2434
        %3568 = vmatpush.bf16.msra.mxu0 %v2418
        %3569 = vmatpush.bf16.msra.mxu0 %v2402
        %3570 = vmatpush.bf16.msra.mxu0 %v2386
        %3571 = vmatpush.bf16.msra.mxu0 %v2370
        %3572 = vmatpush.bf16.msra.mxu0 %v2354
        %3573 = vmatpush.bf16.msra.mxu0 %v2338
        %3574 = vmatmul.bf16.gmra.mxu0 %v790
        %v3575 = vpop.f32.mrf.mxu0
        %v3576 = vadd.f32 %v756, %v3575
        %v3577 = vpop.f32.mrf.mxu0
        %3578 = vdwg.mxu0
        %3579 = vmatpush.bf16.msra.mxu0 %v2578
        %3580 = vmatpush.bf16.msra.mxu0 %v2562
        %3581 = vmatpush.bf16.msra.mxu0 %v2546
        %3582 = vmatpush.bf16.msra.mxu0 %v2530
        %3583 = vmatpush.bf16.msra.mxu0 %v2514
        %3584 = vmatpush.bf16.msra.mxu0 %v2498
        %3585 = vmatpush.bf16.msra.mxu0 %v2482
        %3586 = vmatpush.bf16.msra.mxu0 %v2466
        %3587 = vmatmul.bf16.gmra.mxu0 %v791
        %v3588 = vpop.f32.mrf.mxu0
        %v3589 = vadd.f32 %v3576, %v3588
        %v3590 = vpop.f32.mrf.mxu0
        %3591 = vdwg.mxu0
        %3592 = vmatpush.bf16.msra.mxu0 %v2706
        %3593 = vmatpush.bf16.msra.mxu0 %v2690
        %3594 = vmatpush.bf16.msra.mxu0 %v2674
        %3595 = vmatpush.bf16.msra.mxu0 %v2658
        %3596 = vmatpush.bf16.msra.mxu0 %v2642
        %3597 = vmatpush.bf16.msra.mxu0 %v2626
        %3598 = vmatpush.bf16.msra.mxu0 %v2610
        %3599 = vmatpush.bf16.msra.mxu0 %v2594
        %3600 = vmatmul.bf16.gmra.mxu0 %v792
        %v3601 = vpop.f32.mrf.mxu0
        %v3602 = vadd.f32 %v3589, %v3601
        %v3603 = vpop.f32.mrf.mxu0
        %3604 = vdwg.mxu0
        %3605 = vmatpush.bf16.msra.mxu0 %v2834
        %3606 = vmatpush.bf16.msra.mxu0 %v2818
        %3607 = vmatpush.bf16.msra.mxu0 %v2802
        %3608 = vmatpush.bf16.msra.mxu0 %v2786
        %3609 = vmatpush.bf16.msra.mxu0 %v2770
        %3610 = vmatpush.bf16.msra.mxu0 %v2754
        %3611 = vmatpush.bf16.msra.mxu0 %v2738
        %3612 = vmatpush.bf16.msra.mxu0 %v2722
        %3613 = vmatmul.bf16.gmra.mxu0 %v793
        %v3614 = vpop.f32.mrf.mxu0
        %v3615 = vadd.f32 %v3602, %v3614
        %v3616 = vpop.f32.mrf.mxu0
        %3617 = vdwg.mxu0
        %3618 = vmatpush.bf16.msra.mxu0 %v2451
        %3619 = vmatpush.bf16.msra.mxu0 %v2435
        %3620 = vmatpush.bf16.msra.mxu0 %v2419
        %3621 = vmatpush.bf16.msra.mxu0 %v2403
        %3622 = vmatpush.bf16.msra.mxu0 %v2387
        %3623 = vmatpush.bf16.msra.mxu0 %v2371
        %3624 = vmatpush.bf16.msra.mxu0 %v2355
        %3625 = vmatpush.bf16.msra.mxu0 %v2339
        %3626 = vmatmul.bf16.gmra.mxu0 %v790
        %v3627 = vpop.f32.mrf.mxu0
        %v3628 = vadd.f32 %v757, %v3627
        %v3629 = vpop.f32.mrf.mxu0
        %3630 = vdwg.mxu0
        %3631 = vmatpush.bf16.msra.mxu0 %v2579
        %3632 = vmatpush.bf16.msra.mxu0 %v2563
        %3633 = vmatpush.bf16.msra.mxu0 %v2547
        %3634 = vmatpush.bf16.msra.mxu0 %v2531
        %3635 = vmatpush.bf16.msra.mxu0 %v2515
        %3636 = vmatpush.bf16.msra.mxu0 %v2499
        %3637 = vmatpush.bf16.msra.mxu0 %v2483
        %3638 = vmatpush.bf16.msra.mxu0 %v2467
        %3639 = vmatmul.bf16.gmra.mxu0 %v791
        %v3640 = vpop.f32.mrf.mxu0
        %v3641 = vadd.f32 %v3628, %v3640
        %v3642 = vpop.f32.mrf.mxu0
        %3643 = vdwg.mxu0
        %3644 = vmatpush.bf16.msra.mxu0 %v2707
        %3645 = vmatpush.bf16.msra.mxu0 %v2691
        %3646 = vmatpush.bf16.msra.mxu0 %v2675
        %3647 = vmatpush.bf16.msra.mxu0 %v2659
        %3648 = vmatpush.bf16.msra.mxu0 %v2643
        %3649 = vmatpush.bf16.msra.mxu0 %v2627
        %3650 = vmatpush.bf16.msra.mxu0 %v2611
        %3651 = vmatpush.bf16.msra.mxu0 %v2595
        %3652 = vmatmul.bf16.gmra.mxu0 %v792
        %v3653 = vpop.f32.mrf.mxu0
        %v3654 = vadd.f32 %v3641, %v3653
        %v3655 = vpop.f32.mrf.mxu0
        %3656 = vdwg.mxu0
        %3657 = vmatpush.bf16.msra.mxu0 %v2835
        %3658 = vmatpush.bf16.msra.mxu0 %v2819
        %3659 = vmatpush.bf16.msra.mxu0 %v2803
        %3660 = vmatpush.bf16.msra.mxu0 %v2787
        %3661 = vmatpush.bf16.msra.mxu0 %v2771
        %3662 = vmatpush.bf16.msra.mxu0 %v2755
        %3663 = vmatpush.bf16.msra.mxu0 %v2739
        %3664 = vmatpush.bf16.msra.mxu0 %v2723
        %3665 = vmatmul.bf16.gmra.mxu0 %v793
        %v3666 = vpop.f32.mrf.mxu0
        %v3667 = vadd.f32 %v3654, %v3666
        %v3668 = vpop.f32.mrf.mxu0
        %3669 = vdwg.mxu0
        %3670 = vmatpush.bf16.msra.mxu0 %v2452
        %3671 = vmatpush.bf16.msra.mxu0 %v2436
        %3672 = vmatpush.bf16.msra.mxu0 %v2420
        %3673 = vmatpush.bf16.msra.mxu0 %v2404
        %3674 = vmatpush.bf16.msra.mxu0 %v2388
        %3675 = vmatpush.bf16.msra.mxu0 %v2372
        %3676 = vmatpush.bf16.msra.mxu0 %v2356
        %3677 = vmatpush.bf16.msra.mxu0 %v2340
        %3678 = vmatmul.bf16.gmra.mxu0 %v790
        %v3679 = vpop.f32.mrf.mxu0
        %v3680 = vadd.f32 %v758, %v3679
        %v3681 = vpop.f32.mrf.mxu0
        %3682 = vdwg.mxu0
        %3683 = vmatpush.bf16.msra.mxu0 %v2580
        %3684 = vmatpush.bf16.msra.mxu0 %v2564
        %3685 = vmatpush.bf16.msra.mxu0 %v2548
        %3686 = vmatpush.bf16.msra.mxu0 %v2532
        %3687 = vmatpush.bf16.msra.mxu0 %v2516
        %3688 = vmatpush.bf16.msra.mxu0 %v2500
        %3689 = vmatpush.bf16.msra.mxu0 %v2484
        %3690 = vmatpush.bf16.msra.mxu0 %v2468
        %3691 = vmatmul.bf16.gmra.mxu0 %v791
        %v3692 = vpop.f32.mrf.mxu0
        %v3693 = vadd.f32 %v3680, %v3692
        %v3694 = vpop.f32.mrf.mxu0
        %3695 = vdwg.mxu0
        %3696 = vmatpush.bf16.msra.mxu0 %v2708
        %3697 = vmatpush.bf16.msra.mxu0 %v2692
        %3698 = vmatpush.bf16.msra.mxu0 %v2676
        %3699 = vmatpush.bf16.msra.mxu0 %v2660
        %3700 = vmatpush.bf16.msra.mxu0 %v2644
        %3701 = vmatpush.bf16.msra.mxu0 %v2628
        %3702 = vmatpush.bf16.msra.mxu0 %v2612
        %3703 = vmatpush.bf16.msra.mxu0 %v2596
        %3704 = vmatmul.bf16.gmra.mxu0 %v792
        %v3705 = vpop.f32.mrf.mxu0
        %v3706 = vadd.f32 %v3693, %v3705
        %v3707 = vpop.f32.mrf.mxu0
        %3708 = vdwg.mxu0
        %3709 = vmatpush.bf16.msra.mxu0 %v2836
        %3710 = vmatpush.bf16.msra.mxu0 %v2820
        %3711 = vmatpush.bf16.msra.mxu0 %v2804
        %3712 = vmatpush.bf16.msra.mxu0 %v2788
        %3713 = vmatpush.bf16.msra.mxu0 %v2772
        %3714 = vmatpush.bf16.msra.mxu0 %v2756
        %3715 = vmatpush.bf16.msra.mxu0 %v2740
        %3716 = vmatpush.bf16.msra.mxu0 %v2724
        %3717 = vmatmul.bf16.gmra.mxu0 %v793
        %v3718 = vpop.f32.mrf.mxu0
        %v3719 = vadd.f32 %v3706, %v3718
        %v3720 = vpop.f32.mrf.mxu0
        %3721 = vdwg.mxu0
        %3722 = vmatpush.bf16.msra.mxu0 %v2453
        %3723 = vmatpush.bf16.msra.mxu0 %v2437
        %3724 = vmatpush.bf16.msra.mxu0 %v2421
        %3725 = vmatpush.bf16.msra.mxu0 %v2405
        %3726 = vmatpush.bf16.msra.mxu0 %v2389
        %3727 = vmatpush.bf16.msra.mxu0 %v2373
        %3728 = vmatpush.bf16.msra.mxu0 %v2357
        %3729 = vmatpush.bf16.msra.mxu0 %v2341
        %3730 = vmatmul.bf16.gmra.mxu0 %v790
        %v3731 = vpop.f32.mrf.mxu0
        %v3732 = vadd.f32 %v759, %v3731
        %v3733 = vpop.f32.mrf.mxu0
        %3734 = vdwg.mxu0
        %3735 = vmatpush.bf16.msra.mxu0 %v2581
        %3736 = vmatpush.bf16.msra.mxu0 %v2565
        %3737 = vmatpush.bf16.msra.mxu0 %v2549
        %3738 = vmatpush.bf16.msra.mxu0 %v2533
        %3739 = vmatpush.bf16.msra.mxu0 %v2517
        %3740 = vmatpush.bf16.msra.mxu0 %v2501
        %3741 = vmatpush.bf16.msra.mxu0 %v2485
        %3742 = vmatpush.bf16.msra.mxu0 %v2469
        %3743 = vmatmul.bf16.gmra.mxu0 %v791
        %v3744 = vpop.f32.mrf.mxu0
        %v3745 = vadd.f32 %v3732, %v3744
        %v3746 = vpop.f32.mrf.mxu0
        %3747 = vdwg.mxu0
        %3748 = vmatpush.bf16.msra.mxu0 %v2709
        %3749 = vmatpush.bf16.msra.mxu0 %v2693
        %3750 = vmatpush.bf16.msra.mxu0 %v2677
        %3751 = vmatpush.bf16.msra.mxu0 %v2661
        %3752 = vmatpush.bf16.msra.mxu0 %v2645
        %3753 = vmatpush.bf16.msra.mxu0 %v2629
        %3754 = vmatpush.bf16.msra.mxu0 %v2613
        %3755 = vmatpush.bf16.msra.mxu0 %v2597
        %3756 = vmatmul.bf16.gmra.mxu0 %v792
        %v3757 = vpop.f32.mrf.mxu0
        %v3758 = vadd.f32 %v3745, %v3757
        %v3759 = vpop.f32.mrf.mxu0
        %3760 = vdwg.mxu0
        %3761 = vmatpush.bf16.msra.mxu0 %v2837
        %3762 = vmatpush.bf16.msra.mxu0 %v2821
        %3763 = vmatpush.bf16.msra.mxu0 %v2805
        %3764 = vmatpush.bf16.msra.mxu0 %v2789
        %3765 = vmatpush.bf16.msra.mxu0 %v2773
        %3766 = vmatpush.bf16.msra.mxu0 %v2757
        %3767 = vmatpush.bf16.msra.mxu0 %v2741
        %3768 = vmatpush.bf16.msra.mxu0 %v2725
        %3769 = vmatmul.bf16.gmra.mxu0 %v793
        %v3770 = vpop.f32.mrf.mxu0
        %v3771 = vadd.f32 %v3758, %v3770
        %v3772 = vpop.f32.mrf.mxu0
        %3773 = vdwg.mxu0
        %3774 = vmatpush.bf16.msra.mxu0 %v2454
        %3775 = vmatpush.bf16.msra.mxu0 %v2438
        %3776 = vmatpush.bf16.msra.mxu0 %v2422
        %3777 = vmatpush.bf16.msra.mxu0 %v2406
        %3778 = vmatpush.bf16.msra.mxu0 %v2390
        %3779 = vmatpush.bf16.msra.mxu0 %v2374
        %3780 = vmatpush.bf16.msra.mxu0 %v2358
        %3781 = vmatpush.bf16.msra.mxu0 %v2342
        %3782 = vmatmul.bf16.gmra.mxu0 %v790
        %v3783 = vpop.f32.mrf.mxu0
        %v3784 = vadd.f32 %v760, %v3783
        %v3785 = vpop.f32.mrf.mxu0
        %3786 = vdwg.mxu0
        %3787 = vmatpush.bf16.msra.mxu0 %v2582
        %3788 = vmatpush.bf16.msra.mxu0 %v2566
        %3789 = vmatpush.bf16.msra.mxu0 %v2550
        %3790 = vmatpush.bf16.msra.mxu0 %v2534
        %3791 = vmatpush.bf16.msra.mxu0 %v2518
        %3792 = vmatpush.bf16.msra.mxu0 %v2502
        %3793 = vmatpush.bf16.msra.mxu0 %v2486
        %3794 = vmatpush.bf16.msra.mxu0 %v2470
        %3795 = vmatmul.bf16.gmra.mxu0 %v791
        %v3796 = vpop.f32.mrf.mxu0
        %v3797 = vadd.f32 %v3784, %v3796
        %v3798 = vpop.f32.mrf.mxu0
        %3799 = vdwg.mxu0
        %3800 = vmatpush.bf16.msra.mxu0 %v2710
        %3801 = vmatpush.bf16.msra.mxu0 %v2694
        %3802 = vmatpush.bf16.msra.mxu0 %v2678
        %3803 = vmatpush.bf16.msra.mxu0 %v2662
        %3804 = vmatpush.bf16.msra.mxu0 %v2646
        %3805 = vmatpush.bf16.msra.mxu0 %v2630
        %3806 = vmatpush.bf16.msra.mxu0 %v2614
        %3807 = vmatpush.bf16.msra.mxu0 %v2598
        %3808 = vmatmul.bf16.gmra.mxu0 %v792
        %v3809 = vpop.f32.mrf.mxu0
        %v3810 = vadd.f32 %v3797, %v3809
        %v3811 = vpop.f32.mrf.mxu0
        %3812 = vdwg.mxu0
        %3813 = vmatpush.bf16.msra.mxu0 %v2838
        %3814 = vmatpush.bf16.msra.mxu0 %v2822
        %3815 = vmatpush.bf16.msra.mxu0 %v2806
        %3816 = vmatpush.bf16.msra.mxu0 %v2790
        %3817 = vmatpush.bf16.msra.mxu0 %v2774
        %3818 = vmatpush.bf16.msra.mxu0 %v2758
        %3819 = vmatpush.bf16.msra.mxu0 %v2742
        %3820 = vmatpush.bf16.msra.mxu0 %v2726
        %3821 = vmatmul.bf16.gmra.mxu0 %v793
        %v3822 = vpop.f32.mrf.mxu0
        %v3823 = vadd.f32 %v3810, %v3822
        %v3824 = vpop.f32.mrf.mxu0
        %3825 = vdwg.mxu0
        %3826 = vmatpush.bf16.msra.mxu0 %v2455
        %3827 = vmatpush.bf16.msra.mxu0 %v2439
        %3828 = vmatpush.bf16.msra.mxu0 %v2423
        %3829 = vmatpush.bf16.msra.mxu0 %v2407
        %3830 = vmatpush.bf16.msra.mxu0 %v2391
        %3831 = vmatpush.bf16.msra.mxu0 %v2375
        %3832 = vmatpush.bf16.msra.mxu0 %v2359
        %3833 = vmatpush.bf16.msra.mxu0 %v2343
        %3834 = vmatmul.bf16.gmra.mxu0 %v790
        %v3835 = vpop.f32.mrf.mxu0
        %v3836 = vadd.f32 %v761, %v3835
        %v3837 = vpop.f32.mrf.mxu0
        %3838 = vdwg.mxu0
        %3839 = vmatpush.bf16.msra.mxu0 %v2583
        %3840 = vmatpush.bf16.msra.mxu0 %v2567
        %3841 = vmatpush.bf16.msra.mxu0 %v2551
        %3842 = vmatpush.bf16.msra.mxu0 %v2535
        %3843 = vmatpush.bf16.msra.mxu0 %v2519
        %3844 = vmatpush.bf16.msra.mxu0 %v2503
        %3845 = vmatpush.bf16.msra.mxu0 %v2487
        %3846 = vmatpush.bf16.msra.mxu0 %v2471
        %3847 = vmatmul.bf16.gmra.mxu0 %v791
        %v3848 = vpop.f32.mrf.mxu0
        %v3849 = vadd.f32 %v3836, %v3848
        %v3850 = vpop.f32.mrf.mxu0
        %3851 = vdwg.mxu0
        %3852 = vmatpush.bf16.msra.mxu0 %v2711
        %3853 = vmatpush.bf16.msra.mxu0 %v2695
        %3854 = vmatpush.bf16.msra.mxu0 %v2679
        %3855 = vmatpush.bf16.msra.mxu0 %v2663
        %3856 = vmatpush.bf16.msra.mxu0 %v2647
        %3857 = vmatpush.bf16.msra.mxu0 %v2631
        %3858 = vmatpush.bf16.msra.mxu0 %v2615
        %3859 = vmatpush.bf16.msra.mxu0 %v2599
        %3860 = vmatmul.bf16.gmra.mxu0 %v792
        %v3861 = vpop.f32.mrf.mxu0
        %v3862 = vadd.f32 %v3849, %v3861
        %v3863 = vpop.f32.mrf.mxu0
        %3864 = vdwg.mxu0
        %3865 = vmatpush.bf16.msra.mxu0 %v2839
        %3866 = vmatpush.bf16.msra.mxu0 %v2823
        %3867 = vmatpush.bf16.msra.mxu0 %v2807
        %3868 = vmatpush.bf16.msra.mxu0 %v2791
        %3869 = vmatpush.bf16.msra.mxu0 %v2775
        %3870 = vmatpush.bf16.msra.mxu0 %v2759
        %3871 = vmatpush.bf16.msra.mxu0 %v2743
        %3872 = vmatpush.bf16.msra.mxu0 %v2727
        %3873 = vmatmul.bf16.gmra.mxu0 %v793
        %v3874 = vpop.f32.mrf.mxu0
        %v3875 = vadd.f32 %v3862, %v3874
        %v3876 = vpop.f32.mrf.mxu0
        %3877 = vdwg.mxu0
        %3878 = vmatpush.bf16.msra.mxu0 %v2456
        %3879 = vmatpush.bf16.msra.mxu0 %v2440
        %3880 = vmatpush.bf16.msra.mxu0 %v2424
        %3881 = vmatpush.bf16.msra.mxu0 %v2408
        %3882 = vmatpush.bf16.msra.mxu0 %v2392
        %3883 = vmatpush.bf16.msra.mxu0 %v2376
        %3884 = vmatpush.bf16.msra.mxu0 %v2360
        %3885 = vmatpush.bf16.msra.mxu0 %v2344
        %3886 = vmatmul.bf16.gmra.mxu0 %v790
        %v3887 = vpop.f32.mrf.mxu0
        %v3888 = vadd.f32 %v762, %v3887
        %v3889 = vpop.f32.mrf.mxu0
        %3890 = vdwg.mxu0
        %3891 = vmatpush.bf16.msra.mxu0 %v2584
        %3892 = vmatpush.bf16.msra.mxu0 %v2568
        %3893 = vmatpush.bf16.msra.mxu0 %v2552
        %3894 = vmatpush.bf16.msra.mxu0 %v2536
        %3895 = vmatpush.bf16.msra.mxu0 %v2520
        %3896 = vmatpush.bf16.msra.mxu0 %v2504
        %3897 = vmatpush.bf16.msra.mxu0 %v2488
        %3898 = vmatpush.bf16.msra.mxu0 %v2472
        %3899 = vmatmul.bf16.gmra.mxu0 %v791
        %v3900 = vpop.f32.mrf.mxu0
        %v3901 = vadd.f32 %v3888, %v3900
        %v3902 = vpop.f32.mrf.mxu0
        %3903 = vdwg.mxu0
        %3904 = vmatpush.bf16.msra.mxu0 %v2712
        %3905 = vmatpush.bf16.msra.mxu0 %v2696
        %3906 = vmatpush.bf16.msra.mxu0 %v2680
        %3907 = vmatpush.bf16.msra.mxu0 %v2664
        %3908 = vmatpush.bf16.msra.mxu0 %v2648
        %3909 = vmatpush.bf16.msra.mxu0 %v2632
        %3910 = vmatpush.bf16.msra.mxu0 %v2616
        %3911 = vmatpush.bf16.msra.mxu0 %v2600
        %3912 = vmatmul.bf16.gmra.mxu0 %v792
        %v3913 = vpop.f32.mrf.mxu0
        %v3914 = vadd.f32 %v3901, %v3913
        %v3915 = vpop.f32.mrf.mxu0
        %3916 = vdwg.mxu0
        %3917 = vmatpush.bf16.msra.mxu0 %v2840
        %3918 = vmatpush.bf16.msra.mxu0 %v2824
        %3919 = vmatpush.bf16.msra.mxu0 %v2808
        %3920 = vmatpush.bf16.msra.mxu0 %v2792
        %3921 = vmatpush.bf16.msra.mxu0 %v2776
        %3922 = vmatpush.bf16.msra.mxu0 %v2760
        %3923 = vmatpush.bf16.msra.mxu0 %v2744
        %3924 = vmatpush.bf16.msra.mxu0 %v2728
        %3925 = vmatmul.bf16.gmra.mxu0 %v793
        %v3926 = vpop.f32.mrf.mxu0
        %v3927 = vadd.f32 %v3914, %v3926
        %v3928 = vpop.f32.mrf.mxu0
        %3929 = vdwg.mxu0
        %3930 = vmatpush.bf16.msra.mxu0 %v2457
        %3931 = vmatpush.bf16.msra.mxu0 %v2441
        %3932 = vmatpush.bf16.msra.mxu0 %v2425
        %3933 = vmatpush.bf16.msra.mxu0 %v2409
        %3934 = vmatpush.bf16.msra.mxu0 %v2393
        %3935 = vmatpush.bf16.msra.mxu0 %v2377
        %3936 = vmatpush.bf16.msra.mxu0 %v2361
        %3937 = vmatpush.bf16.msra.mxu0 %v2345
        %3938 = vmatmul.bf16.gmra.mxu0 %v790
        %v3939 = vpop.f32.mrf.mxu0
        %v3940 = vadd.f32 %v763, %v3939
        %v3941 = vpop.f32.mrf.mxu0
        %3942 = vdwg.mxu0
        %3943 = vmatpush.bf16.msra.mxu0 %v2585
        %3944 = vmatpush.bf16.msra.mxu0 %v2569
        %3945 = vmatpush.bf16.msra.mxu0 %v2553
        %3946 = vmatpush.bf16.msra.mxu0 %v2537
        %3947 = vmatpush.bf16.msra.mxu0 %v2521
        %3948 = vmatpush.bf16.msra.mxu0 %v2505
        %3949 = vmatpush.bf16.msra.mxu0 %v2489
        %3950 = vmatpush.bf16.msra.mxu0 %v2473
        %3951 = vmatmul.bf16.gmra.mxu0 %v791
        %v3952 = vpop.f32.mrf.mxu0
        %v3953 = vadd.f32 %v3940, %v3952
        %v3954 = vpop.f32.mrf.mxu0
        %3955 = vdwg.mxu0
        %3956 = vmatpush.bf16.msra.mxu0 %v2713
        %3957 = vmatpush.bf16.msra.mxu0 %v2697
        %3958 = vmatpush.bf16.msra.mxu0 %v2681
        %3959 = vmatpush.bf16.msra.mxu0 %v2665
        %3960 = vmatpush.bf16.msra.mxu0 %v2649
        %3961 = vmatpush.bf16.msra.mxu0 %v2633
        %3962 = vmatpush.bf16.msra.mxu0 %v2617
        %3963 = vmatpush.bf16.msra.mxu0 %v2601
        %3964 = vmatmul.bf16.gmra.mxu0 %v792
        %v3965 = vpop.f32.mrf.mxu0
        %v3966 = vadd.f32 %v3953, %v3965
        %v3967 = vpop.f32.mrf.mxu0
        %3968 = vdwg.mxu0
        %3969 = vmatpush.bf16.msra.mxu0 %v2841
        %3970 = vmatpush.bf16.msra.mxu0 %v2825
        %3971 = vmatpush.bf16.msra.mxu0 %v2809
        %3972 = vmatpush.bf16.msra.mxu0 %v2793
        %3973 = vmatpush.bf16.msra.mxu0 %v2777
        %3974 = vmatpush.bf16.msra.mxu0 %v2761
        %3975 = vmatpush.bf16.msra.mxu0 %v2745
        %3976 = vmatpush.bf16.msra.mxu0 %v2729
        %3977 = vmatmul.bf16.gmra.mxu0 %v793
        %v3978 = vpop.f32.mrf.mxu0
        %v3979 = vadd.f32 %v3966, %v3978
        %v3980 = vpop.f32.mrf.mxu0
        %3981 = vdwg.mxu0
        %3982 = vmatpush.bf16.msra.mxu0 %v2458
        %3983 = vmatpush.bf16.msra.mxu0 %v2442
        %3984 = vmatpush.bf16.msra.mxu0 %v2426
        %3985 = vmatpush.bf16.msra.mxu0 %v2410
        %3986 = vmatpush.bf16.msra.mxu0 %v2394
        %3987 = vmatpush.bf16.msra.mxu0 %v2378
        %3988 = vmatpush.bf16.msra.mxu0 %v2362
        %3989 = vmatpush.bf16.msra.mxu0 %v2346
        %3990 = vmatmul.bf16.gmra.mxu0 %v790
        %v3991 = vpop.f32.mrf.mxu0
        %v3992 = vadd.f32 %v764, %v3991
        %v3993 = vpop.f32.mrf.mxu0
        %3994 = vdwg.mxu0
        %3995 = vmatpush.bf16.msra.mxu0 %v2586
        %3996 = vmatpush.bf16.msra.mxu0 %v2570
        %3997 = vmatpush.bf16.msra.mxu0 %v2554
        %3998 = vmatpush.bf16.msra.mxu0 %v2538
        %3999 = vmatpush.bf16.msra.mxu0 %v2522
        %4000 = vmatpush.bf16.msra.mxu0 %v2506
        %4001 = vmatpush.bf16.msra.mxu0 %v2490
        %4002 = vmatpush.bf16.msra.mxu0 %v2474
        %4003 = vmatmul.bf16.gmra.mxu0 %v791
        %v4004 = vpop.f32.mrf.mxu0
        %v4005 = vadd.f32 %v3992, %v4004
        %v4006 = vpop.f32.mrf.mxu0
        %4007 = vdwg.mxu0
        %4008 = vmatpush.bf16.msra.mxu0 %v2714
        %4009 = vmatpush.bf16.msra.mxu0 %v2698
        %4010 = vmatpush.bf16.msra.mxu0 %v2682
        %4011 = vmatpush.bf16.msra.mxu0 %v2666
        %4012 = vmatpush.bf16.msra.mxu0 %v2650
        %4013 = vmatpush.bf16.msra.mxu0 %v2634
        %4014 = vmatpush.bf16.msra.mxu0 %v2618
        %4015 = vmatpush.bf16.msra.mxu0 %v2602
        %4016 = vmatmul.bf16.gmra.mxu0 %v792
        %v4017 = vpop.f32.mrf.mxu0
        %v4018 = vadd.f32 %v4005, %v4017
        %v4019 = vpop.f32.mrf.mxu0
        %4020 = vdwg.mxu0
        %4021 = vmatpush.bf16.msra.mxu0 %v2842
        %4022 = vmatpush.bf16.msra.mxu0 %v2826
        %4023 = vmatpush.bf16.msra.mxu0 %v2810
        %4024 = vmatpush.bf16.msra.mxu0 %v2794
        %4025 = vmatpush.bf16.msra.mxu0 %v2778
        %4026 = vmatpush.bf16.msra.mxu0 %v2762
        %4027 = vmatpush.bf16.msra.mxu0 %v2746
        %4028 = vmatpush.bf16.msra.mxu0 %v2730
        %4029 = vmatmul.bf16.gmra.mxu0 %v793
        %v4030 = vpop.f32.mrf.mxu0
        %v4031 = vadd.f32 %v4018, %v4030
        %v4032 = vpop.f32.mrf.mxu0
        %4033 = vdwg.mxu0
        %4034 = vmatpush.bf16.msra.mxu0 %v2459
        %4035 = vmatpush.bf16.msra.mxu0 %v2443
        %4036 = vmatpush.bf16.msra.mxu0 %v2427
        %4037 = vmatpush.bf16.msra.mxu0 %v2411
        %4038 = vmatpush.bf16.msra.mxu0 %v2395
        %4039 = vmatpush.bf16.msra.mxu0 %v2379
        %4040 = vmatpush.bf16.msra.mxu0 %v2363
        %4041 = vmatpush.bf16.msra.mxu0 %v2347
        %4042 = vmatmul.bf16.gmra.mxu0 %v790
        %v4043 = vpop.f32.mrf.mxu0
        %v4044 = vadd.f32 %v765, %v4043
        %v4045 = vpop.f32.mrf.mxu0
        %4046 = vdwg.mxu0
        %4047 = vmatpush.bf16.msra.mxu0 %v2587
        %4048 = vmatpush.bf16.msra.mxu0 %v2571
        %4049 = vmatpush.bf16.msra.mxu0 %v2555
        %4050 = vmatpush.bf16.msra.mxu0 %v2539
        %4051 = vmatpush.bf16.msra.mxu0 %v2523
        %4052 = vmatpush.bf16.msra.mxu0 %v2507
        %4053 = vmatpush.bf16.msra.mxu0 %v2491
        %4054 = vmatpush.bf16.msra.mxu0 %v2475
        %4055 = vmatmul.bf16.gmra.mxu0 %v791
        %v4056 = vpop.f32.mrf.mxu0
        %v4057 = vadd.f32 %v4044, %v4056
        %v4058 = vpop.f32.mrf.mxu0
        %4059 = vdwg.mxu0
        %4060 = vmatpush.bf16.msra.mxu0 %v2715
        %4061 = vmatpush.bf16.msra.mxu0 %v2699
        %4062 = vmatpush.bf16.msra.mxu0 %v2683
        %4063 = vmatpush.bf16.msra.mxu0 %v2667
        %4064 = vmatpush.bf16.msra.mxu0 %v2651
        %4065 = vmatpush.bf16.msra.mxu0 %v2635
        %4066 = vmatpush.bf16.msra.mxu0 %v2619
        %4067 = vmatpush.bf16.msra.mxu0 %v2603
        %4068 = vmatmul.bf16.gmra.mxu0 %v792
        %v4069 = vpop.f32.mrf.mxu0
        %v4070 = vadd.f32 %v4057, %v4069
        %v4071 = vpop.f32.mrf.mxu0
        %4072 = vdwg.mxu0
        %4073 = vmatpush.bf16.msra.mxu0 %v2843
        %4074 = vmatpush.bf16.msra.mxu0 %v2827
        %4075 = vmatpush.bf16.msra.mxu0 %v2811
        %4076 = vmatpush.bf16.msra.mxu0 %v2795
        %4077 = vmatpush.bf16.msra.mxu0 %v2779
        %4078 = vmatpush.bf16.msra.mxu0 %v2763
        %4079 = vmatpush.bf16.msra.mxu0 %v2747
        %4080 = vmatpush.bf16.msra.mxu0 %v2731
        %4081 = vmatmul.bf16.gmra.mxu0 %v793
        %v4082 = vpop.f32.mrf.mxu0
        %v4083 = vadd.f32 %v4070, %v4082
        %v4084 = vpop.f32.mrf.mxu0
        %4085 = vdwg.mxu0
        %4086 = vmatpush.bf16.msra.mxu0 %v2460
        %4087 = vmatpush.bf16.msra.mxu0 %v2444
        %4088 = vmatpush.bf16.msra.mxu0 %v2428
        %4089 = vmatpush.bf16.msra.mxu0 %v2412
        %4090 = vmatpush.bf16.msra.mxu0 %v2396
        %4091 = vmatpush.bf16.msra.mxu0 %v2380
        %4092 = vmatpush.bf16.msra.mxu0 %v2364
        %4093 = vmatpush.bf16.msra.mxu0 %v2348
        %4094 = vmatmul.bf16.gmra.mxu0 %v790
        %v4095 = vpop.f32.mrf.mxu0
        %v4096 = vadd.f32 %v766, %v4095
        %v4097 = vpop.f32.mrf.mxu0
        %4098 = vdwg.mxu0
        %4099 = vmatpush.bf16.msra.mxu0 %v2588
        %4100 = vmatpush.bf16.msra.mxu0 %v2572
        %4101 = vmatpush.bf16.msra.mxu0 %v2556
        %4102 = vmatpush.bf16.msra.mxu0 %v2540
        %4103 = vmatpush.bf16.msra.mxu0 %v2524
        %4104 = vmatpush.bf16.msra.mxu0 %v2508
        %4105 = vmatpush.bf16.msra.mxu0 %v2492
        %4106 = vmatpush.bf16.msra.mxu0 %v2476
        %4107 = vmatmul.bf16.gmra.mxu0 %v791
        %v4108 = vpop.f32.mrf.mxu0
        %v4109 = vadd.f32 %v4096, %v4108
        %v4110 = vpop.f32.mrf.mxu0
        %4111 = vdwg.mxu0
        %4112 = vmatpush.bf16.msra.mxu0 %v2716
        %4113 = vmatpush.bf16.msra.mxu0 %v2700
        %4114 = vmatpush.bf16.msra.mxu0 %v2684
        %4115 = vmatpush.bf16.msra.mxu0 %v2668
        %4116 = vmatpush.bf16.msra.mxu0 %v2652
        %4117 = vmatpush.bf16.msra.mxu0 %v2636
        %4118 = vmatpush.bf16.msra.mxu0 %v2620
        %4119 = vmatpush.bf16.msra.mxu0 %v2604
        %4120 = vmatmul.bf16.gmra.mxu0 %v792
        %v4121 = vpop.f32.mrf.mxu0
        %v4122 = vadd.f32 %v4109, %v4121
        %v4123 = vpop.f32.mrf.mxu0
        %4124 = vdwg.mxu0
        %4125 = vmatpush.bf16.msra.mxu0 %v2844
        %4126 = vmatpush.bf16.msra.mxu0 %v2828
        %4127 = vmatpush.bf16.msra.mxu0 %v2812
        %4128 = vmatpush.bf16.msra.mxu0 %v2796
        %4129 = vmatpush.bf16.msra.mxu0 %v2780
        %4130 = vmatpush.bf16.msra.mxu0 %v2764
        %4131 = vmatpush.bf16.msra.mxu0 %v2748
        %4132 = vmatpush.bf16.msra.mxu0 %v2732
        %4133 = vmatmul.bf16.gmra.mxu0 %v793
        %v4134 = vpop.f32.mrf.mxu0
        %v4135 = vadd.f32 %v4122, %v4134
        %v4136 = vpop.f32.mrf.mxu0
        %4137 = vdwg.mxu0
        %4138 = vmatpush.bf16.msra.mxu0 %v2461
        %4139 = vmatpush.bf16.msra.mxu0 %v2445
        %4140 = vmatpush.bf16.msra.mxu0 %v2429
        %4141 = vmatpush.bf16.msra.mxu0 %v2413
        %4142 = vmatpush.bf16.msra.mxu0 %v2397
        %4143 = vmatpush.bf16.msra.mxu0 %v2381
        %4144 = vmatpush.bf16.msra.mxu0 %v2365
        %4145 = vmatpush.bf16.msra.mxu0 %v2349
        %4146 = vmatmul.bf16.gmra.mxu0 %v790
        %v4147 = vpop.f32.mrf.mxu0
        %v4148 = vadd.f32 %v767, %v4147
        %v4149 = vpop.f32.mrf.mxu0
        %4150 = vdwg.mxu0
        %4151 = vmatpush.bf16.msra.mxu0 %v2589
        %4152 = vmatpush.bf16.msra.mxu0 %v2573
        %4153 = vmatpush.bf16.msra.mxu0 %v2557
        %4154 = vmatpush.bf16.msra.mxu0 %v2541
        %4155 = vmatpush.bf16.msra.mxu0 %v2525
        %4156 = vmatpush.bf16.msra.mxu0 %v2509
        %4157 = vmatpush.bf16.msra.mxu0 %v2493
        %4158 = vmatpush.bf16.msra.mxu0 %v2477
        %4159 = vmatmul.bf16.gmra.mxu0 %v791
        %v4160 = vpop.f32.mrf.mxu0
        %v4161 = vadd.f32 %v4148, %v4160
        %v4162 = vpop.f32.mrf.mxu0
        %4163 = vdwg.mxu0
        %4164 = vmatpush.bf16.msra.mxu0 %v2717
        %4165 = vmatpush.bf16.msra.mxu0 %v2701
        %4166 = vmatpush.bf16.msra.mxu0 %v2685
        %4167 = vmatpush.bf16.msra.mxu0 %v2669
        %4168 = vmatpush.bf16.msra.mxu0 %v2653
        %4169 = vmatpush.bf16.msra.mxu0 %v2637
        %4170 = vmatpush.bf16.msra.mxu0 %v2621
        %4171 = vmatpush.bf16.msra.mxu0 %v2605
        %4172 = vmatmul.bf16.gmra.mxu0 %v792
        %v4173 = vpop.f32.mrf.mxu0
        %v4174 = vadd.f32 %v4161, %v4173
        %v4175 = vpop.f32.mrf.mxu0
        %4176 = vdwg.mxu0
        %4177 = vmatpush.bf16.msra.mxu0 %v2845
        %4178 = vmatpush.bf16.msra.mxu0 %v2829
        %4179 = vmatpush.bf16.msra.mxu0 %v2813
        %4180 = vmatpush.bf16.msra.mxu0 %v2797
        %4181 = vmatpush.bf16.msra.mxu0 %v2781
        %4182 = vmatpush.bf16.msra.mxu0 %v2765
        %4183 = vmatpush.bf16.msra.mxu0 %v2749
        %4184 = vmatpush.bf16.msra.mxu0 %v2733
        %4185 = vmatmul.bf16.gmra.mxu0 %v793
        %v4186 = vpop.f32.mrf.mxu0
        %v4187 = vadd.f32 %v4174, %v4186
        %v4188 = vpop.f32.mrf.mxu0
        %4189 = vdwg.mxu0
        %v4190 = vtanh.pop %v3407
        %v4191 = vtanh.pop %v3459
        %v4192 = vtanh.pop %v3511
        %v4193 = vtanh.pop %v3563
        %v4194 = vtanh.pop %v3615
        %v4195 = vtanh.pop %v3667
        %v4196 = vtanh.pop %v3719
        %v4197 = vtanh.pop %v3771
        %v4198 = vtanh.pop %v3823
        %v4199 = vtanh.pop %v3875
        %v4200 = vtanh.pop %v3927
        %v4201 = vtanh.pop %v3979
        %v4202 = vtanh.pop %v4031
        %v4203 = vtanh.pop %v4083
        %v4204 = vtanh.pop %v4135
        %v4205 = vtanh.pop %v4187
        %4206 = vst [vmem:[%s232] sm:$0xff] %v4190
        %4207 = vst [vmem:[%s232 + $0x8] sm:$0xff] %v4191
        %4208 = vst [vmem:[%s232 + $0x10] sm:$0xff] %v4192
        %4209 = vst [vmem:[%s232 + $0x18] sm:$0xff] %v4193
        %4210 = vst [vmem:[%s232 + $0x20] sm:$0xff] %v4194
        %4211 = vst [vmem:[%s232 + $0x28] sm:$0xff] %v4195
        %4212 = vst [vmem:[%s232 + $0x30] sm:$0xff] %v4196
        %4213 = vst [vmem:[%s232 + $0x38] sm:$0xff] %v4197
        %4214 = vst [vmem:[%s232 + $0x40] sm:$0xff] %v4198
        %4215 = vst [vmem:[%s232 + $0x48] sm:$0xff] %v4199
        %4216 = vst [vmem:[%s232 + $0x50] sm:$0xff] %v4200
        %4217 = vst [vmem:[%s232 + $0x58] sm:$0xff] %v4201
        %4218 = vst [vmem:[%s232 + $0x60] sm:$0xff] %v4202
        %4219 = vst [vmem:[%s232 + $0x68] sm:$0xff] %v4203
        %4220 = vst [vmem:[%s232 + $0x70] sm:$0xff] %v4204
        %4221 = vst [vmem:[%s232 + $0x78] sm:$0xff] %v4205
        %s4222 = smul.u32 16, %s20
        %p4223 = scmp.lt.s32.totalorder %s4222, 95
        %s4224 = scalar_select %p4223, %s4222, 95
        %s4225 = smul.addr %s4224, 8
        %s4226 = scalar_lea.vmem %s3, %s4225
        // Predicated region
        $region41: #{generator_forward.3} parent=31 // pred_check
          %p4227 = pneg %p111
        $region42: #{generator_forward.3} parent=31 // pred_check_branch
          %4229 = sbr.rel (%p4227) target = $region44
        $region43: #{generator_forward.3} parent=31 // pred_region
          %s4230 = smul.u32 16, %s20
        $region44: #{generator_forward.3} parent=31 // pred_fallthru
          _
      $region32: #{generator_forward.3} parent=5 // pred_fallthru
        _
      %p4231 = scmp.le.s32.totalorder 2, %s15
      // Predicated region
      $region45: #{generator_forward.3} parent=5 // pred_check
        %p4232 = pneg %p4231
      $region46: #{generator_forward.3} parent=5 // pred_check_branch
        %4234 = sbr.rel (%p4232) target = $region48
      $region47: #{generator_forward.3} parent=5 // pred_region
        %s4235 = ssub.s32 %s15, 2
        // Predicated region
        $region49: #{generator_forward.3} parent=47 // pred_check
          %p4236 = pneg %p117
        $region50: #{generator_forward.3} parent=47 // pred_check_branch
          %4238 = sbr.rel (%p4236) target = $region52
        $region51: #{generator_forward.3} parent=47 // pred_region
          %s4239 = smul.u32 16, %s21
          %p4240 = scmp.lt.s32.totalorder %s4239, 95
          %s4241 = scalar_select %p4240, %s4239, 95
          %s4242 = smul.addr %s4241, 8
          %s4243 = scalar_lea.vmem %s3, %s4242
        $region52: #{generator_forward.3} parent=47 // pred_fallthru
          _
      $region48: #{generator_forward.3} parent=5 // pred_fallthru
        _
    $region6: #{generator_forward.3} parent=1 // loop_footer
      %s19 = sadd.s32 1, %s15
    $region7: #{generator_forward.3} parent=1 // loop_footer_branch
      %14 = sbr.rel target = $region3
    $region8: #{generator_forward.3} parent=1 // loop_exit
      _
    %4244 = vsyncpa [#allocation3], 1
    %s4245 = scalar_lea.sflag [#allocation3], 1
    %4246 = vsyncpa %s4245, 1
    %4247 = vsyncpa [#allocation5], 1
    %s4248 = scalar_lea.sflag [#allocation5], 1
    %4249 = vsyncpa %s4248, 1

</llo_original>
